<compile_context>
chip_gen: v6e
topology: v6e:2x2x1
jax: 0.10.0
libtpu: 0.0.40
codegen_flags: <defaults>
</compile_context>

<pallas_src>
import functools
import math

import jax
import jax.numpy as jnp
from jax import lax
from jax.experimental import pallas as pl
from jax.experimental.pallas import tpu as pltpu


# ---------------------------------------------------------------------------
# Fused Pallas kernel: whole autoencoder = 8x (matmul + bias + activation)
# ---------------------------------------------------------------------------
def _fused_net_kernel(x_ref, *refs, n_layers):
    """x_ref: (tb, K_in) input rows.  refs = (w1, b1, ..., wL, bL, out_ref).
    Weight/bias blocks are VMEM-resident; all inter-layer activations stay on-chip."""
    o_ref = refs[-1]
    h = x_ref[...].astype(jnp.bfloat16)                        # bf16 MXU operand
    for li in range(n_layers):
        w = refs[2 * li][...]                                  # (K_l, N_l) bf16
        b = refs[2 * li + 1][...]                              # (1,  N_l) f32
        acc = jnp.dot(h, w, preferred_element_type=jnp.float32) + b
        if li + 1 < n_layers:
            h = jnp.maximum(acc, 0.0).astype(jnp.bfloat16)     # ReLU -> bf16 for next MXU
        else:
            # Sigmoid: exp and the approximate reciprocal both issue on the EUP slot.
            h = pl.reciprocal(1.0 + jnp.exp(-acc), approx=True)
    o_ref[...] = h.astype(o_ref.dtype)


def _batch_plan(n):
    """(padded_batch, batch_tile).  Tiles are sublane-aligned (multiple of 8 rows) or
    equal to the full batch; keep >=2 grid steps once the batch can feed both v7x
    TensorCores, and fatten tiles at large batch to amortize the ~0.35us/step cost."""
    if n <= 8:
        return n, n                                   # single step; block == full dim
    n_pad = (n + 7) // 8 * 8
    tb = min(256, max(8, (n_pad // 2) // 8 * 8))      # >=2 steps, <=256 rows per step
    while n_pad % tb:                                 # keep the grid exact (no ragged block)
        tb -= 8
    return n_pad, tb


def fused_autoencoder(mats, biases, x_flat):
    """x_flat: (N, K_in) f32 -> (N, K_out) f32; all 8 layers in one pallas_call."""
    n, k_in = x_flat.shape
    n_layers = len(mats)
    assert k_in == mats[0].shape[0]
    k_out = mats[-1].shape[1]

    n_pad, tb = _batch_plan(n)
    if n_pad != n:
        x_flat = jnp.pad(x_flat, ((0, n_pad - n), (0, 0)))
    grid = (n_pad // tb,)

    in_specs = [pl.BlockSpec((tb, k_in), lambda i: (i, 0))]        # batch-tiled input
    operands = [x_flat]
    for w, b in zip(mats, biases):
        in_specs.append(pl.BlockSpec(w.shape, lambda i: (0, 0)))   # VMEM-resident weight
        in_specs.append(pl.BlockSpec(b.shape, lambda i: (0, 0)))   # VMEM-resident bias
        operands += [w, b]

    # VMEM budget derived from the actual block footprint (review item 7):
    # weights/biases (x2 buffers) + in/out tiles (x2) + live f32 intermediates + margin.
    w_bytes = sum(int(w.size) * 2 for w in mats) + sum(int(b.size) * 4 for b in biases)
    max_width = max(w.shape[1] for w in mats)
    vmem_limit = int(min(2 * w_bytes
                         + 2 * tb * (k_in + k_out) * 4
                         + 8 * tb * max_width * 4
                         + (4 << 20),
                         32 << 20))

    out = pl.pallas_call(
        functools.partial(_fused_net_kernel, n_layers=n_layers),
        out_shape=jax.ShapeDtypeStruct((n_pad, k_out), jnp.float32),
        grid=grid,
        in_specs=in_specs,
        out_specs=pl.BlockSpec((tb, k_out), lambda i: (i, 0)),
        compiler_params=pltpu.CompilerParams(
            dimension_semantics=("parallel",),       # batch tiles -> both v7x TCs / pipelining
            vmem_limit_bytes=vmem_limit,
        ),
    )(*operands)
    return out[:n] if n_pad != n else out


# ---------------------------------------------------------------------------
# Layer packing: each (transposed) conv at fixed spatial size is a linear map;
# materialize it once as a dense (H*W*C_in, OH*OW*C_out) bf16 matrix (pack time only).
# ---------------------------------------------------------------------------
def _conv_s2(x_nhwc, w_hwio):
    """Conv2d(k=3, stride=2, padding=1), NHWC/HWIO."""
    return lax.conv_general_dilated(
        x_nhwc, w_hwio, window_strides=(2, 2), padding=((1, 1), (1, 1)),
        dimension_numbers=("NHWC", "HWIO", "NHWC"))


def _conv_t_s2(x_nhwc, w_pt):
    """ConvTranspose2d(k=3, stride=2, padding=1, output_padding=1); w_pt is the
    PyTorch (IC, OC, 3, 3) weight.  Expressed as an input-dilated forward conv."""
    w_hwio = jnp.flip(w_pt, (2, 3)).transpose(2, 3, 0, 1)
    return lax.conv_general_dilated(
        x_nhwc, w_hwio, window_strides=(1, 1), padding=((1, 2), (1, 2)),
        lhs_dilation=(2, 2), dimension_numbers=("NHWC", "HWIO", "NHWC"))


def _linear_map_matrix(apply_fn, in_shape):
    """Dense matrix of a linear map by pushing the identity basis through it."""
    k = math.prod(in_shape)
    basis = jnp.eye(k, dtype=jnp.float32).reshape((k,) + tuple(in_shape))
    return apply_fn(basis).reshape(k, -1)


def init_params(key):
    """PyTorch-layout parameters (deterministic stand-in for nn.Conv2d default init)."""
    enc_ch = [(1, 16), (16, 32), (32, 64), (64, 128)]
    dec_ch = [(128, 64), (64, 32), (32, 16), (16, 1)]
    params = {"enc": [], "dec": []}
    k = key
    for ic, oc in enc_ch:
        k, k1, k2 = jax.random.split(k, 3)
        bound = 1.0 / math.sqrt(ic * 9)
        w = jax.random.uniform(k1, (oc, ic, 3, 3), jnp.float32, -bound, bound)
        b = jax.random.uniform(k2, (oc,), jnp.float32, -bound, bound)
        params["enc"].append((w, b))
    for ic, oc in dec_ch:
        k, k1, k2 = jax.random.split(k, 3)
        bound = 1.0 / math.sqrt(oc * 9)
        w = jax.random.uniform(k1, (ic, oc, 3, 3), jnp.float32, -bound, bound)
        b = jax.random.uniform(k2, (oc,), jnp.float32, -bound, bound)
        params["dec"].append((w, b))
    return params


def pack_params(params, h=16, w=16):
    """PyTorch params -> per-layer dense bf16 matmul matrices + f32 bias rows.
    Flattening order everywhere is NHWC: index = (y*W + x)*C + c."""
    mats, biases = [], []
    cur_h, cur_w = h, w
    for wgt, b in params["enc"]:                       # Conv2d(3, s=2, p=1) + ReLU
        ic = wgt.shape[1]
        w_hwio = wgt.transpose(2, 3, 1, 0)
        m = _linear_map_matrix(lambda t: _conv_s2(t, w_hwio), (cur_h, cur_w, ic))
        cur_h, cur_w = (cur_h + 1) // 2, (cur_w + 1) // 2
        mats.append(m.astype(jnp.bfloat16))
        biases.append(jnp.tile(b, cur_h * cur_w).reshape(1, -1).astype(jnp.float32))
    for wgt, b in params["dec"]:                       # ConvTranspose2d(3, s=2, p=1, op=1)
        ic = wgt.shape[0]
        m = _linear_map_matrix(lambda t: _conv_t_s2(t, wgt), (cur_h, cur_w, ic))
        cur_h, cur_w = cur_h * 2, cur_w * 2
        mats.append(m.astype(jnp.bfloat16))
        biases.append(jnp.tile(b, cur_h * cur_w).reshape(1, -1).astype(jnp.float32))
    return {"mats": tuple(mats), "biases": tuple(biases)}


# ---------------------------------------------------------------------------
# Forward pass (external interface stays NCHW, like the PyTorch module)
# ---------------------------------------------------------------------------
@jax.jit
def conv_autoencoder_forward(packed, x_nchw):
    n, c, h, w = x_nchw.shape
    assert c == 1                        # Conv2d(1, 16, ...) — single input channel
    x_flat = x_nchw.reshape(n, h * w)    # C == 1: NCHW and NHWC flattenings coincide
    y_flat = fused_autoencoder(packed["mats"], packed["biases"], x_flat)
    return y_flat.reshape(n, 1, h, w)


# ---------------------------------------------------------------------------
# Pure-XLA f32 reference (direct lax.conv on the data) for correctness checking
# ---------------------------------------------------------------------------
def reference_forward(params, x_nchw):
    x = x_nchw.transpose(0, 2, 3, 1)
    for wgt, b in params["enc"]:
        x = jax.nn.relu(_conv_s2(x, wgt.transpose(2, 3, 1, 0)) + b)
    n_dec = len(params["dec"])
    for i, (wgt, b) in enumerate(params["dec"]):
        x = _conv_t_s2(x, wgt) + b
        x = jax.nn.sigmoid(x) if i == n_dec - 1 else jax.nn.relu(x)
    return x.transpose(0, 3, 1, 2)


if __name__ == "__main__":
    key = jax.random.PRNGKey(0)
    pkey, xkey, xkey2 = jax.random.split(key, 3)
    params = init_params(pkey)
    packed = pack_params(params)         # one-time weight linearization (pack time)

    # Input: NCHW, 1 channel, 16x16 spatial (16 -> 8 -> 4 -> 2 -> 1 -> 2 -> ... -> 16).
    x = jax.random.normal(xkey, (2, 1, 16, 16), jnp.float32)
    y = jax.block_until_ready(conv_autoencoder_forward(packed, x))
    assert y.shape == (2, 1, 16, 16), y.shape
    err = float(jnp.max(jnp.abs(y - reference_forward(params, x))))
    assert err < 5e-2, f"max abs error vs f32 reference: {err}"

    # Ragged batch: exercises the pad-to-sublane path and a 2-step "parallel" grid.
    x2 = jax.random.normal(xkey2, (13, 1, 16, 16), jnp.float32)
    y2 = jax.block_until_ready(conv_autoencoder_forward(packed, x2))
    assert y2.shape == (13, 1, 16, 16), y2.shape
    err2 = float(jnp.max(jnp.abs(y2 - reference_forward(params, x2))))
    assert err2 < 5e-2, f"max abs error vs f32 reference (ragged batch): {err2}"

    print("KERNEL_OK")
</pallas_src>

<mosaic_0001>
module attributes {stable_mosaic.version = 11 : i64} {
  func.func @_fused_net_kernel(%arg0: i32, %arg1: memref<2x256xf32, #tpu.memory_space<vmem>>, %arg2: memref<256x1024xbf16, #tpu.memory_space<vmem>>, %arg3: memref<1x1024xf32, #tpu.memory_space<vmem>>, %arg4: memref<1024x512xbf16, #tpu.memory_space<vmem>>, %arg5: memref<1x512xf32, #tpu.memory_space<vmem>>, %arg6: memref<512x256xbf16, #tpu.memory_space<vmem>>, %arg7: memref<1x256xf32, #tpu.memory_space<vmem>>, %arg8: memref<256x128xbf16, #tpu.memory_space<vmem>>, %arg9: memref<1x128xf32, #tpu.memory_space<vmem>>, %arg10: memref<128x256xbf16, #tpu.memory_space<vmem>>, %arg11: memref<1x256xf32, #tpu.memory_space<vmem>>, %arg12: memref<256x512xbf16, #tpu.memory_space<vmem>>, %arg13: memref<1x512xf32, #tpu.memory_space<vmem>>, %arg14: memref<512x1024xbf16, #tpu.memory_space<vmem>>, %arg15: memref<1x1024xf32, #tpu.memory_space<vmem>>, %arg16: memref<1024x256xbf16, #tpu.memory_space<vmem>>, %arg17: memref<1x256xf32, #tpu.memory_space<vmem>>, %arg18: memref<2x256xf32, #tpu.memory_space<vmem>>) attributes {dimension_semantics = [#tpu.dimension_semantics<parallel>], iteration_bounds = array<i64: 1>, scalar_prefetch = 0 : i64, scratch_operands = 0 : i64, tpu.core_type = #tpu.core_type<tc>, window_params = [{transform_indices = @transform_0, window_bounds = array<i64: 2, 256>}, {pipeline_mode = #tpu.pipeline_mode<synchronous>, transform_indices = @transform_1, window_bounds = array<i64: 256, 1024>}, {pipeline_mode = #tpu.pipeline_mode<synchronous>, transform_indices = @transform_2, window_bounds = array<i64: 1, 1024>}, {pipeline_mode = #tpu.pipeline_mode<synchronous>, transform_indices = @transform_3, window_bounds = array<i64: 1024, 512>}, {pipeline_mode = #tpu.pipeline_mode<synchronous>, transform_indices = @transform_4, window_bounds = array<i64: 1, 512>}, {pipeline_mode = #tpu.pipeline_mode<synchronous>, transform_indices = @transform_5, window_bounds = array<i64: 512, 256>}, {pipeline_mode = #tpu.pipeline_mode<synchronous>, transform_indices = @transform_6, window_bounds = array<i64: 1, 256>}, {pipeline_mode = #tpu.pipeline_mode<synchronous>, transform_indices = @transform_7, window_bounds = array<i64: 256, 128>}, {pipeline_mode = #tpu.pipeline_mode<synchronous>, transform_indices = @transform_8, window_bounds = array<i64: 1, 128>}, {pipeline_mode = #tpu.pipeline_mode<synchronous>, transform_indices = @transform_9, window_bounds = array<i64: 128, 256>}, {pipeline_mode = #tpu.pipeline_mode<synchronous>, transform_indices = @transform_10, window_bounds = array<i64: 1, 256>}, {pipeline_mode = #tpu.pipeline_mode<synchronous>, transform_indices = @transform_11, window_bounds = array<i64: 256, 512>}, {pipeline_mode = #tpu.pipeline_mode<synchronous>, transform_indices = @transform_12, window_bounds = array<i64: 1, 512>}, {pipeline_mode = #tpu.pipeline_mode<synchronous>, transform_indices = @transform_13, window_bounds = array<i64: 512, 1024>}, {pipeline_mode = #tpu.pipeline_mode<synchronous>, transform_indices = @transform_14, window_bounds = array<i64: 1, 1024>}, {pipeline_mode = #tpu.pipeline_mode<synchronous>, transform_indices = @transform_15, window_bounds = array<i64: 1024, 256>}, {pipeline_mode = #tpu.pipeline_mode<synchronous>, transform_indices = @transform_16, window_bounds = array<i64: 1, 256>}, {transform_indices = @transform_17, window_bounds = array<i64: 2, 256>}]} {
    %c0 = arith.constant 0 : index
    %c0_0 = arith.constant 0 : index
    %0 = vector.load %arg1[%c0, %c0_0] : memref<2x256xf32, #tpu.memory_space<vmem>>, vector<2x256xf32>
    %1 = arith.truncf %0 : vector<2x256xf32> to vector<2x256xbf16>
    %c0_1 = arith.constant 0 : index
    %c0_2 = arith.constant 0 : index
    %2 = vector.load %arg2[%c0_1, %c0_2] : memref<256x1024xbf16, #tpu.memory_space<vmem>>, vector<256x1024xbf16>
    %c0_3 = arith.constant 0 : index
    %c0_4 = arith.constant 0 : index
    %3 = vector.load %arg3[%c0_3, %c0_4] : memref<1x1024xf32, #tpu.memory_space<vmem>>, vector<1x1024xf32>
    %cst = arith.constant dense<0.000000e+00> : vector<2x1024xf32>
    %4 = tpu.matmul %1, %2, %cst {dimension_numbers = #tpu.dot_dimension_numbers<[1], [0], [0], [1], [0, 0, 1, 1], [], []>} : vector<2x256xbf16>, vector<256x1024xbf16>, vector<2x1024xf32> -> vector<2x1024xf32>
    %5 = vector.broadcast %3 : vector<1x1024xf32> to vector<2x1024xf32>
    %6 = arith.addf %4, %5 : vector<2x1024xf32>
    %cst_5 = arith.constant 0.000000e+00 : f32
    %7 = vector.broadcast %cst_5 : f32 to vector<2x1024xf32>
    %8 = arith.maximumf %6, %7 : vector<2x1024xf32>
    %9 = arith.truncf %8 : vector<2x1024xf32> to vector<2x1024xbf16>
    %c0_6 = arith.constant 0 : index
    %c0_7 = arith.constant 0 : index
    %10 = vector.load %arg4[%c0_6, %c0_7] : memref<1024x512xbf16, #tpu.memory_space<vmem>>, vector<1024x512xbf16>
    %c0_8 = arith.constant 0 : index
    %c0_9 = arith.constant 0 : index
    %11 = vector.load %arg5[%c0_8, %c0_9] : memref<1x512xf32, #tpu.memory_space<vmem>>, vector<1x512xf32>
    %cst_10 = arith.constant dense<0.000000e+00> : vector<2x512xf32>
    %12 = tpu.matmul %9, %10, %cst_10 {dimension_numbers = #tpu.dot_dimension_numbers<[1], [0], [0], [1], [0, 0, 1, 1], [], []>} : vector<2x1024xbf16>, vector<1024x512xbf16>, vector<2x512xf32> -> vector<2x512xf32>
    %13 = vector.broadcast %11 : vector<1x512xf32> to vector<2x512xf32>
    %14 = arith.addf %12, %13 : vector<2x512xf32>
    %cst_11 = arith.constant 0.000000e+00 : f32
    %15 = vector.broadcast %cst_11 : f32 to vector<2x512xf32>
    %16 = arith.maximumf %14, %15 : vector<2x512xf32>
    %17 = arith.truncf %16 : vector<2x512xf32> to vector<2x512xbf16>
    %c0_12 = arith.constant 0 : index
    %c0_13 = arith.constant 0 : index
    %18 = vector.load %arg6[%c0_12, %c0_13] : memref<512x256xbf16, #tpu.memory_space<vmem>>, vector<512x256xbf16>
    %c0_14 = arith.constant 0 : index
    %c0_15 = arith.constant 0 : index
    %19 = vector.load %arg7[%c0_14, %c0_15] : memref<1x256xf32, #tpu.memory_space<vmem>>, vector<1x256xf32>
    %cst_16 = arith.constant dense<0.000000e+00> : vector<2x256xf32>
    %20 = tpu.matmul %17, %18, %cst_16 {dimension_numbers = #tpu.dot_dimension_numbers<[1], [0], [0], [1], [0, 0, 1, 1], [], []>} : vector<2x512xbf16>, vector<512x256xbf16>, vector<2x256xf32> -> vector<2x256xf32>
    %21 = vector.broadcast %19 : vector<1x256xf32> to vector<2x256xf32>
    %22 = arith.addf %20, %21 : vector<2x256xf32>
    %cst_17 = arith.constant 0.000000e+00 : f32
    %23 = vector.broadcast %cst_17 : f32 to vector<2x256xf32>
    %24 = arith.maximumf %22, %23 : vector<2x256xf32>
    %25 = arith.truncf %24 : vector<2x256xf32> to vector<2x256xbf16>
    %c0_18 = arith.constant 0 : index
    %c0_19 = arith.constant 0 : index
    %26 = vector.load %arg8[%c0_18, %c0_19] : memref<256x128xbf16, #tpu.memory_space<vmem>>, vector<256x128xbf16>
    %c0_20 = arith.constant 0 : index
    %c0_21 = arith.constant 0 : index
    %27 = vector.load %arg9[%c0_20, %c0_21] : memref<1x128xf32, #tpu.memory_space<vmem>>, vector<1x128xf32>
    %cst_22 = arith.constant dense<0.000000e+00> : vector<2x128xf32>
    %28 = tpu.matmul %25, %26, %cst_22 {dimension_numbers = #tpu.dot_dimension_numbers<[1], [0], [0], [1], [0, 0, 1, 1], [], []>} : vector<2x256xbf16>, vector<256x128xbf16>, vector<2x128xf32> -> vector<2x128xf32>
    %29 = vector.broadcast %27 : vector<1x128xf32> to vector<2x128xf32>
    %30 = arith.addf %28, %29 : vector<2x128xf32>
    %cst_23 = arith.constant 0.000000e+00 : f32
    %31 = vector.broadcast %cst_23 : f32 to vector<2x128xf32>
    %32 = arith.maximumf %30, %31 : vector<2x128xf32>
    %33 = arith.truncf %32 : vector<2x128xf32> to vector<2x128xbf16>
    %c0_24 = arith.constant 0 : index
    %c0_25 = arith.constant 0 : index
    %34 = vector.load %arg10[%c0_24, %c0_25] : memref<128x256xbf16, #tpu.memory_space<vmem>>, vector<128x256xbf16>
    %c0_26 = arith.constant 0 : index
    %c0_27 = arith.constant 0 : index
    %35 = vector.load %arg11[%c0_26, %c0_27] : memref<1x256xf32, #tpu.memory_space<vmem>>, vector<1x256xf32>
    %cst_28 = arith.constant dense<0.000000e+00> : vector<2x256xf32>
    %36 = tpu.matmul %33, %34, %cst_28 {dimension_numbers = #tpu.dot_dimension_numbers<[1], [0], [0], [1], [0, 0, 1, 1], [], []>} : vector<2x128xbf16>, vector<128x256xbf16>, vector<2x256xf32> -> vector<2x256xf32>
    %37 = vector.broadcast %35 : vector<1x256xf32> to vector<2x256xf32>
    %38 = arith.addf %36, %37 : vector<2x256xf32>
    %cst_29 = arith.constant 0.000000e+00 : f32
    %39 = vector.broadcast %cst_29 : f32 to vector<2x256xf32>
    %40 = arith.maximumf %38, %39 : vector<2x256xf32>
    %41 = arith.truncf %40 : vector<2x256xf32> to vector<2x256xbf16>
    %c0_30 = arith.constant 0 : index
    %c0_31 = arith.constant 0 : index
    %42 = vector.load %arg12[%c0_30, %c0_31] : memref<256x512xbf16, #tpu.memory_space<vmem>>, vector<256x512xbf16>
    %c0_32 = arith.constant 0 : index
    %c0_33 = arith.constant 0 : index
    %43 = vector.load %arg13[%c0_32, %c0_33] : memref<1x512xf32, #tpu.memory_space<vmem>>, vector<1x512xf32>
    %cst_34 = arith.constant dense<0.000000e+00> : vector<2x512xf32>
    %44 = tpu.matmul %41, %42, %cst_34 {dimension_numbers = #tpu.dot_dimension_numbers<[1], [0], [0], [1], [0, 0, 1, 1], [], []>} : vector<2x256xbf16>, vector<256x512xbf16>, vector<2x512xf32> -> vector<2x512xf32>
    %45 = vector.broadcast %43 : vector<1x512xf32> to vector<2x512xf32>
    %46 = arith.addf %44, %45 : vector<2x512xf32>
    %cst_35 = arith.constant 0.000000e+00 : f32
    %47 = vector.broadcast %cst_35 : f32 to vector<2x512xf32>
    %48 = arith.maximumf %46, %47 : vector<2x512xf32>
    %49 = arith.truncf %48 : vector<2x512xf32> to vector<2x512xbf16>
    %c0_36 = arith.constant 0 : index
    %c0_37 = arith.constant 0 : index
    %50 = vector.load %arg14[%c0_36, %c0_37] : memref<512x1024xbf16, #tpu.memory_space<vmem>>, vector<512x1024xbf16>
    %c0_38 = arith.constant 0 : index
    %c0_39 = arith.constant 0 : index
    %51 = vector.load %arg15[%c0_38, %c0_39] : memref<1x1024xf32, #tpu.memory_space<vmem>>, vector<1x1024xf32>
    %cst_40 = arith.constant dense<0.000000e+00> : vector<2x1024xf32>
    %52 = tpu.matmul %49, %50, %cst_40 {dimension_numbers = #tpu.dot_dimension_numbers<[1], [0], [0], [1], [0, 0, 1, 1], [], []>} : vector<2x512xbf16>, vector<512x1024xbf16>, vector<2x1024xf32> -> vector<2x1024xf32>
    %53 = vector.broadcast %51 : vector<1x1024xf32> to vector<2x1024xf32>
    %54 = arith.addf %52, %53 : vector<2x1024xf32>
    %cst_41 = arith.constant 0.000000e+00 : f32
    %55 = vector.broadcast %cst_41 : f32 to vector<2x1024xf32>
    %56 = arith.maximumf %54, %55 : vector<2x1024xf32>
    %57 = arith.truncf %56 : vector<2x1024xf32> to vector<2x1024xbf16>
    %c0_42 = arith.constant 0 : index
    %c0_43 = arith.constant 0 : index
    %58 = vector.load %arg16[%c0_42, %c0_43] : memref<1024x256xbf16, #tpu.memory_space<vmem>>, vector<1024x256xbf16>
    %c0_44 = arith.constant 0 : index
    %c0_45 = arith.constant 0 : index
    %59 = vector.load %arg17[%c0_44, %c0_45] : memref<1x256xf32, #tpu.memory_space<vmem>>, vector<1x256xf32>
    %cst_46 = arith.constant dense<0.000000e+00> : vector<2x256xf32>
    %60 = tpu.matmul %57, %58, %cst_46 {dimension_numbers = #tpu.dot_dimension_numbers<[1], [0], [0], [1], [0, 0, 1, 1], [], []>} : vector<2x1024xbf16>, vector<1024x256xbf16>, vector<2x256xf32> -> vector<2x256xf32>
    %61 = vector.broadcast %59 : vector<1x256xf32> to vector<2x256xf32>
    %62 = arith.addf %60, %61 : vector<2x256xf32>
    %cst_47 = arith.constant 0.000000e+00 : f32
    %63 = vector.broadcast %cst_47 : f32 to vector<2x256xf32>
    %64 = arith.subf %63, %62 : vector<2x256xf32>
    %65 = math.exp %64 : vector<2x256xf32>
    %cst_48 = arith.constant 1.000000e+00 : f32
    %66 = vector.broadcast %cst_48 : f32 to vector<2x256xf32>
    %67 = arith.addf %66, %65 : vector<2x256xf32>
    %68 = tpu.reciprocal %67 {approx = true} : vector<2x256xf32> -> vector<2x256xf32>
    %c0_49 = arith.constant 0 : index
    %c0_50 = arith.constant 0 : index
    %69 = vector.load %arg18[%c0_49, %c0_50] : memref<2x256xf32, #tpu.memory_space<vmem>>, vector<2x256xf32>
    tpu.vector_store %arg18[%c0_49, %c0_50], %68 {strides = array<i32>} : memref<2x256xf32, #tpu.memory_space<vmem>>, vector<2x256xf32>,
    return
  }
  func.func @transform_0(%arg0: i32) -> (i32, i32) {
    %c0_i32 = arith.constant 0 : i32
    %c0_i32_0 = arith.constant 0 : i32
    return %arg0, %c0_i32 : i32, i32
  }
  func.func @transform_1(%arg0: i32) -> (i32, i32) {
    %c0_i32 = arith.constant 0 : i32
    %c0_i32_0 = arith.constant 0 : i32
    %c0_i32_1 = arith.constant 0 : i32
    return %c0_i32, %c0_i32_0 : i32, i32
  }
  func.func @transform_2(%arg0: i32) -> (i32, i32) {
    %c0_i32 = arith.constant 0 : i32
    %c0_i32_0 = arith.constant 0 : i32
    %c0_i32_1 = arith.constant 0 : i32
    return %c0_i32, %c0_i32_0 : i32, i32
  }
  func.func @transform_3(%arg0: i32) -> (i32, i32) {
    %c0_i32 = arith.constant 0 : i32
    %c0_i32_0 = arith.constant 0 : i32
    %c0_i32_1 = arith.constant 0 : i32
    return %c0_i32, %c0_i32_0 : i32, i32
  }
  func.func @transform_4(%arg0: i32) -> (i32, i32) {
    %c0_i32 = arith.constant 0 : i32
    %c0_i32_0 = arith.constant 0 : i32
    %c0_i32_1 = arith.constant 0 : i32
    return %c0_i32, %c0_i32_0 : i32, i32
  }
  func.func @transform_5(%arg0: i32) -> (i32, i32) {
    %c0_i32 = arith.constant 0 : i32
    %c0_i32_0 = arith.constant 0 : i32
    %c0_i32_1 = arith.constant 0 : i32
    return %c0_i32, %c0_i32_0 : i32, i32
  }
  func.func @transform_6(%arg0: i32) -> (i32, i32) {
    %c0_i32 = arith.constant 0 : i32
    %c0_i32_0 = arith.constant 0 : i32
    %c0_i32_1 = arith.constant 0 : i32
    return %c0_i32, %c0_i32_0 : i32, i32
  }
  func.func @transform_7(%arg0: i32) -> (i32, i32) {
    %c0_i32 = arith.constant 0 : i32
    %c0_i32_0 = arith.constant 0 : i32
    %c0_i32_1 = arith.constant 0 : i32
    return %c0_i32, %c0_i32_0 : i32, i32
  }
  func.func @transform_8(%arg0: i32) -> (i32, i32) {
    %c0_i32 = arith.constant 0 : i32
    %c0_i32_0 = arith.constant 0 : i32
    %c0_i32_1 = arith.constant 0 : i32
    return %c0_i32, %c0_i32_0 : i32, i32
  }
  func.func @transform_9(%arg0: i32) -> (i32, i32) {
    %c0_i32 = arith.constant 0 : i32
    %c0_i32_0 = arith.constant 0 : i32
    %c0_i32_1 = arith.constant 0 : i32
    return %c0_i32, %c0_i32_0 : i32, i32
  }
  func.func @transform_10(%arg0: i32) -> (i32, i32) {
    %c0_i32 = arith.constant 0 : i32
    %c0_i32_0 = arith.constant 0 : i32
    %c0_i32_1 = arith.constant 0 : i32
    return %c0_i32, %c0_i32_0 : i32, i32
  }
  func.func @transform_11(%arg0: i32) -> (i32, i32) {
    %c0_i32 = arith.constant 0 : i32
    %c0_i32_0 = arith.constant 0 : i32
    %c0_i32_1 = arith.constant 0 : i32
    return %c0_i32, %c0_i32_0 : i32, i32
  }
  func.func @transform_12(%arg0: i32) -> (i32, i32) {
    %c0_i32 = arith.constant 0 : i32
    %c0_i32_0 = arith.constant 0 : i32
    %c0_i32_1 = arith.constant 0 : i32
    return %c0_i32, %c0_i32_0 : i32, i32
  }
  func.func @transform_13(%arg0: i32) -> (i32, i32) {
    %c0_i32 = arith.constant 0 : i32
    %c0_i32_0 = arith.constant 0 : i32
    %c0_i32_1 = arith.constant 0 : i32
    return %c0_i32, %c0_i32_0 : i32, i32
  }
  func.func @transform_14(%arg0: i32) -> (i32, i32) {
    %c0_i32 = arith.constant 0 : i32
    %c0_i32_0 = arith.constant 0 : i32
    %c0_i32_1 = arith.constant 0 : i32
    return %c0_i32, %c0_i32_0 : i32, i32
  }
  func.func @transform_15(%arg0: i32) -> (i32, i32) {
    %c0_i32 = arith.constant 0 : i32
    %c0_i32_0 = arith.constant 0 : i32
    %c0_i32_1 = arith.constant 0 : i32
    return %c0_i32, %c0_i32_0 : i32, i32
  }
  func.func @transform_16(%arg0: i32) -> (i32, i32) {
    %c0_i32 = arith.constant 0 : i32
    %c0_i32_0 = arith.constant 0 : i32
    %c0_i32_1 = arith.constant 0 : i32
    return %c0_i32, %c0_i32_0 : i32, i32
  }
  func.func @transform_17(%arg0: i32) -> (i32, i32) {
    %c0_i32 = arith.constant 0 : i32
    %c0_i32_0 = arith.constant 0 : i32
    return %arg0, %c0_i32 : i32, i32
  }
}

</mosaic_0001>

<llo_original>
// kernel: conv_autoencoder_forward.1
$region0: #{conv_autoencoder_forward.1}
  #allocation0 [shape = 'u32[]', space=smem, size = 0x4, offset = 0x4, fixed_abs, tag = 'smem constant byte address 0x4 - core index']
  #allocation1 [shape = 'u32[144,128]{1,0:T(1,128)}', space=vmem, size = 0x12000, scoped, tag = 'internal scratch']
  %s0 = inlined_call_operand.vmem [shape: f32[2,256], index: 0, kind: input, shape index: {}]
  %s1 = inlined_call_operand.hbm [shape: bf16[256,1024], index: 1, kind: input, shape index: {}]
  %s2 = inlined_call_operand.vmem [shape: f32[1,1024], index: 2, kind: input, shape index: {}]
  %s3 = inlined_call_operand.hbm [shape: bf16[1024,512], index: 3, kind: input, shape index: {}]
  %s4 = inlined_call_operand.vmem [shape: f32[1,512], index: 4, kind: input, shape index: {}]
  %s5 = inlined_call_operand.hbm [shape: bf16[512,256], index: 5, kind: input, shape index: {}]
  %s6 = inlined_call_operand.vmem [shape: f32[1,256], index: 6, kind: input, shape index: {}]
  %s7 = inlined_call_operand.hbm [shape: bf16[256,128], index: 7, kind: input, shape index: {}]
  %s8 = inlined_call_operand.vmem [shape: f32[1,128], index: 8, kind: input, shape index: {}]
  %s9 = inlined_call_operand.hbm [shape: bf16[128,256], index: 9, kind: input, shape index: {}]
  %s10 = inlined_call_operand.vmem [shape: f32[1,256], index: 10, kind: input, shape index: {}]
  %s11 = inlined_call_operand.hbm [shape: bf16[256,512], index: 11, kind: input, shape index: {}]
  %s12 = inlined_call_operand.vmem [shape: f32[1,512], index: 12, kind: input, shape index: {}]
  %s13 = inlined_call_operand.hbm [shape: bf16[512,1024], index: 13, kind: input, shape index: {}]
  %s14 = inlined_call_operand.vmem [shape: f32[1,1024], index: 14, kind: input, shape index: {}]
  %s15 = inlined_call_operand.hbm [shape: bf16[1024,256], index: 15, kind: input, shape index: {}]
  %s16 = inlined_call_operand.vmem [shape: f32[1,256], index: 16, kind: input, shape index: {}]
  %s17 = inlined_call_operand.vmem [shape: f32[2,256], index: 17, kind: output, shape index: {}]
  %s18 = sld [smem:[#allocation0]]
  $region110: #{conv_autoencoder_forward.1} parent=0
    _
  %s20 = ssub.s32 1, %s18
  %s21 = scalar_select 0, %s20, %s18
  $region1: #{conv_autoencoder_forward.1} parent=0
    #allocation2 [shape = 'u8[524288]{0}', space=vmem, size = 0x80000, scoped, tag = 'input window, operand 1, single buffered']
    #allocation3 [shape = 's32[1]{0}', space=sflag, size = 0x4, scoped, tag = 'scoped memory for conv_autoencoder_forward.1']
    #allocation4 [shape = 'u8[1048576]{0}', space=vmem, size = 0x100000, scoped, tag = 'input window, operand 3, single buffered']
    #allocation5 [shape = 's32[1]{0}', space=sflag, size = 0x4, scoped, tag = 'scoped memory for conv_autoencoder_forward.1']
    #allocation6 [shape = 'u8[262144]{0}', space=vmem, size = 0x40000, scoped, tag = 'input window, operand 5, single buffered']
    #allocation7 [shape = 'u8[65536]{0}', space=vmem, size = 0x10000, scoped, tag = 'input window, operand 7, single buffered']
    #allocation8 [shape = 's32[1]{0}', space=sflag, size = 0x4, scoped, tag = 'scoped memory for conv_autoencoder_forward.1']
    #allocation9 [shape = 'u8[65536]{0}', space=vmem, size = 0x10000, scoped, tag = 'input window, operand 9, single buffered']
    #allocation10 [shape = 'u8[262144]{0}', space=vmem, size = 0x40000, scoped, tag = 'input window, operand 11, single buffered']
    #allocation11 [shape = 's32[1]{0}', space=sflag, size = 0x4, scoped, tag = 'scoped memory for conv_autoencoder_forward.1']
    #allocation12 [shape = 'u8[1048576]{0}', space=vmem, size = 0x100000, scoped, tag = 'input window, operand 13, single buffered']
    #allocation13 [shape = 'u8[524288]{0}', space=vmem, size = 0x80000, scoped, tag = 'input window, operand 15, single buffered']
    #allocation14 [shape = 's32[1]{0}', space=sflag, size = 0x4, scoped, tag = 'scoped memory for conv_autoencoder_forward.1']
    %22 = vsyncpa [#allocation3], 0
    %23 = vsyncpa [#allocation5], 0
    %24 = vsyncpa [#allocation8], 0
    %25 = vsyncpa [#allocation11], 0
    %26 = vsyncpa [#allocation14], 0
    // Predicated region
    $region2: #{conv_autoencoder_forward.1} parent=1 // pred_check
      _
    $region3: #{conv_autoencoder_forward.1} parent=1 // pred_check_branch
      %28 = sbr.rel (0) target = $region5
    $region4: #{conv_autoencoder_forward.1} parent=1 // pred_region
      _
    $region5: #{conv_autoencoder_forward.1} parent=1 // pred_fallthru
      _
    // Predicated region
    $region6: #{conv_autoencoder_forward.1} parent=1 // pred_check
      _
    $region7: #{conv_autoencoder_forward.1} parent=1 // pred_check_branch
      %30 = sbr.rel (0) target = $region9
    $region8: #{conv_autoencoder_forward.1} parent=1 // pred_region
      %s32 = ssub.s32 16384, 16384
      %33 = vsyncadd [#allocation3], %s32
      %s34 = sshll.u32 [#allocation2], 4
      %s35 = int_to_ptr.vmem [resolvable:$true] %s34
      %40 = dma.hbm_to_vmem [thread:$0]  %s1, 16384, %s35, [#allocation3], 512, 512, 32
    $region9: #{conv_autoencoder_forward.1} parent=1 // pred_fallthru
      _
    // Predicated region
    $region10: #{conv_autoencoder_forward.1} parent=1 // pred_check
      _
    $region11: #{conv_autoencoder_forward.1} parent=1 // pred_check_branch
      %42 = sbr.rel (0) target = $region13
    $region12: #{conv_autoencoder_forward.1} parent=1 // pred_region
      _
    $region13: #{conv_autoencoder_forward.1} parent=1 // pred_fallthru
      _
    // Predicated region
    $region14: #{conv_autoencoder_forward.1} parent=1 // pred_check
      _
    $region15: #{conv_autoencoder_forward.1} parent=1 // pred_check_branch
      %44 = sbr.rel (0) target = $region17
    $region16: #{conv_autoencoder_forward.1} parent=1 // pred_region
      %s46 = ssub.s32 32768, 32768
      %47 = vsyncadd [#allocation5], %s46
      %s48 = sshll.u32 [#allocation4], 4
      %s49 = int_to_ptr.vmem [resolvable:$true] %s48
      %54 = dma.hbm_to_vmem [thread:$0]  %s3, 32768, %s49, [#allocation5], 256, 256, 16
    $region17: #{conv_autoencoder_forward.1} parent=1 // pred_fallthru
      _
    // Predicated region
    $region18: #{conv_autoencoder_forward.1} parent=1 // pred_check
      _
    $region19: #{conv_autoencoder_forward.1} parent=1 // pred_check_branch
      %56 = sbr.rel (0) target = $region21
    $region20: #{conv_autoencoder_forward.1} parent=1 // pred_region
      _
    $region21: #{conv_autoencoder_forward.1} parent=1 // pred_fallthru
      _
    // Predicated region
    $region22: #{conv_autoencoder_forward.1} parent=1 // pred_check
      _
    $region23: #{conv_autoencoder_forward.1} parent=1 // pred_check_branch
      %58 = sbr.rel (0) target = $region25
    $region24: #{conv_autoencoder_forward.1} parent=1 // pred_region
      %s60 = ssub.s32 8192, 8192
      %61 = vsyncadd [#allocation5], %s60
      %s62 = sshll.u32 [#allocation6], 4
      %s63 = int_to_ptr.vmem [resolvable:$true] %s62
      %68 = dma.hbm_to_vmem [thread:$0]  %s5, 8192, %s63, [#allocation5], 128, 128, 8
    $region25: #{conv_autoencoder_forward.1} parent=1 // pred_fallthru
      _
    // Predicated region
    $region26: #{conv_autoencoder_forward.1} parent=1 // pred_check
      _
    $region27: #{conv_autoencoder_forward.1} parent=1 // pred_check_branch
      %70 = sbr.rel (0) target = $region29
    $region28: #{conv_autoencoder_forward.1} parent=1 // pred_region
      _
    $region29: #{conv_autoencoder_forward.1} parent=1 // pred_fallthru
      _
    // Predicated region
    $region30: #{conv_autoencoder_forward.1} parent=1 // pred_check
      _
    $region31: #{conv_autoencoder_forward.1} parent=1 // pred_check_branch
      %72 = sbr.rel (0) target = $region33
    $region32: #{conv_autoencoder_forward.1} parent=1 // pred_region
      %s74 = ssub.s32 2048, 2048
      %75 = vsyncadd [#allocation8], %s74
      %s76 = sshll.u32 [#allocation7], 4
      %s77 = int_to_ptr.vmem [resolvable:$true] %s76
      %82 = dma.hbm_to_vmem [thread:$0]  %s7, 2048, %s77, [#allocation8], 64, 64, 4
    $region33: #{conv_autoencoder_forward.1} parent=1 // pred_fallthru
      _
    // Predicated region
    $region34: #{conv_autoencoder_forward.1} parent=1 // pred_check
      _
    $region35: #{conv_autoencoder_forward.1} parent=1 // pred_check_branch
      %84 = sbr.rel (0) target = $region37
    $region36: #{conv_autoencoder_forward.1} parent=1 // pred_region
      _
    $region37: #{conv_autoencoder_forward.1} parent=1 // pred_fallthru
      _
    // Predicated region
    $region38: #{conv_autoencoder_forward.1} parent=1 // pred_check
      _
    $region39: #{conv_autoencoder_forward.1} parent=1 // pred_check_branch
      %86 = sbr.rel (0) target = $region41
    $region40: #{conv_autoencoder_forward.1} parent=1 // pred_region
      %s88 = ssub.s32 2048, 2048
      %89 = vsyncadd [#allocation8], %s88
      %s90 = sshll.u32 [#allocation9], 4
      %s91 = int_to_ptr.vmem [resolvable:$true] %s90
      %96 = dma.hbm_to_vmem [thread:$0]  %s9, 2048, %s91, [#allocation8], 128, 128, 8
    $region41: #{conv_autoencoder_forward.1} parent=1 // pred_fallthru
      _
    // Predicated region
    $region42: #{conv_autoencoder_forward.1} parent=1 // pred_check
      _
    $region43: #{conv_autoencoder_forward.1} parent=1 // pred_check_branch
      %98 = sbr.rel (0) target = $region45
    $region44: #{conv_autoencoder_forward.1} parent=1 // pred_region
      _
    $region45: #{conv_autoencoder_forward.1} parent=1 // pred_fallthru
      _
    // Predicated region
    $region46: #{conv_autoencoder_forward.1} parent=1 // pred_check
      _
    $region47: #{conv_autoencoder_forward.1} parent=1 // pred_check_branch
      %100 = sbr.rel (0) target = $region49
    $region48: #{conv_autoencoder_forward.1} parent=1 // pred_region
      %s102 = ssub.s32 8192, 8192
      %103 = vsyncadd [#allocation11], %s102
      %s104 = sshll.u32 [#allocation10], 4
      %s105 = int_to_ptr.vmem [resolvable:$true] %s104
      %110 = dma.hbm_to_vmem [thread:$0]  %s11, 8192, %s105, [#allocation11], 256, 256, 16
    $region49: #{conv_autoencoder_forward.1} parent=1 // pred_fallthru
      _
    // Predicated region
    $region50: #{conv_autoencoder_forward.1} parent=1 // pred_check
      _
    $region51: #{conv_autoencoder_forward.1} parent=1 // pred_check_branch
      %112 = sbr.rel (0) target = $region53
    $region52: #{conv_autoencoder_forward.1} parent=1 // pred_region
      _
    $region53: #{conv_autoencoder_forward.1} parent=1 // pred_fallthru
      _
    // Predicated region
    $region54: #{conv_autoencoder_forward.1} parent=1 // pred_check
      _
    $region55: #{conv_autoencoder_forward.1} parent=1 // pred_check_branch
      %114 = sbr.rel (0) target = $region57
    $region56: #{conv_autoencoder_forward.1} parent=1 // pred_region
      %s116 = ssub.s32 32768, 32768
      %117 = vsyncadd [#allocation11], %s116
      %s118 = sshll.u32 [#allocation12], 4
      %s119 = int_to_ptr.vmem [resolvable:$true] %s118
      %124 = dma.hbm_to_vmem [thread:$0]  %s13, 32768, %s119, [#allocation11], 512, 512, 32
    $region57: #{conv_autoencoder_forward.1} parent=1 // pred_fallthru
      _
    // Predicated region
    $region58: #{conv_autoencoder_forward.1} parent=1 // pred_check
      _
    $region59: #{conv_autoencoder_forward.1} parent=1 // pred_check_branch
      %126 = sbr.rel (0) target = $region61
    $region60: #{conv_autoencoder_forward.1} parent=1 // pred_region
      _
    $region61: #{conv_autoencoder_forward.1} parent=1 // pred_fallthru
      _
    // Predicated region
    $region62: #{conv_autoencoder_forward.1} parent=1 // pred_check
      _
    $region63: #{conv_autoencoder_forward.1} parent=1 // pred_check_branch
      %128 = sbr.rel (0) target = $region65
    $region64: #{conv_autoencoder_forward.1} parent=1 // pred_region
      %s130 = ssub.s32 16384, 16384
      %131 = vsyncadd [#allocation14], %s130
      %s132 = sshll.u32 [#allocation13], 4
      %s133 = int_to_ptr.vmem [resolvable:$true] %s132
      %138 = dma.hbm_to_vmem [thread:$0]  %s15, 16384, %s133, [#allocation14], 128, 128, 8
    $region65: #{conv_autoencoder_forward.1} parent=1 // pred_fallthru
      _
    // Predicated region
    $region66: #{conv_autoencoder_forward.1} parent=1 // pred_check
      _
    $region67: #{conv_autoencoder_forward.1} parent=1 // pred_check_branch
      %140 = sbr.rel (0) target = $region69
    $region68: #{conv_autoencoder_forward.1} parent=1 // pred_region
      _
    $region69: #{conv_autoencoder_forward.1} parent=1 // pred_fallthru
      _
    // Predicated region
    $region70: #{conv_autoencoder_forward.1} parent=1 // pred_check
      _
    $region71: #{conv_autoencoder_forward.1} parent=1 // pred_check_branch
      %142 = sbr.rel (0) target = $region73
    $region72: #{conv_autoencoder_forward.1} parent=1 // pred_region
      %143 = dma.done [#allocation3], 16384
    $region73: #{conv_autoencoder_forward.1} parent=1 // pred_fallthru
      _
    // Predicated region
    $region74: #{conv_autoencoder_forward.1} parent=1 // pred_check
      _
    $region75: #{conv_autoencoder_forward.1} parent=1 // pred_check_branch
      %145 = sbr.rel (0) target = $region77
    $region76: #{conv_autoencoder_forward.1} parent=1 // pred_region
      %146 = dma.done [#allocation5], 32768
    $region77: #{conv_autoencoder_forward.1} parent=1 // pred_fallthru
      _
    // Predicated region
    $region78: #{conv_autoencoder_forward.1} parent=1 // pred_check
      _
    $region79: #{conv_autoencoder_forward.1} parent=1 // pred_check_branch
      %148 = sbr.rel (0) target = $region81
    $region80: #{conv_autoencoder_forward.1} parent=1 // pred_region
      %149 = dma.done [#allocation5], 8192
    $region81: #{conv_autoencoder_forward.1} parent=1 // pred_fallthru
      _
    // Predicated region
    $region82: #{conv_autoencoder_forward.1} parent=1 // pred_check
      _
    $region83: #{conv_autoencoder_forward.1} parent=1 // pred_check_branch
      %151 = sbr.rel (0) target = $region85
    $region84: #{conv_autoencoder_forward.1} parent=1 // pred_region
      %152 = dma.done [#allocation8], 2048
    $region85: #{conv_autoencoder_forward.1} parent=1 // pred_fallthru
      _
    // Predicated region
    $region86: #{conv_autoencoder_forward.1} parent=1 // pred_check
      _
    $region87: #{conv_autoencoder_forward.1} parent=1 // pred_check_branch
      %154 = sbr.rel (0) target = $region89
    $region88: #{conv_autoencoder_forward.1} parent=1 // pred_region
      %155 = dma.done [#allocation8], 2048
    $region89: #{conv_autoencoder_forward.1} parent=1 // pred_fallthru
      _
    // Predicated region
    $region90: #{conv_autoencoder_forward.1} parent=1 // pred_check
      _
    $region91: #{conv_autoencoder_forward.1} parent=1 // pred_check_branch
      %157 = sbr.rel (0) target = $region93
    $region92: #{conv_autoencoder_forward.1} parent=1 // pred_region
      %158 = dma.done [#allocation11], 8192
    $region93: #{conv_autoencoder_forward.1} parent=1 // pred_fallthru
      _
    // Predicated region
    $region94: #{conv_autoencoder_forward.1} parent=1 // pred_check
      _
    $region95: #{conv_autoencoder_forward.1} parent=1 // pred_check_branch
      %160 = sbr.rel (0) target = $region97
    $region96: #{conv_autoencoder_forward.1} parent=1 // pred_region
      %161 = dma.done [#allocation11], 32768
    $region97: #{conv_autoencoder_forward.1} parent=1 // pred_fallthru
      _
    // Predicated region
    $region98: #{conv_autoencoder_forward.1} parent=1 // pred_check
      _
    $region99: #{conv_autoencoder_forward.1} parent=1 // pred_check_branch
      %163 = sbr.rel (0) target = $region101
    $region100: #{conv_autoencoder_forward.1} parent=1 // pred_region
      %164 = dma.done [#allocation14], 16384
    $region101: #{conv_autoencoder_forward.1} parent=1 // pred_fallthru
      _
    %v166 = vld [vmem:[%s0] sm:$0xf]
    %v169 = vunpack.c.l.s4 1983009808
    %v170 = vunpack.c.0.s8 %v169
    %v171 = vlaneseq
    %v172 = vshrl.u32 %v171, 7
    %v173 = vsub.s32 %v170, %v172
    %v174 = vrot.slane %v166, %v173
    %v175 = vcombine.high %v174, %v174
    %v178 = vpack.c.bf16 %v174, %v174
    %v179 = vpack.c.bf16 %v175, %v175
    %v180 = vld [vmem:[#allocation2] sm:$0xff]
    %v181 = vld [vmem:[#allocation2 + $0x8] sm:$0xff]
    %v182 = vld [vmem:[#allocation2 + $0x10] sm:$0xff]
    %v183 = vld [vmem:[#allocation2 + $0x18] sm:$0xff]
    %v184 = vld [vmem:[#allocation2 + $0x20] sm:$0xff]
    %v185 = vld [vmem:[#allocation2 + $0x28] sm:$0xff]
    %v186 = vld [vmem:[#allocation2 + $0x30] sm:$0xff]
    %v187 = vld [vmem:[#allocation2 + $0x38] sm:$0xff]
    %v188 = vld [vmem:[#allocation2 + $0x40] sm:$0xff]
    %v189 = vld [vmem:[#allocation2 + $0x48] sm:$0xff]
    %v190 = vld [vmem:[#allocation2 + $0x50] sm:$0xff]
    %v191 = vld [vmem:[#allocation2 + $0x58] sm:$0xff]
    %v192 = vld [vmem:[#allocation2 + $0x60] sm:$0xff]
    %v193 = vld [vmem:[#allocation2 + $0x68] sm:$0xff]
    %v194 = vld [vmem:[#allocation2 + $0x70] sm:$0xff]
    %v195 = vld [vmem:[#allocation2 + $0x78] sm:$0xff]
    %v196 = vld [vmem:[#allocation2 + $0x80] sm:$0xff]
    %v197 = vld [vmem:[#allocation2 + $0x88] sm:$0xff]
    %v198 = vld [vmem:[#allocation2 + $0x90] sm:$0xff]
    %v199 = vld [vmem:[#allocation2 + $0x98] sm:$0xff]
    %v200 = vld [vmem:[#allocation2 + $0xa0] sm:$0xff]
    %v201 = vld [vmem:[#allocation2 + $0xa8] sm:$0xff]
    %v202 = vld [vmem:[#allocation2 + $0xb0] sm:$0xff]
    %v203 = vld [vmem:[#allocation2 + $0xb8] sm:$0xff]
    %v204 = vld [vmem:[#allocation2 + $0xc0] sm:$0xff]
    %v205 = vld [vmem:[#allocation2 + $0xc8] sm:$0xff]
    %v206 = vld [vmem:[#allocation2 + $0xd0] sm:$0xff]
    %v207 = vld [vmem:[#allocation2 + $0xd8] sm:$0xff]
    %v208 = vld [vmem:[#allocation2 + $0xe0] sm:$0xff]
    %v209 = vld [vmem:[#allocation2 + $0xe8] sm:$0xff]
    %v210 = vld [vmem:[#allocation2 + $0xf0] sm:$0xff]
    %v211 = vld [vmem:[#allocation2 + $0xf8] sm:$0xff]
    %v212 = vld [vmem:[#allocation2 + $0x100] sm:$0xff]
    %v213 = vld [vmem:[#allocation2 + $0x108] sm:$0xff]
    %v214 = vld [vmem:[#allocation2 + $0x110] sm:$0xff]
    %v215 = vld [vmem:[#allocation2 + $0x118] sm:$0xff]
    %v216 = vld [vmem:[#allocation2 + $0x120] sm:$0xff]
    %v217 = vld [vmem:[#allocation2 + $0x128] sm:$0xff]
    %v218 = vld [vmem:[#allocation2 + $0x130] sm:$0xff]
    %v219 = vld [vmem:[#allocation2 + $0x138] sm:$0xff]
    %v220 = vld [vmem:[#allocation2 + $0x140] sm:$0xff]
    %v221 = vld [vmem:[#allocation2 + $0x148] sm:$0xff]
    %v222 = vld [vmem:[#allocation2 + $0x150] sm:$0xff]
    %v223 = vld [vmem:[#allocation2 + $0x158] sm:$0xff]
    %v224 = vld [vmem:[#allocation2 + $0x160] sm:$0xff]
    %v225 = vld [vmem:[#allocation2 + $0x168] sm:$0xff]
    %v226 = vld [vmem:[#allocation2 + $0x170] sm:$0xff]
    %v227 = vld [vmem:[#allocation2 + $0x178] sm:$0xff]
    %v228 = vld [vmem:[#allocation2 + $0x180] sm:$0xff]
    %v229 = vld [vmem:[#allocation2 + $0x188] sm:$0xff]
    %v230 = vld [vmem:[#allocation2 + $0x190] sm:$0xff]
    %v231 = vld [vmem:[#allocation2 + $0x198] sm:$0xff]
    %v232 = vld [vmem:[#allocation2 + $0x1a0] sm:$0xff]
    %v233 = vld [vmem:[#allocation2 + $0x1a8] sm:$0xff]
    %v234 = vld [vmem:[#allocation2 + $0x1b0] sm:$0xff]
    %v235 = vld [vmem:[#allocation2 + $0x1b8] sm:$0xff]
    %v236 = vld [vmem:[#allocation2 + $0x1c0] sm:$0xff]
    %v237 = vld [vmem:[#allocation2 + $0x1c8] sm:$0xff]
    %v238 = vld [vmem:[#allocation2 + $0x1d0] sm:$0xff]
    %v239 = vld [vmem:[#allocation2 + $0x1d8] sm:$0xff]
    %v240 = vld [vmem:[#allocation2 + $0x1e0] sm:$0xff]
    %v241 = vld [vmem:[#allocation2 + $0x1e8] sm:$0xff]
    %v242 = vld [vmem:[#allocation2 + $0x1f0] sm:$0xff]
    %v243 = vld [vmem:[#allocation2 + $0x1f8] sm:$0xff]
    %v244 = vld [vmem:[#allocation2 + $0x200] sm:$0xff]
    %v245 = vld [vmem:[#allocation2 + $0x208] sm:$0xff]
    %v246 = vld [vmem:[#allocation2 + $0x210] sm:$0xff]
    %v247 = vld [vmem:[#allocation2 + $0x218] sm:$0xff]
    %v248 = vld [vmem:[#allocation2 + $0x220] sm:$0xff]
    %v249 = vld [vmem:[#allocation2 + $0x228] sm:$0xff]
    %v250 = vld [vmem:[#allocation2 + $0x230] sm:$0xff]
    %v251 = vld [vmem:[#allocation2 + $0x238] sm:$0xff]
    %v252 = vld [vmem:[#allocation2 + $0x240] sm:$0xff]
    %v253 = vld [vmem:[#allocation2 + $0x248] sm:$0xff]
    %v254 = vld [vmem:[#allocation2 + $0x250] sm:$0xff]
    %v255 = vld [vmem:[#allocation2 + $0x258] sm:$0xff]
    %v256 = vld [vmem:[#allocation2 + $0x260] sm:$0xff]
    %v257 = vld [vmem:[#allocation2 + $0x268] sm:$0xff]
    %v258 = vld [vmem:[#allocation2 + $0x270] sm:$0xff]
    %v259 = vld [vmem:[#allocation2 + $0x278] sm:$0xff]
    %v260 = vld [vmem:[#allocation2 + $0x280] sm:$0xff]
    %v261 = vld [vmem:[#allocation2 + $0x288] sm:$0xff]
    %v262 = vld [vmem:[#allocation2 + $0x290] sm:$0xff]
    %v263 = vld [vmem:[#allocation2 + $0x298] sm:$0xff]
    %v264 = vld [vmem:[#allocation2 + $0x2a0] sm:$0xff]
    %v265 = vld [vmem:[#allocation2 + $0x2a8] sm:$0xff]
    %v266 = vld [vmem:[#allocation2 + $0x2b0] sm:$0xff]
    %v267 = vld [vmem:[#allocation2 + $0x2b8] sm:$0xff]
    %v268 = vld [vmem:[#allocation2 + $0x2c0] sm:$0xff]
    %v269 = vld [vmem:[#allocation2 + $0x2c8] sm:$0xff]
    %v270 = vld [vmem:[#allocation2 + $0x2d0] sm:$0xff]
    %v271 = vld [vmem:[#allocation2 + $0x2d8] sm:$0xff]
    %v272 = vld [vmem:[#allocation2 + $0x2e0] sm:$0xff]
    %v273 = vld [vmem:[#allocation2 + $0x2e8] sm:$0xff]
    %v274 = vld [vmem:[#allocation2 + $0x2f0] sm:$0xff]
    %v275 = vld [vmem:[#allocation2 + $0x2f8] sm:$0xff]
    %v276 = vld [vmem:[#allocation2 + $0x300] sm:$0xff]
    %v277 = vld [vmem:[#allocation2 + $0x308] sm:$0xff]
    %v278 = vld [vmem:[#allocation2 + $0x310] sm:$0xff]
    %v279 = vld [vmem:[#allocation2 + $0x318] sm:$0xff]
    %v280 = vld [vmem:[#allocation2 + $0x320] sm:$0xff]
    %v281 = vld [vmem:[#allocation2 + $0x328] sm:$0xff]
    %v282 = vld [vmem:[#allocation2 + $0x330] sm:$0xff]
    %v283 = vld [vmem:[#allocation2 + $0x338] sm:$0xff]
    %v284 = vld [vmem:[#allocation2 + $0x340] sm:$0xff]
    %v285 = vld [vmem:[#allocation2 + $0x348] sm:$0xff]
    %v286 = vld [vmem:[#allocation2 + $0x350] sm:$0xff]
    %v287 = vld [vmem:[#allocation2 + $0x358] sm:$0xff]
    %v288 = vld [vmem:[#allocation2 + $0x360] sm:$0xff]
    %v289 = vld [vmem:[#allocation2 + $0x368] sm:$0xff]
    %v290 = vld [vmem:[#allocation2 + $0x370] sm:$0xff]
    %v291 = vld [vmem:[#allocation2 + $0x378] sm:$0xff]
    %v292 = vld [vmem:[#allocation2 + $0x380] sm:$0xff]
    %v293 = vld [vmem:[#allocation2 + $0x388] sm:$0xff]
    %v294 = vld [vmem:[#allocation2 + $0x390] sm:$0xff]
    %v295 = vld [vmem:[#allocation2 + $0x398] sm:$0xff]
    %v296 = vld [vmem:[#allocation2 + $0x3a0] sm:$0xff]
    %v297 = vld [vmem:[#allocation2 + $0x3a8] sm:$0xff]
    %v298 = vld [vmem:[#allocation2 + $0x3b0] sm:$0xff]
    %v299 = vld [vmem:[#allocation2 + $0x3b8] sm:$0xff]
    %v300 = vld [vmem:[#allocation2 + $0x3c0] sm:$0xff]
    %v301 = vld [vmem:[#allocation2 + $0x3c8] sm:$0xff]
    %v302 = vld [vmem:[#allocation2 + $0x3d0] sm:$0xff]
    %v303 = vld [vmem:[#allocation2 + $0x3d8] sm:$0xff]
    %v304 = vld [vmem:[#allocation2 + $0x3e0] sm:$0xff]
    %v305 = vld [vmem:[#allocation2 + $0x3e8] sm:$0xff]
    %v306 = vld [vmem:[#allocation2 + $0x3f0] sm:$0xff]
    %v307 = vld [vmem:[#allocation2 + $0x3f8] sm:$0xff]
    %v308 = vld [vmem:[%s2] sm:$0xff]
    %v310 = vlaneseq
    %v311 = vshrl.u32 %v310, 7
    %v312 = vsub.s32 0, %v311
    %v313 = vrot.slane %v308, %v312
    %v314 = vlaneseq
    %v315 = vshrl.u32 %v314, 7
    %v316 = vsub.s32 1, %v315
    %v317 = vrot.slane %v308, %v316
    %v318 = vlaneseq
    %v319 = vshrl.u32 %v318, 7
    %v320 = vsub.s32 2, %v319
    %v321 = vrot.slane %v308, %v320
    %v322 = vlaneseq
    %v323 = vshrl.u32 %v322, 7
    %v324 = vsub.s32 3, %v323
    %v325 = vrot.slane %v308, %v324
    %v326 = vlaneseq
    %v327 = vshrl.u32 %v326, 7
    %v328 = vsub.s32 4, %v327
    %v329 = vrot.slane %v308, %v328
    %v330 = vlaneseq
    %v331 = vshrl.u32 %v330, 7
    %v332 = vsub.s32 5, %v331
    %v333 = vrot.slane %v308, %v332
    %v334 = vlaneseq
    %v335 = vshrl.u32 %v334, 7
    %v336 = vsub.s32 6, %v335
    %v337 = vrot.slane %v308, %v336
    %v338 = vlaneseq
    %v339 = vshrl.u32 %v338, 7
    %v340 = vsub.s32 7, %v339
    %v341 = vrot.slane %v308, %v340
    %v478 = vunpack.c.l.b16 %v180
    %v479 = vunpack.c.h.b16 %v180
    %v480 = vunpack.c.l.b16 %v181
    %v481 = vunpack.c.h.b16 %v181
    %v482 = vunpack.c.l.b16 %v182
    %v483 = vunpack.c.h.b16 %v182
    %v484 = vunpack.c.l.b16 %v183
    %v485 = vunpack.c.h.b16 %v183
    %v486 = vunpack.c.l.b16 %v184
    %v487 = vunpack.c.h.b16 %v184
    %v488 = vunpack.c.l.b16 %v185
    %v489 = vunpack.c.h.b16 %v185
    %v490 = vunpack.c.l.b16 %v186
    %v491 = vunpack.c.h.b16 %v186
    %v492 = vunpack.c.l.b16 %v187
    %v493 = vunpack.c.h.b16 %v187
    %v494 = vunpack.c.l.b16 %v188
    %v495 = vunpack.c.h.b16 %v188
    %v496 = vunpack.c.l.b16 %v189
    %v497 = vunpack.c.h.b16 %v189
    %v498 = vunpack.c.l.b16 %v190
    %v499 = vunpack.c.h.b16 %v190
    %v500 = vunpack.c.l.b16 %v191
    %v501 = vunpack.c.h.b16 %v191
    %v502 = vunpack.c.l.b16 %v192
    %v503 = vunpack.c.h.b16 %v192
    %v504 = vunpack.c.l.b16 %v193
    %v505 = vunpack.c.h.b16 %v193
    %v506 = vunpack.c.l.b16 %v194
    %v507 = vunpack.c.h.b16 %v194
    %v508 = vunpack.c.l.b16 %v195
    %v509 = vunpack.c.h.b16 %v195
    %v510 = vunpack.c.l.b16 %v196
    %v511 = vunpack.c.h.b16 %v196
    %v512 = vunpack.c.l.b16 %v197
    %v513 = vunpack.c.h.b16 %v197
    %v514 = vunpack.c.l.b16 %v198
    %v515 = vunpack.c.h.b16 %v198
    %v516 = vunpack.c.l.b16 %v199
    %v517 = vunpack.c.h.b16 %v199
    %v518 = vunpack.c.l.b16 %v200
    %v519 = vunpack.c.h.b16 %v200
    %v520 = vunpack.c.l.b16 %v201
    %v521 = vunpack.c.h.b16 %v201
    %v522 = vunpack.c.l.b16 %v202
    %v523 = vunpack.c.h.b16 %v202
    %v524 = vunpack.c.l.b16 %v203
    %v525 = vunpack.c.h.b16 %v203
    %v526 = vunpack.c.l.b16 %v204
    %v527 = vunpack.c.h.b16 %v204
    %v528 = vunpack.c.l.b16 %v205
    %v529 = vunpack.c.h.b16 %v205
    %v530 = vunpack.c.l.b16 %v206
    %v531 = vunpack.c.h.b16 %v206
    %v532 = vunpack.c.l.b16 %v207
    %v533 = vunpack.c.h.b16 %v207
    %v534 = vunpack.c.l.b16 %v208
    %v535 = vunpack.c.h.b16 %v208
    %v536 = vunpack.c.l.b16 %v209
    %v537 = vunpack.c.h.b16 %v209
    %v538 = vunpack.c.l.b16 %v210
    %v539 = vunpack.c.h.b16 %v210
    %v540 = vunpack.c.l.b16 %v211
    %v541 = vunpack.c.h.b16 %v211
    %v542 = vunpack.c.l.b16 %v212
    %v543 = vunpack.c.h.b16 %v212
    %v544 = vunpack.c.l.b16 %v213
    %v545 = vunpack.c.h.b16 %v213
    %v546 = vunpack.c.l.b16 %v214
    %v547 = vunpack.c.h.b16 %v214
    %v548 = vunpack.c.l.b16 %v215
    %v549 = vunpack.c.h.b16 %v215
    %v550 = vunpack.c.l.b16 %v216
    %v551 = vunpack.c.h.b16 %v216
    %v552 = vunpack.c.l.b16 %v217
    %v553 = vunpack.c.h.b16 %v217
    %v554 = vunpack.c.l.b16 %v218
    %v555 = vunpack.c.h.b16 %v218
    %v556 = vunpack.c.l.b16 %v219
    %v557 = vunpack.c.h.b16 %v219
    %v558 = vunpack.c.l.b16 %v220
    %v559 = vunpack.c.h.b16 %v220
    %v560 = vunpack.c.l.b16 %v221
    %v561 = vunpack.c.h.b16 %v221
    %v562 = vunpack.c.l.b16 %v222
    %v563 = vunpack.c.h.b16 %v222
    %v564 = vunpack.c.l.b16 %v223
    %v565 = vunpack.c.h.b16 %v223
    %v566 = vunpack.c.l.b16 %v224
    %v567 = vunpack.c.h.b16 %v224
    %v568 = vunpack.c.l.b16 %v225
    %v569 = vunpack.c.h.b16 %v225
    %v570 = vunpack.c.l.b16 %v226
    %v571 = vunpack.c.h.b16 %v226
    %v572 = vunpack.c.l.b16 %v227
    %v573 = vunpack.c.h.b16 %v227
    %v574 = vunpack.c.l.b16 %v228
    %v575 = vunpack.c.h.b16 %v228
    %v576 = vunpack.c.l.b16 %v229
    %v577 = vunpack.c.h.b16 %v229
    %v578 = vunpack.c.l.b16 %v230
    %v579 = vunpack.c.h.b16 %v230
    %v580 = vunpack.c.l.b16 %v231
    %v581 = vunpack.c.h.b16 %v231
    %v582 = vunpack.c.l.b16 %v232
    %v583 = vunpack.c.h.b16 %v232
    %v584 = vunpack.c.l.b16 %v233
    %v585 = vunpack.c.h.b16 %v233
    %v586 = vunpack.c.l.b16 %v234
    %v587 = vunpack.c.h.b16 %v234
    %v588 = vunpack.c.l.b16 %v235
    %v589 = vunpack.c.h.b16 %v235
    %v590 = vunpack.c.l.b16 %v236
    %v591 = vunpack.c.h.b16 %v236
    %v592 = vunpack.c.l.b16 %v237
    %v593 = vunpack.c.h.b16 %v237
    %v594 = vunpack.c.l.b16 %v238
    %v595 = vunpack.c.h.b16 %v238
    %v596 = vunpack.c.l.b16 %v239
    %v597 = vunpack.c.h.b16 %v239
    %v598 = vunpack.c.l.b16 %v240
    %v599 = vunpack.c.h.b16 %v240
    %v600 = vunpack.c.l.b16 %v241
    %v601 = vunpack.c.h.b16 %v241
    %v602 = vunpack.c.l.b16 %v242
    %v603 = vunpack.c.h.b16 %v242
    %v604 = vunpack.c.l.b16 %v243
    %v605 = vunpack.c.h.b16 %v243
    %v606 = vunpack.c.l.b16 %v244
    %v607 = vunpack.c.h.b16 %v244
    %v608 = vunpack.c.l.b16 %v245
    %v609 = vunpack.c.h.b16 %v245
    %v610 = vunpack.c.l.b16 %v246
    %v611 = vunpack.c.h.b16 %v246
    %v612 = vunpack.c.l.b16 %v247
    %v613 = vunpack.c.h.b16 %v247
    %v614 = vunpack.c.l.b16 %v248
    %v615 = vunpack.c.h.b16 %v248
    %v616 = vunpack.c.l.b16 %v249
    %v617 = vunpack.c.h.b16 %v249
    %v618 = vunpack.c.l.b16 %v250
    %v619 = vunpack.c.h.b16 %v250
    %v620 = vunpack.c.l.b16 %v251
    %v621 = vunpack.c.h.b16 %v251
    %v622 = vunpack.c.l.b16 %v252
    %v623 = vunpack.c.h.b16 %v252
    %v624 = vunpack.c.l.b16 %v253
    %v625 = vunpack.c.h.b16 %v253
    %v626 = vunpack.c.l.b16 %v254
    %v627 = vunpack.c.h.b16 %v254
    %v628 = vunpack.c.l.b16 %v255
    %v629 = vunpack.c.h.b16 %v255
    %v630 = vunpack.c.l.b16 %v256
    %v631 = vunpack.c.h.b16 %v256
    %v632 = vunpack.c.l.b16 %v257
    %v633 = vunpack.c.h.b16 %v257
    %v634 = vunpack.c.l.b16 %v258
    %v635 = vunpack.c.h.b16 %v258
    %v636 = vunpack.c.l.b16 %v259
    %v637 = vunpack.c.h.b16 %v259
    %v638 = vunpack.c.l.b16 %v260
    %v639 = vunpack.c.h.b16 %v260
    %v640 = vunpack.c.l.b16 %v261
    %v641 = vunpack.c.h.b16 %v261
    %v642 = vunpack.c.l.b16 %v262
    %v643 = vunpack.c.h.b16 %v262
    %v644 = vunpack.c.l.b16 %v263
    %v645 = vunpack.c.h.b16 %v263
    %v646 = vunpack.c.l.b16 %v264
    %v647 = vunpack.c.h.b16 %v264
    %v648 = vunpack.c.l.b16 %v265
    %v649 = vunpack.c.h.b16 %v265
    %v650 = vunpack.c.l.b16 %v266
    %v651 = vunpack.c.h.b16 %v266
    %v652 = vunpack.c.l.b16 %v267
    %v653 = vunpack.c.h.b16 %v267
    %v654 = vunpack.c.l.b16 %v268
    %v655 = vunpack.c.h.b16 %v268
    %v656 = vunpack.c.l.b16 %v269
    %v657 = vunpack.c.h.b16 %v269
    %v658 = vunpack.c.l.b16 %v270
    %v659 = vunpack.c.h.b16 %v270
    %v660 = vunpack.c.l.b16 %v271
    %v661 = vunpack.c.h.b16 %v271
    %v662 = vunpack.c.l.b16 %v272
    %v663 = vunpack.c.h.b16 %v272
    %v664 = vunpack.c.l.b16 %v273
    %v665 = vunpack.c.h.b16 %v273
    %v666 = vunpack.c.l.b16 %v274
    %v667 = vunpack.c.h.b16 %v274
    %v668 = vunpack.c.l.b16 %v275
    %v669 = vunpack.c.h.b16 %v275
    %v670 = vunpack.c.l.b16 %v276
    %v671 = vunpack.c.h.b16 %v276
    %v672 = vunpack.c.l.b16 %v277
    %v673 = vunpack.c.h.b16 %v277
    %v674 = vunpack.c.l.b16 %v278
    %v675 = vunpack.c.h.b16 %v278
    %v676 = vunpack.c.l.b16 %v279
    %v677 = vunpack.c.h.b16 %v279
    %v678 = vunpack.c.l.b16 %v280
    %v679 = vunpack.c.h.b16 %v280
    %v680 = vunpack.c.l.b16 %v281
    %v681 = vunpack.c.h.b16 %v281
    %v682 = vunpack.c.l.b16 %v282
    %v683 = vunpack.c.h.b16 %v282
    %v684 = vunpack.c.l.b16 %v283
    %v685 = vunpack.c.h.b16 %v283
    %v686 = vunpack.c.l.b16 %v284
    %v687 = vunpack.c.h.b16 %v284
    %v688 = vunpack.c.l.b16 %v285
    %v689 = vunpack.c.h.b16 %v285
    %v690 = vunpack.c.l.b16 %v286
    %v691 = vunpack.c.h.b16 %v286
    %v692 = vunpack.c.l.b16 %v287
    %v693 = vunpack.c.h.b16 %v287
    %v694 = vunpack.c.l.b16 %v288
    %v695 = vunpack.c.h.b16 %v288
    %v696 = vunpack.c.l.b16 %v289
    %v697 = vunpack.c.h.b16 %v289
    %v698 = vunpack.c.l.b16 %v290
    %v699 = vunpack.c.h.b16 %v290
    %v700 = vunpack.c.l.b16 %v291
    %v701 = vunpack.c.h.b16 %v291
    %v702 = vunpack.c.l.b16 %v292
    %v703 = vunpack.c.h.b16 %v292
    %v704 = vunpack.c.l.b16 %v293
    %v705 = vunpack.c.h.b16 %v293
    %v706 = vunpack.c.l.b16 %v294
    %v707 = vunpack.c.h.b16 %v294
    %v708 = vunpack.c.l.b16 %v295
    %v709 = vunpack.c.h.b16 %v295
    %v710 = vunpack.c.l.b16 %v296
    %v711 = vunpack.c.h.b16 %v296
    %v712 = vunpack.c.l.b16 %v297
    %v713 = vunpack.c.h.b16 %v297
    %v714 = vunpack.c.l.b16 %v298
    %v715 = vunpack.c.h.b16 %v298
    %v716 = vunpack.c.l.b16 %v299
    %v717 = vunpack.c.h.b16 %v299
    %v718 = vunpack.c.l.b16 %v300
    %v719 = vunpack.c.h.b16 %v300
    %v720 = vunpack.c.l.b16 %v301
    %v721 = vunpack.c.h.b16 %v301
    %v722 = vunpack.c.l.b16 %v302
    %v723 = vunpack.c.h.b16 %v302
    %v724 = vunpack.c.l.b16 %v303
    %v725 = vunpack.c.h.b16 %v303
    %v726 = vunpack.c.l.b16 %v304
    %v727 = vunpack.c.h.b16 %v304
    %v728 = vunpack.c.l.b16 %v305
    %v729 = vunpack.c.h.b16 %v305
    %v730 = vunpack.c.l.b16 %v306
    %v731 = vunpack.c.h.b16 %v306
    %v732 = vunpack.c.l.b16 %v307
    %v733 = vunpack.c.h.b16 %v307
    %v734 = vpack.c.b16 %v486, %v478
    %v735 = vpack.c.b16 %v487, %v479
    %v736 = vpack.c.b16 %v488, %v480
    %v737 = vpack.c.b16 %v489, %v481
    %v738 = vpack.c.b16 %v490, %v482
    %v739 = vpack.c.b16 %v491, %v483
    %v740 = vpack.c.b16 %v492, %v484
    %v741 = vpack.c.b16 %v493, %v485
    %v742 = vpack.c.b16 %v502, %v494
    %v743 = vpack.c.b16 %v503, %v495
    %v744 = vpack.c.b16 %v504, %v496
    %v745 = vpack.c.b16 %v505, %v497
    %v746 = vpack.c.b16 %v506, %v498
    %v747 = vpack.c.b16 %v507, %v499
    %v748 = vpack.c.b16 %v508, %v500
    %v749 = vpack.c.b16 %v509, %v501
    %v750 = vpack.c.b16 %v518, %v510
    %v751 = vpack.c.b16 %v519, %v511
    %v752 = vpack.c.b16 %v520, %v512
    %v753 = vpack.c.b16 %v521, %v513
    %v754 = vpack.c.b16 %v522, %v514
    %v755 = vpack.c.b16 %v523, %v515
    %v756 = vpack.c.b16 %v524, %v516
    %v757 = vpack.c.b16 %v525, %v517
    %v758 = vpack.c.b16 %v534, %v526
    %v759 = vpack.c.b16 %v535, %v527
    %v760 = vpack.c.b16 %v536, %v528
    %v761 = vpack.c.b16 %v537, %v529
    %v762 = vpack.c.b16 %v538, %v530
    %v763 = vpack.c.b16 %v539, %v531
    %v764 = vpack.c.b16 %v540, %v532
    %v765 = vpack.c.b16 %v541, %v533
    %v766 = vpack.c.b16 %v550, %v542
    %v767 = vpack.c.b16 %v551, %v543
    %v768 = vpack.c.b16 %v552, %v544
    %v769 = vpack.c.b16 %v553, %v545
    %v770 = vpack.c.b16 %v554, %v546
    %v771 = vpack.c.b16 %v555, %v547
    %v772 = vpack.c.b16 %v556, %v548
    %v773 = vpack.c.b16 %v557, %v549
    %v774 = vpack.c.b16 %v566, %v558
    %v775 = vpack.c.b16 %v567, %v559
    %v776 = vpack.c.b16 %v568, %v560
    %v777 = vpack.c.b16 %v569, %v561
    %v778 = vpack.c.b16 %v570, %v562
    %v779 = vpack.c.b16 %v571, %v563
    %v780 = vpack.c.b16 %v572, %v564
    %v781 = vpack.c.b16 %v573, %v565
    %v782 = vpack.c.b16 %v582, %v574
    %v783 = vpack.c.b16 %v583, %v575
    %v784 = vpack.c.b16 %v584, %v576
    %v785 = vpack.c.b16 %v585, %v577
    %v786 = vpack.c.b16 %v586, %v578
    %v787 = vpack.c.b16 %v587, %v579
    %v788 = vpack.c.b16 %v588, %v580
    %v789 = vpack.c.b16 %v589, %v581
    %v790 = vpack.c.b16 %v598, %v590
    %v791 = vpack.c.b16 %v599, %v591
    %v792 = vpack.c.b16 %v600, %v592
    %v793 = vpack.c.b16 %v601, %v593
    %v794 = vpack.c.b16 %v602, %v594
    %v795 = vpack.c.b16 %v603, %v595
    %v796 = vpack.c.b16 %v604, %v596
    %v797 = vpack.c.b16 %v605, %v597
    %v798 = vpack.c.b16 %v614, %v606
    %v799 = vpack.c.b16 %v615, %v607
    %v800 = vpack.c.b16 %v616, %v608
    %v801 = vpack.c.b16 %v617, %v609
    %v802 = vpack.c.b16 %v618, %v610
    %v803 = vpack.c.b16 %v619, %v611
    %v804 = vpack.c.b16 %v620, %v612
    %v805 = vpack.c.b16 %v621, %v613
    %v806 = vpack.c.b16 %v630, %v622
    %v807 = vpack.c.b16 %v631, %v623
    %v808 = vpack.c.b16 %v632, %v624
    %v809 = vpack.c.b16 %v633, %v625
    %v810 = vpack.c.b16 %v634, %v626
    %v811 = vpack.c.b16 %v635, %v627
    %v812 = vpack.c.b16 %v636, %v628
    %v813 = vpack.c.b16 %v637, %v629
    %v814 = vpack.c.b16 %v646, %v638
    %v815 = vpack.c.b16 %v647, %v639
    %v816 = vpack.c.b16 %v648, %v640
    %v817 = vpack.c.b16 %v649, %v641
    %v818 = vpack.c.b16 %v650, %v642
    %v819 = vpack.c.b16 %v651, %v643
    %v820 = vpack.c.b16 %v652, %v644
    %v821 = vpack.c.b16 %v653, %v645
    %v822 = vpack.c.b16 %v662, %v654
    %v823 = vpack.c.b16 %v663, %v655
    %v824 = vpack.c.b16 %v664, %v656
    %v825 = vpack.c.b16 %v665, %v657
    %v826 = vpack.c.b16 %v666, %v658
    %v827 = vpack.c.b16 %v667, %v659
    %v828 = vpack.c.b16 %v668, %v660
    %v829 = vpack.c.b16 %v669, %v661
    %v830 = vpack.c.b16 %v678, %v670
    %v831 = vpack.c.b16 %v679, %v671
    %v832 = vpack.c.b16 %v680, %v672
    %v833 = vpack.c.b16 %v681, %v673
    %v834 = vpack.c.b16 %v682, %v674
    %v835 = vpack.c.b16 %v683, %v675
    %v836 = vpack.c.b16 %v684, %v676
    %v837 = vpack.c.b16 %v685, %v677
    %v838 = vpack.c.b16 %v694, %v686
    %v839 = vpack.c.b16 %v695, %v687
    %v840 = vpack.c.b16 %v696, %v688
    %v841 = vpack.c.b16 %v697, %v689
    %v842 = vpack.c.b16 %v698, %v690
    %v843 = vpack.c.b16 %v699, %v691
    %v844 = vpack.c.b16 %v700, %v692
    %v845 = vpack.c.b16 %v701, %v693
    %v846 = vpack.c.b16 %v710, %v702
    %v847 = vpack.c.b16 %v711, %v703
    %v848 = vpack.c.b16 %v712, %v704
    %v849 = vpack.c.b16 %v713, %v705
    %v850 = vpack.c.b16 %v714, %v706
    %v851 = vpack.c.b16 %v715, %v707
    %v852 = vpack.c.b16 %v716, %v708
    %v853 = vpack.c.b16 %v717, %v709
    %v854 = vpack.c.b16 %v726, %v718
    %v855 = vpack.c.b16 %v727, %v719
    %v856 = vpack.c.b16 %v728, %v720
    %v857 = vpack.c.b16 %v729, %v721
    %v858 = vpack.c.b16 %v730, %v722
    %v859 = vpack.c.b16 %v731, %v723
    %v860 = vpack.c.b16 %v732, %v724
    %v861 = vpack.c.b16 %v733, %v725
    %990 = vmatprep.subr.bf16.mxu0 %v791
    %991 = vmatpush1.bf16.msra.mxu0 %v790
    %992 = vmatprep.subr.bf16.mxu0 %v783
    %993 = vmatpush1.bf16.msra.mxu0 %v782
    %994 = vmatprep.subr.bf16.mxu0 %v775
    %995 = vmatpush1.bf16.msra.mxu0 %v774
    %996 = vmatprep.subr.bf16.mxu0 %v767
    %997 = vmatpush1.bf16.msra.mxu0 %v766
    %998 = vmatprep.subr.bf16.mxu0 %v759
    %999 = vmatpush1.bf16.msra.mxu0 %v758
    %1000 = vmatprep.subr.bf16.mxu0 %v751
    %1001 = vmatpush1.bf16.msra.mxu0 %v750
    %1002 = vmatprep.subr.bf16.mxu0 %v743
    %1003 = vmatpush1.bf16.msra.mxu0 %v742
    %1004 = vmatprep.subr.bf16.mxu0 %v735
    %1005 = vmatpush1.bf16.msra.mxu0 %v734
    %1006 = vmatprep.subr.bf16.mxu0 %v855
    %1007 = vmatpush2.bf16.msra.mxu0 %v854
    %1008 = vmatprep.subr.bf16.mxu0 %v847
    %1009 = vmatpush2.bf16.msra.mxu0 %v846
    %1010 = vmatprep.subr.bf16.mxu0 %v839
    %1011 = vmatpush2.bf16.msra.mxu0 %v838
    %1012 = vmatprep.subr.bf16.mxu0 %v831
    %1013 = vmatpush2.bf16.msra.mxu0 %v830
    %1014 = vmatprep.subr.bf16.mxu0 %v823
    %1015 = vmatpush2.bf16.msra.mxu0 %v822
    %1016 = vmatprep.subr.bf16.mxu0 %v815
    %1017 = vmatpush2.bf16.msra.mxu0 %v814
    %1018 = vmatprep.subr.bf16.mxu0 %v807
    %1019 = vmatpush2.bf16.msra.mxu0 %v806
    %1020 = vmatprep.subr.bf16.mxu0 %v799
    %1021 = vmatpush2.bf16.msra.mxu0 %v798
    %1022 = vmatprep.mubr.bf16.mxu0 %v179
    %1023 = vmatmul.mubr.bf16.gmra.mxu0 %v178
    %v1024 = vpop.f32.mrf.mxu0
    %v1025 = vadd.f32 %v313, %v1024
    %v1026 = vpop.f32.mrf.mxu0
    %v1027 = vadd.f32 %v317, %v1026
    %v1028 = vpop.f32.mrf.mxu0
    %v1029 = vpop.f32.mrf.mxu0
    %1030 = vdwg.mxu0
    %1031 = vmatprep.subr.bf16.mxu0 %v793
    %1032 = vmatpush1.bf16.msra.mxu0 %v792
    %1033 = vmatprep.subr.bf16.mxu0 %v785
    %1034 = vmatpush1.bf16.msra.mxu0 %v784
    %1035 = vmatprep.subr.bf16.mxu0 %v777
    %1036 = vmatpush1.bf16.msra.mxu0 %v776
    %1037 = vmatprep.subr.bf16.mxu0 %v769
    %1038 = vmatpush1.bf16.msra.mxu0 %v768
    %1039 = vmatprep.subr.bf16.mxu0 %v761
    %1040 = vmatpush1.bf16.msra.mxu0 %v760
    %1041 = vmatprep.subr.bf16.mxu0 %v753
    %1042 = vmatpush1.bf16.msra.mxu0 %v752
    %1043 = vmatprep.subr.bf16.mxu0 %v745
    %1044 = vmatpush1.bf16.msra.mxu0 %v744
    %1045 = vmatprep.subr.bf16.mxu0 %v737
    %1046 = vmatpush1.bf16.msra.mxu0 %v736
    %1047 = vmatprep.subr.bf16.mxu0 %v857
    %1048 = vmatpush2.bf16.msra.mxu0 %v856
    %1049 = vmatprep.subr.bf16.mxu0 %v849
    %1050 = vmatpush2.bf16.msra.mxu0 %v848
    %1051 = vmatprep.subr.bf16.mxu0 %v841
    %1052 = vmatpush2.bf16.msra.mxu0 %v840
    %1053 = vmatprep.subr.bf16.mxu0 %v833
    %1054 = vmatpush2.bf16.msra.mxu0 %v832
    %1055 = vmatprep.subr.bf16.mxu0 %v825
    %1056 = vmatpush2.bf16.msra.mxu0 %v824
    %1057 = vmatprep.subr.bf16.mxu0 %v817
    %1058 = vmatpush2.bf16.msra.mxu0 %v816
    %1059 = vmatprep.subr.bf16.mxu0 %v809
    %1060 = vmatpush2.bf16.msra.mxu0 %v808
    %1061 = vmatprep.subr.bf16.mxu0 %v801
    %1062 = vmatpush2.bf16.msra.mxu0 %v800
    %1063 = vmatprep.mubr.bf16.mxu0 %v179
    %1064 = vmatmul.mubr.bf16.gmra.mxu0 %v178
    %v1065 = vpop.f32.mrf.mxu0
    %v1066 = vadd.f32 %v321, %v1065
    %v1067 = vpop.f32.mrf.mxu0
    %v1068 = vadd.f32 %v325, %v1067
    %v1069 = vpop.f32.mrf.mxu0
    %v1070 = vpop.f32.mrf.mxu0
    %1071 = vdwg.mxu0
    %1072 = vmatprep.subr.bf16.mxu0 %v795
    %1073 = vmatpush1.bf16.msra.mxu0 %v794
    %1074 = vmatprep.subr.bf16.mxu0 %v787
    %1075 = vmatpush1.bf16.msra.mxu0 %v786
    %1076 = vmatprep.subr.bf16.mxu0 %v779
    %1077 = vmatpush1.bf16.msra.mxu0 %v778
    %1078 = vmatprep.subr.bf16.mxu0 %v771
    %1079 = vmatpush1.bf16.msra.mxu0 %v770
    %1080 = vmatprep.subr.bf16.mxu0 %v763
    %1081 = vmatpush1.bf16.msra.mxu0 %v762
    %1082 = vmatprep.subr.bf16.mxu0 %v755
    %1083 = vmatpush1.bf16.msra.mxu0 %v754
    %1084 = vmatprep.subr.bf16.mxu0 %v747
    %1085 = vmatpush1.bf16.msra.mxu0 %v746
    %1086 = vmatprep.subr.bf16.mxu0 %v739
    %1087 = vmatpush1.bf16.msra.mxu0 %v738
    %1088 = vmatprep.subr.bf16.mxu0 %v859
    %1089 = vmatpush2.bf16.msra.mxu0 %v858
    %1090 = vmatprep.subr.bf16.mxu0 %v851
    %1091 = vmatpush2.bf16.msra.mxu0 %v850
    %1092 = vmatprep.subr.bf16.mxu0 %v843
    %1093 = vmatpush2.bf16.msra.mxu0 %v842
    %1094 = vmatprep.subr.bf16.mxu0 %v835
    %1095 = vmatpush2.bf16.msra.mxu0 %v834
    %1096 = vmatprep.subr.bf16.mxu0 %v827
    %1097 = vmatpush2.bf16.msra.mxu0 %v826
    %1098 = vmatprep.subr.bf16.mxu0 %v819
    %1099 = vmatpush2.bf16.msra.mxu0 %v818
    %1100 = vmatprep.subr.bf16.mxu0 %v811
    %1101 = vmatpush2.bf16.msra.mxu0 %v810
    %1102 = vmatprep.subr.bf16.mxu0 %v803
    %1103 = vmatpush2.bf16.msra.mxu0 %v802
    %1104 = vmatprep.mubr.bf16.mxu0 %v179
    %1105 = vmatmul.mubr.bf16.gmra.mxu0 %v178
    %v1106 = vpop.f32.mrf.mxu0
    %v1107 = vadd.f32 %v329, %v1106
    %v1108 = vpop.f32.mrf.mxu0
    %v1109 = vadd.f32 %v333, %v1108
    %v1110 = vpop.f32.mrf.mxu0
    %v1111 = vpop.f32.mrf.mxu0
    %1112 = vdwg.mxu0
    %1113 = vmatprep.subr.bf16.mxu0 %v797
    %1114 = vmatpush1.bf16.msra.mxu0 %v796
    %1115 = vmatprep.subr.bf16.mxu0 %v789
    %1116 = vmatpush1.bf16.msra.mxu0 %v788
    %1117 = vmatprep.subr.bf16.mxu0 %v781
    %1118 = vmatpush1.bf16.msra.mxu0 %v780
    %1119 = vmatprep.subr.bf16.mxu0 %v773
    %1120 = vmatpush1.bf16.msra.mxu0 %v772
    %1121 = vmatprep.subr.bf16.mxu0 %v765
    %1122 = vmatpush1.bf16.msra.mxu0 %v764
    %1123 = vmatprep.subr.bf16.mxu0 %v757
    %1124 = vmatpush1.bf16.msra.mxu0 %v756
    %1125 = vmatprep.subr.bf16.mxu0 %v749
    %1126 = vmatpush1.bf16.msra.mxu0 %v748
    %1127 = vmatprep.subr.bf16.mxu0 %v741
    %1128 = vmatpush1.bf16.msra.mxu0 %v740
    %1129 = vmatprep.subr.bf16.mxu0 %v861
    %1130 = vmatpush2.bf16.msra.mxu0 %v860
    %1131 = vmatprep.subr.bf16.mxu0 %v853
    %1132 = vmatpush2.bf16.msra.mxu0 %v852
    %1133 = vmatprep.subr.bf16.mxu0 %v845
    %1134 = vmatpush2.bf16.msra.mxu0 %v844
    %1135 = vmatprep.subr.bf16.mxu0 %v837
    %1136 = vmatpush2.bf16.msra.mxu0 %v836
    %1137 = vmatprep.subr.bf16.mxu0 %v829
    %1138 = vmatpush2.bf16.msra.mxu0 %v828
    %1139 = vmatprep.subr.bf16.mxu0 %v821
    %1140 = vmatpush2.bf16.msra.mxu0 %v820
    %1141 = vmatprep.subr.bf16.mxu0 %v813
    %1142 = vmatpush2.bf16.msra.mxu0 %v812
    %1143 = vmatprep.subr.bf16.mxu0 %v805
    %1144 = vmatpush2.bf16.msra.mxu0 %v804
    %1145 = vmatprep.mubr.bf16.mxu0 %v179
    %1146 = vmatmul.mubr.bf16.gmra.mxu0 %v178
    %v1147 = vpop.f32.mrf.mxu0
    %v1148 = vadd.f32 %v337, %v1147
    %v1149 = vpop.f32.mrf.mxu0
    %v1150 = vadd.f32 %v341, %v1149
    %v1151 = vpop.f32.mrf.mxu0
    %v1152 = vpop.f32.mrf.mxu0
    %1153 = vdwg.mxu0
    %v1154 = vmax.f32 %v1025, 0.0
    %v1155 = vmax.f32 %v1027, 0.0
    %v1156 = vmax.f32 %v1066, 0.0
    %v1157 = vmax.f32 %v1068, 0.0
    %v1158 = vmax.f32 %v1107, 0.0
    %v1159 = vmax.f32 %v1109, 0.0
    %v1160 = vmax.f32 %v1148, 0.0
    %v1161 = vmax.f32 %v1150, 0.0
    %v1162 = vpack.c.bf16 %v1154, %v1154
    %v1163 = vpack.c.bf16 %v1155, %v1155
    %v1164 = vpack.c.bf16 %v1156, %v1156
    %v1165 = vpack.c.bf16 %v1157, %v1157
    %v1166 = vpack.c.bf16 %v1158, %v1158
    %v1167 = vpack.c.bf16 %v1159, %v1159
    %v1168 = vpack.c.bf16 %v1160, %v1160
    %v1169 = vpack.c.bf16 %v1161, %v1161
    %v1170 = vld [vmem:[#allocation4] sm:$0xff]
    %v1171 = vld [vmem:[#allocation4 + $0x8] sm:$0xff]
    %v1172 = vld [vmem:[#allocation4 + $0x10] sm:$0xff]
    %v1173 = vld [vmem:[#allocation4 + $0x18] sm:$0xff]
    %v1174 = vld [vmem:[#allocation4 + $0x20] sm:$0xff]
    %v1175 = vld [vmem:[#allocation4 + $0x28] sm:$0xff]
    %v1176 = vld [vmem:[#allocation4 + $0x30] sm:$0xff]
    %v1177 = vld [vmem:[#allocation4 + $0x38] sm:$0xff]
    %v1178 = vld [vmem:[#allocation4 + $0x40] sm:$0xff]
    %v1179 = vld [vmem:[#allocation4 + $0x48] sm:$0xff]
    %v1180 = vld [vmem:[#allocation4 + $0x50] sm:$0xff]
    %v1181 = vld [vmem:[#allocation4 + $0x58] sm:$0xff]
    %v1182 = vld [vmem:[#allocation4 + $0x60] sm:$0xff]
    %v1183 = vld [vmem:[#allocation4 + $0x68] sm:$0xff]
    %v1184 = vld [vmem:[#allocation4 + $0x70] sm:$0xff]
    %v1185 = vld [vmem:[#allocation4 + $0x78] sm:$0xff]
    %v1186 = vld [vmem:[#allocation4 + $0x80] sm:$0xff]
    %v1187 = vld [vmem:[#allocation4 + $0x88] sm:$0xff]
    %v1188 = vld [vmem:[#allocation4 + $0x90] sm:$0xff]
    %v1189 = vld [vmem:[#allocation4 + $0x98] sm:$0xff]
    %v1190 = vld [vmem:[#allocation4 + $0xa0] sm:$0xff]
    %v1191 = vld [vmem:[#allocation4 + $0xa8] sm:$0xff]
    %v1192 = vld [vmem:[#allocation4 + $0xb0] sm:$0xff]
    %v1193 = vld [vmem:[#allocation4 + $0xb8] sm:$0xff]
    %v1194 = vld [vmem:[#allocation4 + $0xc0] sm:$0xff]
    %v1195 = vld [vmem:[#allocation4 + $0xc8] sm:$0xff]
    %v1196 = vld [vmem:[#allocation4 + $0xd0] sm:$0xff]
    %v1197 = vld [vmem:[#allocation4 + $0xd8] sm:$0xff]
    %v1198 = vld [vmem:[#allocation4 + $0xe0] sm:$0xff]
    %v1199 = vld [vmem:[#allocation4 + $0xe8] sm:$0xff]
    %v1200 = vld [vmem:[#allocation4 + $0xf0] sm:$0xff]
    %v1201 = vld [vmem:[#allocation4 + $0xf8] sm:$0xff]
    %v1202 = vld [vmem:[#allocation4 + $0x100] sm:$0xff]
    %v1203 = vld [vmem:[#allocation4 + $0x108] sm:$0xff]
    %v1204 = vld [vmem:[#allocation4 + $0x110] sm:$0xff]
    %v1205 = vld [vmem:[#allocation4 + $0x118] sm:$0xff]
    %v1206 = vld [vmem:[#allocation4 + $0x120] sm:$0xff]
    %v1207 = vld [vmem:[#allocation4 + $0x128] sm:$0xff]
    %v1208 = vld [vmem:[#allocation4 + $0x130] sm:$0xff]
    %v1209 = vld [vmem:[#allocation4 + $0x138] sm:$0xff]
    %v1210 = vld [vmem:[#allocation4 + $0x140] sm:$0xff]
    %v1211 = vld [vmem:[#allocation4 + $0x148] sm:$0xff]
    %v1212 = vld [vmem:[#allocation4 + $0x150] sm:$0xff]
    %v1213 = vld [vmem:[#allocation4 + $0x158] sm:$0xff]
    %v1214 = vld [vmem:[#allocation4 + $0x160] sm:$0xff]
    %v1215 = vld [vmem:[#allocation4 + $0x168] sm:$0xff]
    %v1216 = vld [vmem:[#allocation4 + $0x170] sm:$0xff]
    %v1217 = vld [vmem:[#allocation4 + $0x178] sm:$0xff]
    %v1218 = vld [vmem:[#allocation4 + $0x180] sm:$0xff]
    %v1219 = vld [vmem:[#allocation4 + $0x188] sm:$0xff]
    %v1220 = vld [vmem:[#allocation4 + $0x190] sm:$0xff]
    %v1221 = vld [vmem:[#allocation4 + $0x198] sm:$0xff]
    %v1222 = vld [vmem:[#allocation4 + $0x1a0] sm:$0xff]
    %v1223 = vld [vmem:[#allocation4 + $0x1a8] sm:$0xff]
    %v1224 = vld [vmem:[#allocation4 + $0x1b0] sm:$0xff]
    %v1225 = vld [vmem:[#allocation4 + $0x1b8] sm:$0xff]
    %v1226 = vld [vmem:[#allocation4 + $0x1c0] sm:$0xff]
    %v1227 = vld [vmem:[#allocation4 + $0x1c8] sm:$0xff]
    %v1228 = vld [vmem:[#allocation4 + $0x1d0] sm:$0xff]
    %v1229 = vld [vmem:[#allocation4 + $0x1d8] sm:$0xff]
    %v1230 = vld [vmem:[#allocation4 + $0x1e0] sm:$0xff]
    %v1231 = vld [vmem:[#allocation4 + $0x1e8] sm:$0xff]
    %v1232 = vld [vmem:[#allocation4 + $0x1f0] sm:$0xff]
    %v1233 = vld [vmem:[#allocation4 + $0x1f8] sm:$0xff]
    %v1234 = vld [vmem:[#allocation4 + $0x200] sm:$0xff]
    %v1235 = vld [vmem:[#allocation4 + $0x208] sm:$0xff]
    %v1236 = vld [vmem:[#allocation4 + $0x210] sm:$0xff]
    %v1237 = vld [vmem:[#allocation4 + $0x218] sm:$0xff]
    %v1238 = vld [vmem:[#allocation4 + $0x220] sm:$0xff]
    %v1239 = vld [vmem:[#allocation4 + $0x228] sm:$0xff]
    %v1240 = vld [vmem:[#allocation4 + $0x230] sm:$0xff]
    %v1241 = vld [vmem:[#allocation4 + $0x238] sm:$0xff]
    %v1242 = vld [vmem:[#allocation4 + $0x240] sm:$0xff]
    %v1243 = vld [vmem:[#allocation4 + $0x248] sm:$0xff]
    %v1244 = vld [vmem:[#allocation4 + $0x250] sm:$0xff]
    %v1245 = vld [vmem:[#allocation4 + $0x258] sm:$0xff]
    %v1246 = vld [vmem:[#allocation4 + $0x260] sm:$0xff]
    %v1247 = vld [vmem:[#allocation4 + $0x268] sm:$0xff]
    %v1248 = vld [vmem:[#allocation4 + $0x270] sm:$0xff]
    %v1249 = vld [vmem:[#allocation4 + $0x278] sm:$0xff]
    %v1250 = vld [vmem:[#allocation4 + $0x280] sm:$0xff]
    %v1251 = vld [vmem:[#allocation4 + $0x288] sm:$0xff]
    %v1252 = vld [vmem:[#allocation4 + $0x290] sm:$0xff]
    %v1253 = vld [vmem:[#allocation4 + $0x298] sm:$0xff]
    %v1254 = vld [vmem:[#allocation4 + $0x2a0] sm:$0xff]
    %v1255 = vld [vmem:[#allocation4 + $0x2a8] sm:$0xff]
    %v1256 = vld [vmem:[#allocation4 + $0x2b0] sm:$0xff]
    %v1257 = vld [vmem:[#allocation4 + $0x2b8] sm:$0xff]
    %v1258 = vld [vmem:[#allocation4 + $0x2c0] sm:$0xff]
    %v1259 = vld [vmem:[#allocation4 + $0x2c8] sm:$0xff]
    %v1260 = vld [vmem:[#allocation4 + $0x2d0] sm:$0xff]
    %v1261 = vld [vmem:[#allocation4 + $0x2d8] sm:$0xff]
    %v1262 = vld [vmem:[#allocation4 + $0x2e0] sm:$0xff]
    %v1263 = vld [vmem:[#allocation4 + $0x2e8] sm:$0xff]
    %v1264 = vld [vmem:[#allocation4 + $0x2f0] sm:$0xff]
    %v1265 = vld [vmem:[#allocation4 + $0x2f8] sm:$0xff]
    %v1266 = vld [vmem:[#allocation4 + $0x300] sm:$0xff]
    %v1267 = vld [vmem:[#allocation4 + $0x308] sm:$0xff]
    %v1268 = vld [vmem:[#allocation4 + $0x310] sm:$0xff]
    %v1269 = vld [vmem:[#allocation4 + $0x318] sm:$0xff]
    %v1270 = vld [vmem:[#allocation4 + $0x320] sm:$0xff]
    %v1271 = vld [vmem:[#allocation4 + $0x328] sm:$0xff]
    %v1272 = vld [vmem:[#allocation4 + $0x330] sm:$0xff]
    %v1273 = vld [vmem:[#allocation4 + $0x338] sm:$0xff]
    %v1274 = vld [vmem:[#allocation4 + $0x340] sm:$0xff]
    %v1275 = vld [vmem:[#allocation4 + $0x348] sm:$0xff]
    %v1276 = vld [vmem:[#allocation4 + $0x350] sm:$0xff]
    %v1277 = vld [vmem:[#allocation4 + $0x358] sm:$0xff]
    %v1278 = vld [vmem:[#allocation4 + $0x360] sm:$0xff]
    %v1279 = vld [vmem:[#allocation4 + $0x368] sm:$0xff]
    %v1280 = vld [vmem:[#allocation4 + $0x370] sm:$0xff]
    %v1281 = vld [vmem:[#allocation4 + $0x378] sm:$0xff]
    %v1282 = vld [vmem:[#allocation4 + $0x380] sm:$0xff]
    %v1283 = vld [vmem:[#allocation4 + $0x388] sm:$0xff]
    %v1284 = vld [vmem:[#allocation4 + $0x390] sm:$0xff]
    %v1285 = vld [vmem:[#allocation4 + $0x398] sm:$0xff]
    %v1286 = vld [vmem:[#allocation4 + $0x3a0] sm:$0xff]
    %v1287 = vld [vmem:[#allocation4 + $0x3a8] sm:$0xff]
    %v1288 = vld [vmem:[#allocation4 + $0x3b0] sm:$0xff]
    %v1289 = vld [vmem:[#allocation4 + $0x3b8] sm:$0xff]
    %v1290 = vld [vmem:[#allocation4 + $0x3c0] sm:$0xff]
    %v1291 = vld [vmem:[#allocation4 + $0x3c8] sm:$0xff]
    %v1292 = vld [vmem:[#allocation4 + $0x3d0] sm:$0xff]
    %v1293 = vld [vmem:[#allocation4 + $0x3d8] sm:$0xff]
    %v1294 = vld [vmem:[#allocation4 + $0x3e0] sm:$0xff]
    %v1295 = vld [vmem:[#allocation4 + $0x3e8] sm:$0xff]
    %v1296 = vld [vmem:[#allocation4 + $0x3f0] sm:$0xff]
    %v1297 = vld [vmem:[#allocation4 + $0x3f8] sm:$0xff]
    %v1298 = vld [vmem:[#allocation4 + $0x400] sm:$0xff]
    %v1299 = vld [vmem:[#allocation4 + $0x408] sm:$0xff]
    %v1300 = vld [vmem:[#allocation4 + $0x410] sm:$0xff]
    %v1301 = vld [vmem:[#allocation4 + $0x418] sm:$0xff]
    %v1302 = vld [vmem:[#allocation4 + $0x420] sm:$0xff]
    %v1303 = vld [vmem:[#allocation4 + $0x428] sm:$0xff]
    %v1304 = vld [vmem:[#allocation4 + $0x430] sm:$0xff]
    %v1305 = vld [vmem:[#allocation4 + $0x438] sm:$0xff]
    %v1306 = vld [vmem:[#allocation4 + $0x440] sm:$0xff]
    %v1307 = vld [vmem:[#allocation4 + $0x448] sm:$0xff]
    %v1308 = vld [vmem:[#allocation4 + $0x450] sm:$0xff]
    %v1309 = vld [vmem:[#allocation4 + $0x458] sm:$0xff]
    %v1310 = vld [vmem:[#allocation4 + $0x460] sm:$0xff]
    %v1311 = vld [vmem:[#allocation4 + $0x468] sm:$0xff]
    %v1312 = vld [vmem:[#allocation4 + $0x470] sm:$0xff]
    %v1313 = vld [vmem:[#allocation4 + $0x478] sm:$0xff]
    %v1314 = vld [vmem:[#allocation4 + $0x480] sm:$0xff]
    %v1315 = vld [vmem:[#allocation4 + $0x488] sm:$0xff]
    %v1316 = vld [vmem:[#allocation4 + $0x490] sm:$0xff]
    %v1317 = vld [vmem:[#allocation4 + $0x498] sm:$0xff]
    %v1318 = vld [vmem:[#allocation4 + $0x4a0] sm:$0xff]
    %v1319 = vld [vmem:[#allocation4 + $0x4a8] sm:$0xff]
    %v1320 = vld [vmem:[#allocation4 + $0x4b0] sm:$0xff]
    %v1321 = vld [vmem:[#allocation4 + $0x4b8] sm:$0xff]
    %v1322 = vld [vmem:[#allocation4 + $0x4c0] sm:$0xff]
    %v1323 = vld [vmem:[#allocation4 + $0x4c8] sm:$0xff]
    %v1324 = vld [vmem:[#allocation4 + $0x4d0] sm:$0xff]
    %v1325 = vld [vmem:[#allocation4 + $0x4d8] sm:$0xff]
    %v1326 = vld [vmem:[#allocation4 + $0x4e0] sm:$0xff]
    %v1327 = vld [vmem:[#allocation4 + $0x4e8] sm:$0xff]
    %v1328 = vld [vmem:[#allocation4 + $0x4f0] sm:$0xff]
    %v1329 = vld [vmem:[#allocation4 + $0x4f8] sm:$0xff]
    %v1330 = vld [vmem:[#allocation4 + $0x500] sm:$0xff]
    %v1331 = vld [vmem:[#allocation4 + $0x508] sm:$0xff]
    %v1332 = vld [vmem:[#allocation4 + $0x510] sm:$0xff]
    %v1333 = vld [vmem:[#allocation4 + $0x518] sm:$0xff]
    %v1334 = vld [vmem:[#allocation4 + $0x520] sm:$0xff]
    %v1335 = vld [vmem:[#allocation4 + $0x528] sm:$0xff]
    %v1336 = vld [vmem:[#allocation4 + $0x530] sm:$0xff]
    %v1337 = vld [vmem:[#allocation4 + $0x538] sm:$0xff]
    %v1338 = vld [vmem:[#allocation4 + $0x540] sm:$0xff]
    %v1339 = vld [vmem:[#allocation4 + $0x548] sm:$0xff]
    %v1340 = vld [vmem:[#allocation4 + $0x550] sm:$0xff]
    %v1341 = vld [vmem:[#allocation4 + $0x558] sm:$0xff]
    %v1342 = vld [vmem:[#allocation4 + $0x560] sm:$0xff]
    %v1343 = vld [vmem:[#allocation4 + $0x568] sm:$0xff]
    %v1344 = vld [vmem:[#allocation4 + $0x570] sm:$0xff]
    %v1345 = vld [vmem:[#allocation4 + $0x578] sm:$0xff]
    %v1346 = vld [vmem:[#allocation4 + $0x580] sm:$0xff]
    %v1347 = vld [vmem:[#allocation4 + $0x588] sm:$0xff]
    %v1348 = vld [vmem:[#allocation4 + $0x590] sm:$0xff]
    %v1349 = vld [vmem:[#allocation4 + $0x598] sm:$0xff]
    %v1350 = vld [vmem:[#allocation4 + $0x5a0] sm:$0xff]
    %v1351 = vld [vmem:[#allocation4 + $0x5a8] sm:$0xff]
    %v1352 = vld [vmem:[#allocation4 + $0x5b0] sm:$0xff]
    %v1353 = vld [vmem:[#allocation4 + $0x5b8] sm:$0xff]
    %v1354 = vld [vmem:[#allocation4 + $0x5c0] sm:$0xff]
    %v1355 = vld [vmem:[#allocation4 + $0x5c8] sm:$0xff]
    %v1356 = vld [vmem:[#allocation4 + $0x5d0] sm:$0xff]
    %v1357 = vld [vmem:[#allocation4 + $0x5d8] sm:$0xff]
    %v1358 = vld [vmem:[#allocation4 + $0x5e0] sm:$0xff]
    %v1359 = vld [vmem:[#allocation4 + $0x5e8] sm:$0xff]
    %v1360 = vld [vmem:[#allocation4 + $0x5f0] sm:$0xff]
    %v1361 = vld [vmem:[#allocation4 + $0x5f8] sm:$0xff]
    %v1362 = vld [vmem:[#allocation4 + $0x600] sm:$0xff]
    %v1363 = vld [vmem:[#allocation4 + $0x608] sm:$0xff]
    %v1364 = vld [vmem:[#allocation4 + $0x610] sm:$0xff]
    %v1365 = vld [vmem:[#allocation4 + $0x618] sm:$0xff]
    %v1366 = vld [vmem:[#allocation4 + $0x620] sm:$0xff]
    %v1367 = vld [vmem:[#allocation4 + $0x628] sm:$0xff]
    %v1368 = vld [vmem:[#allocation4 + $0x630] sm:$0xff]
    %v1369 = vld [vmem:[#allocation4 + $0x638] sm:$0xff]
    %v1370 = vld [vmem:[#allocation4 + $0x640] sm:$0xff]
    %v1371 = vld [vmem:[#allocation4 + $0x648] sm:$0xff]
    %v1372 = vld [vmem:[#allocation4 + $0x650] sm:$0xff]
    %v1373 = vld [vmem:[#allocation4 + $0x658] sm:$0xff]
    %v1374 = vld [vmem:[#allocation4 + $0x660] sm:$0xff]
    %v1375 = vld [vmem:[#allocation4 + $0x668] sm:$0xff]
    %v1376 = vld [vmem:[#allocation4 + $0x670] sm:$0xff]
    %v1377 = vld [vmem:[#allocation4 + $0x678] sm:$0xff]
    %v1378 = vld [vmem:[#allocation4 + $0x680] sm:$0xff]
    %v1379 = vld [vmem:[#allocation4 + $0x688] sm:$0xff]
    %v1380 = vld [vmem:[#allocation4 + $0x690] sm:$0xff]
    %v1381 = vld [vmem:[#allocation4 + $0x698] sm:$0xff]
    %v1382 = vld [vmem:[#allocation4 + $0x6a0] sm:$0xff]
    %v1383 = vld [vmem:[#allocation4 + $0x6a8] sm:$0xff]
    %v1384 = vld [vmem:[#allocation4 + $0x6b0] sm:$0xff]
    %v1385 = vld [vmem:[#allocation4 + $0x6b8] sm:$0xff]
    %v1386 = vld [vmem:[#allocation4 + $0x6c0] sm:$0xff]
    %v1387 = vld [vmem:[#allocation4 + $0x6c8] sm:$0xff]
    %v1388 = vld [vmem:[#allocation4 + $0x6d0] sm:$0xff]
    %v1389 = vld [vmem:[#allocation4 + $0x6d8] sm:$0xff]
    %v1390 = vld [vmem:[#allocation4 + $0x6e0] sm:$0xff]
    %v1391 = vld [vmem:[#allocation4 + $0x6e8] sm:$0xff]
    %v1392 = vld [vmem:[#allocation4 + $0x6f0] sm:$0xff]
    %v1393 = vld [vmem:[#allocation4 + $0x6f8] sm:$0xff]
    %v1394 = vld [vmem:[#allocation4 + $0x700] sm:$0xff]
    %v1395 = vld [vmem:[#allocation4 + $0x708] sm:$0xff]
    %v1396 = vld [vmem:[#allocation4 + $0x710] sm:$0xff]
    %v1397 = vld [vmem:[#allocation4 + $0x718] sm:$0xff]
    %v1398 = vld [vmem:[#allocation4 + $0x720] sm:$0xff]
    %v1399 = vld [vmem:[#allocation4 + $0x728] sm:$0xff]
    %v1400 = vld [vmem:[#allocation4 + $0x730] sm:$0xff]
    %v1401 = vld [vmem:[#allocation4 + $0x738] sm:$0xff]
    %v1402 = vld [vmem:[#allocation4 + $0x740] sm:$0xff]
    %v1403 = vld [vmem:[#allocation4 + $0x748] sm:$0xff]
    %v1404 = vld [vmem:[#allocation4 + $0x750] sm:$0xff]
    %v1405 = vld [vmem:[#allocation4 + $0x758] sm:$0xff]
    %v1406 = vld [vmem:[#allocation4 + $0x760] sm:$0xff]
    %v1407 = vld [vmem:[#allocation4 + $0x768] sm:$0xff]
    %v1408 = vld [vmem:[#allocation4 + $0x770] sm:$0xff]
    %v1409 = vld [vmem:[#allocation4 + $0x778] sm:$0xff]
    %v1410 = vld [vmem:[#allocation4 + $0x780] sm:$0xff]
    %v1411 = vld [vmem:[#allocation4 + $0x788] sm:$0xff]
    %v1412 = vld [vmem:[#allocation4 + $0x790] sm:$0xff]
    %v1413 = vld [vmem:[#allocation4 + $0x798] sm:$0xff]
    %v1414 = vld [vmem:[#allocation4 + $0x7a0] sm:$0xff]
    %v1415 = vld [vmem:[#allocation4 + $0x7a8] sm:$0xff]
    %v1416 = vld [vmem:[#allocation4 + $0x7b0] sm:$0xff]
    %v1417 = vld [vmem:[#allocation4 + $0x7b8] sm:$0xff]
    %v1418 = vld [vmem:[#allocation4 + $0x7c0] sm:$0xff]
    %v1419 = vld [vmem:[#allocation4 + $0x7c8] sm:$0xff]
    %v1420 = vld [vmem:[#allocation4 + $0x7d0] sm:$0xff]
    %v1421 = vld [vmem:[#allocation4 + $0x7d8] sm:$0xff]
    %v1422 = vld [vmem:[#allocation4 + $0x7e0] sm:$0xff]
    %v1423 = vld [vmem:[#allocation4 + $0x7e8] sm:$0xff]
    %v1424 = vld [vmem:[#allocation4 + $0x7f0] sm:$0xff]
    %v1425 = vld [vmem:[#allocation4 + $0x7f8] sm:$0xff]
    %v1426 = vld [vmem:[%s4] sm:$0xf]
    %v1428 = vlaneseq
    %v1429 = vshrl.u32 %v1428, 7
    %v1430 = vsub.s32 0, %v1429
    %v1431 = vrot.slane %v1426, %v1430
    %v1432 = vlaneseq
    %v1433 = vshrl.u32 %v1432, 7
    %v1434 = vsub.s32 1, %v1433
    %v1435 = vrot.slane %v1426, %v1434
    %v1436 = vlaneseq
    %v1437 = vshrl.u32 %v1436, 7
    %v1438 = vsub.s32 2, %v1437
    %v1439 = vrot.slane %v1426, %v1438
    %v1440 = vlaneseq
    %v1441 = vshrl.u32 %v1440, 7
    %v1442 = vsub.s32 3, %v1441
    %v1443 = vrot.slane %v1426, %v1442
    %v1704 = vunpack.c.l.b16 %v1170
    %v1705 = vunpack.c.h.b16 %v1170
    %v1706 = vunpack.c.l.b16 %v1171
    %v1707 = vunpack.c.h.b16 %v1171
    %v1708 = vunpack.c.l.b16 %v1172
    %v1709 = vunpack.c.h.b16 %v1172
    %v1710 = vunpack.c.l.b16 %v1173
    %v1711 = vunpack.c.h.b16 %v1173
    %v1712 = vunpack.c.l.b16 %v1174
    %v1713 = vunpack.c.h.b16 %v1174
    %v1714 = vunpack.c.l.b16 %v1175
    %v1715 = vunpack.c.h.b16 %v1175
    %v1716 = vunpack.c.l.b16 %v1176
    %v1717 = vunpack.c.h.b16 %v1176
    %v1718 = vunpack.c.l.b16 %v1177
    %v1719 = vunpack.c.h.b16 %v1177
    %v1720 = vunpack.c.l.b16 %v1178
    %v1721 = vunpack.c.h.b16 %v1178
    %v1722 = vunpack.c.l.b16 %v1179
    %v1723 = vunpack.c.h.b16 %v1179
    %v1724 = vunpack.c.l.b16 %v1180
    %v1725 = vunpack.c.h.b16 %v1180
    %v1726 = vunpack.c.l.b16 %v1181
    %v1727 = vunpack.c.h.b16 %v1181
    %v1728 = vunpack.c.l.b16 %v1182
    %v1729 = vunpack.c.h.b16 %v1182
    %v1730 = vunpack.c.l.b16 %v1183
    %v1731 = vunpack.c.h.b16 %v1183
    %v1732 = vunpack.c.l.b16 %v1184
    %v1733 = vunpack.c.h.b16 %v1184
    %v1734 = vunpack.c.l.b16 %v1185
    %v1735 = vunpack.c.h.b16 %v1185
    %v1736 = vunpack.c.l.b16 %v1186
    %v1737 = vunpack.c.h.b16 %v1186
    %v1738 = vunpack.c.l.b16 %v1187
    %v1739 = vunpack.c.h.b16 %v1187
    %v1740 = vunpack.c.l.b16 %v1188
    %v1741 = vunpack.c.h.b16 %v1188
    %v1742 = vunpack.c.l.b16 %v1189
    %v1743 = vunpack.c.h.b16 %v1189
    %v1744 = vunpack.c.l.b16 %v1190
    %v1745 = vunpack.c.h.b16 %v1190
    %v1746 = vunpack.c.l.b16 %v1191
    %v1747 = vunpack.c.h.b16 %v1191
    %v1748 = vunpack.c.l.b16 %v1192
    %v1749 = vunpack.c.h.b16 %v1192
    %v1750 = vunpack.c.l.b16 %v1193
    %v1751 = vunpack.c.h.b16 %v1193
    %v1752 = vunpack.c.l.b16 %v1194
    %v1753 = vunpack.c.h.b16 %v1194
    %v1754 = vunpack.c.l.b16 %v1195
    %v1755 = vunpack.c.h.b16 %v1195
    %v1756 = vunpack.c.l.b16 %v1196
    %v1757 = vunpack.c.h.b16 %v1196
    %v1758 = vunpack.c.l.b16 %v1197
    %v1759 = vunpack.c.h.b16 %v1197
    %v1760 = vunpack.c.l.b16 %v1198
    %v1761 = vunpack.c.h.b16 %v1198
    %v1762 = vunpack.c.l.b16 %v1199
    %v1763 = vunpack.c.h.b16 %v1199
    %v1764 = vunpack.c.l.b16 %v1200
    %v1765 = vunpack.c.h.b16 %v1200
    %v1766 = vunpack.c.l.b16 %v1201
    %v1767 = vunpack.c.h.b16 %v1201
    %v1768 = vunpack.c.l.b16 %v1202
    %v1769 = vunpack.c.h.b16 %v1202
    %v1770 = vunpack.c.l.b16 %v1203
    %v1771 = vunpack.c.h.b16 %v1203
    %v1772 = vunpack.c.l.b16 %v1204
    %v1773 = vunpack.c.h.b16 %v1204
    %v1774 = vunpack.c.l.b16 %v1205
    %v1775 = vunpack.c.h.b16 %v1205
    %v1776 = vunpack.c.l.b16 %v1206
    %v1777 = vunpack.c.h.b16 %v1206
    %v1778 = vunpack.c.l.b16 %v1207
    %v1779 = vunpack.c.h.b16 %v1207
    %v1780 = vunpack.c.l.b16 %v1208
    %v1781 = vunpack.c.h.b16 %v1208
    %v1782 = vunpack.c.l.b16 %v1209
    %v1783 = vunpack.c.h.b16 %v1209
    %v1784 = vunpack.c.l.b16 %v1210
    %v1785 = vunpack.c.h.b16 %v1210
    %v1786 = vunpack.c.l.b16 %v1211
    %v1787 = vunpack.c.h.b16 %v1211
    %v1788 = vunpack.c.l.b16 %v1212
    %v1789 = vunpack.c.h.b16 %v1212
    %v1790 = vunpack.c.l.b16 %v1213
    %v1791 = vunpack.c.h.b16 %v1213
    %v1792 = vunpack.c.l.b16 %v1214
    %v1793 = vunpack.c.h.b16 %v1214
    %v1794 = vunpack.c.l.b16 %v1215
    %v1795 = vunpack.c.h.b16 %v1215
    %v1796 = vunpack.c.l.b16 %v1216
    %v1797 = vunpack.c.h.b16 %v1216
    %v1798 = vunpack.c.l.b16 %v1217
    %v1799 = vunpack.c.h.b16 %v1217
    %v1800 = vunpack.c.l.b16 %v1218
    %v1801 = vunpack.c.h.b16 %v1218
    %v1802 = vunpack.c.l.b16 %v1219
    %v1803 = vunpack.c.h.b16 %v1219
    %v1804 = vunpack.c.l.b16 %v1220
    %v1805 = vunpack.c.h.b16 %v1220
    %v1806 = vunpack.c.l.b16 %v1221
    %v1807 = vunpack.c.h.b16 %v1221
    %v1808 = vunpack.c.l.b16 %v1222
    %v1809 = vunpack.c.h.b16 %v1222
    %v1810 = vunpack.c.l.b16 %v1223
    %v1811 = vunpack.c.h.b16 %v1223
    %v1812 = vunpack.c.l.b16 %v1224
    %v1813 = vunpack.c.h.b16 %v1224
    %v1814 = vunpack.c.l.b16 %v1225
    %v1815 = vunpack.c.h.b16 %v1225
    %v1816 = vunpack.c.l.b16 %v1226
    %v1817 = vunpack.c.h.b16 %v1226
    %v1818 = vunpack.c.l.b16 %v1227
    %v1819 = vunpack.c.h.b16 %v1227
    %v1820 = vunpack.c.l.b16 %v1228
    %v1821 = vunpack.c.h.b16 %v1228
    %v1822 = vunpack.c.l.b16 %v1229
    %v1823 = vunpack.c.h.b16 %v1229
    %v1824 = vunpack.c.l.b16 %v1230
    %v1825 = vunpack.c.h.b16 %v1230
    %v1826 = vunpack.c.l.b16 %v1231
    %v1827 = vunpack.c.h.b16 %v1231
    %v1828 = vunpack.c.l.b16 %v1232
    %v1829 = vunpack.c.h.b16 %v1232
    %v1830 = vunpack.c.l.b16 %v1233
    %v1831 = vunpack.c.h.b16 %v1233
    %v1832 = vunpack.c.l.b16 %v1234
    %v1833 = vunpack.c.h.b16 %v1234
    %v1834 = vunpack.c.l.b16 %v1235
    %v1835 = vunpack.c.h.b16 %v1235
    %v1836 = vunpack.c.l.b16 %v1236
    %v1837 = vunpack.c.h.b16 %v1236
    %v1838 = vunpack.c.l.b16 %v1237
    %v1839 = vunpack.c.h.b16 %v1237
    %v1840 = vunpack.c.l.b16 %v1238
    %v1841 = vunpack.c.h.b16 %v1238
    %v1842 = vunpack.c.l.b16 %v1239
    %v1843 = vunpack.c.h.b16 %v1239
    %v1844 = vunpack.c.l.b16 %v1240
    %v1845 = vunpack.c.h.b16 %v1240
    %v1846 = vunpack.c.l.b16 %v1241
    %v1847 = vunpack.c.h.b16 %v1241
    %v1848 = vunpack.c.l.b16 %v1242
    %v1849 = vunpack.c.h.b16 %v1242
    %v1850 = vunpack.c.l.b16 %v1243
    %v1851 = vunpack.c.h.b16 %v1243
    %v1852 = vunpack.c.l.b16 %v1244
    %v1853 = vunpack.c.h.b16 %v1244
    %v1854 = vunpack.c.l.b16 %v1245
    %v1855 = vunpack.c.h.b16 %v1245
    %v1856 = vunpack.c.l.b16 %v1246
    %v1857 = vunpack.c.h.b16 %v1246
    %v1858 = vunpack.c.l.b16 %v1247
    %v1859 = vunpack.c.h.b16 %v1247
    %v1860 = vunpack.c.l.b16 %v1248
    %v1861 = vunpack.c.h.b16 %v1248
    %v1862 = vunpack.c.l.b16 %v1249
    %v1863 = vunpack.c.h.b16 %v1249
    %v1864 = vunpack.c.l.b16 %v1250
    %v1865 = vunpack.c.h.b16 %v1250
    %v1866 = vunpack.c.l.b16 %v1251
    %v1867 = vunpack.c.h.b16 %v1251
    %v1868 = vunpack.c.l.b16 %v1252
    %v1869 = vunpack.c.h.b16 %v1252
    %v1870 = vunpack.c.l.b16 %v1253
    %v1871 = vunpack.c.h.b16 %v1253
    %v1872 = vunpack.c.l.b16 %v1254
    %v1873 = vunpack.c.h.b16 %v1254
    %v1874 = vunpack.c.l.b16 %v1255
    %v1875 = vunpack.c.h.b16 %v1255
    %v1876 = vunpack.c.l.b16 %v1256
    %v1877 = vunpack.c.h.b16 %v1256
    %v1878 = vunpack.c.l.b16 %v1257
    %v1879 = vunpack.c.h.b16 %v1257
    %v1880 = vunpack.c.l.b16 %v1258
    %v1881 = vunpack.c.h.b16 %v1258
    %v1882 = vunpack.c.l.b16 %v1259
    %v1883 = vunpack.c.h.b16 %v1259
    %v1884 = vunpack.c.l.b16 %v1260
    %v1885 = vunpack.c.h.b16 %v1260
    %v1886 = vunpack.c.l.b16 %v1261
    %v1887 = vunpack.c.h.b16 %v1261
    %v1888 = vunpack.c.l.b16 %v1262
    %v1889 = vunpack.c.h.b16 %v1262
    %v1890 = vunpack.c.l.b16 %v1263
    %v1891 = vunpack.c.h.b16 %v1263
    %v1892 = vunpack.c.l.b16 %v1264
    %v1893 = vunpack.c.h.b16 %v1264
    %v1894 = vunpack.c.l.b16 %v1265
    %v1895 = vunpack.c.h.b16 %v1265
    %v1896 = vunpack.c.l.b16 %v1266
    %v1897 = vunpack.c.h.b16 %v1266
    %v1898 = vunpack.c.l.b16 %v1267
    %v1899 = vunpack.c.h.b16 %v1267
    %v1900 = vunpack.c.l.b16 %v1268
    %v1901 = vunpack.c.h.b16 %v1268
    %v1902 = vunpack.c.l.b16 %v1269
    %v1903 = vunpack.c.h.b16 %v1269
    %v1904 = vunpack.c.l.b16 %v1270
    %v1905 = vunpack.c.h.b16 %v1270
    %v1906 = vunpack.c.l.b16 %v1271
    %v1907 = vunpack.c.h.b16 %v1271
    %v1908 = vunpack.c.l.b16 %v1272
    %v1909 = vunpack.c.h.b16 %v1272
    %v1910 = vunpack.c.l.b16 %v1273
    %v1911 = vunpack.c.h.b16 %v1273
    %v1912 = vunpack.c.l.b16 %v1274
    %v1913 = vunpack.c.h.b16 %v1274
    %v1914 = vunpack.c.l.b16 %v1275
    %v1915 = vunpack.c.h.b16 %v1275
    %v1916 = vunpack.c.l.b16 %v1276
    %v1917 = vunpack.c.h.b16 %v1276
    %v1918 = vunpack.c.l.b16 %v1277
    %v1919 = vunpack.c.h.b16 %v1277
    %v1920 = vunpack.c.l.b16 %v1278
    %v1921 = vunpack.c.h.b16 %v1278
    %v1922 = vunpack.c.l.b16 %v1279
    %v1923 = vunpack.c.h.b16 %v1279
    %v1924 = vunpack.c.l.b16 %v1280
    %v1925 = vunpack.c.h.b16 %v1280
    %v1926 = vunpack.c.l.b16 %v1281
    %v1927 = vunpack.c.h.b16 %v1281
    %v1928 = vunpack.c.l.b16 %v1282
    %v1929 = vunpack.c.h.b16 %v1282
    %v1930 = vunpack.c.l.b16 %v1283
    %v1931 = vunpack.c.h.b16 %v1283
    %v1932 = vunpack.c.l.b16 %v1284
    %v1933 = vunpack.c.h.b16 %v1284
    %v1934 = vunpack.c.l.b16 %v1285
    %v1935 = vunpack.c.h.b16 %v1285
    %v1936 = vunpack.c.l.b16 %v1286
    %v1937 = vunpack.c.h.b16 %v1286
    %v1938 = vunpack.c.l.b16 %v1287
    %v1939 = vunpack.c.h.b16 %v1287
    %v1940 = vunpack.c.l.b16 %v1288
    %v1941 = vunpack.c.h.b16 %v1288
    %v1942 = vunpack.c.l.b16 %v1289
    %v1943 = vunpack.c.h.b16 %v1289
    %v1944 = vunpack.c.l.b16 %v1290
    %v1945 = vunpack.c.h.b16 %v1290
    %v1946 = vunpack.c.l.b16 %v1291
    %v1947 = vunpack.c.h.b16 %v1291
    %v1948 = vunpack.c.l.b16 %v1292
    %v1949 = vunpack.c.h.b16 %v1292
    %v1950 = vunpack.c.l.b16 %v1293
    %v1951 = vunpack.c.h.b16 %v1293
    %v1952 = vunpack.c.l.b16 %v1294
    %v1953 = vunpack.c.h.b16 %v1294
    %v1954 = vunpack.c.l.b16 %v1295
    %v1955 = vunpack.c.h.b16 %v1295
    %v1956 = vunpack.c.l.b16 %v1296
    %v1957 = vunpack.c.h.b16 %v1296
    %v1958 = vunpack.c.l.b16 %v1297
    %v1959 = vunpack.c.h.b16 %v1297
    %v1960 = vunpack.c.l.b16 %v1298
    %v1961 = vunpack.c.h.b16 %v1298
    %v1962 = vunpack.c.l.b16 %v1299
    %v1963 = vunpack.c.h.b16 %v1299
    %v1964 = vunpack.c.l.b16 %v1300
    %v1965 = vunpack.c.h.b16 %v1300
    %v1966 = vunpack.c.l.b16 %v1301
    %v1967 = vunpack.c.h.b16 %v1301
    %v1968 = vunpack.c.l.b16 %v1302
    %v1969 = vunpack.c.h.b16 %v1302
    %v1970 = vunpack.c.l.b16 %v1303
    %v1971 = vunpack.c.h.b16 %v1303
    %v1972 = vunpack.c.l.b16 %v1304
    %v1973 = vunpack.c.h.b16 %v1304
    %v1974 = vunpack.c.l.b16 %v1305
    %v1975 = vunpack.c.h.b16 %v1305
    %v1976 = vunpack.c.l.b16 %v1306
    %v1977 = vunpack.c.h.b16 %v1306
    %v1978 = vunpack.c.l.b16 %v1307
    %v1979 = vunpack.c.h.b16 %v1307
    %v1980 = vunpack.c.l.b16 %v1308
    %v1981 = vunpack.c.h.b16 %v1308
    %v1982 = vunpack.c.l.b16 %v1309
    %v1983 = vunpack.c.h.b16 %v1309
    %v1984 = vunpack.c.l.b16 %v1310
    %v1985 = vunpack.c.h.b16 %v1310
    %v1986 = vunpack.c.l.b16 %v1311
    %v1987 = vunpack.c.h.b16 %v1311
    %v1988 = vunpack.c.l.b16 %v1312
    %v1989 = vunpack.c.h.b16 %v1312
    %v1990 = vunpack.c.l.b16 %v1313
    %v1991 = vunpack.c.h.b16 %v1313
    %v1992 = vunpack.c.l.b16 %v1314
    %v1993 = vunpack.c.h.b16 %v1314
    %v1994 = vunpack.c.l.b16 %v1315
    %v1995 = vunpack.c.h.b16 %v1315
    %v1996 = vunpack.c.l.b16 %v1316
    %v1997 = vunpack.c.h.b16 %v1316
    %v1998 = vunpack.c.l.b16 %v1317
    %v1999 = vunpack.c.h.b16 %v1317
    %v2000 = vunpack.c.l.b16 %v1318
    %v2001 = vunpack.c.h.b16 %v1318
    %v2002 = vunpack.c.l.b16 %v1319
    %v2003 = vunpack.c.h.b16 %v1319
    %v2004 = vunpack.c.l.b16 %v1320
    %v2005 = vunpack.c.h.b16 %v1320
    %v2006 = vunpack.c.l.b16 %v1321
    %v2007 = vunpack.c.h.b16 %v1321
    %v2008 = vunpack.c.l.b16 %v1322
    %v2009 = vunpack.c.h.b16 %v1322
    %v2010 = vunpack.c.l.b16 %v1323
    %v2011 = vunpack.c.h.b16 %v1323
    %v2012 = vunpack.c.l.b16 %v1324
    %v2013 = vunpack.c.h.b16 %v1324
    %v2014 = vunpack.c.l.b16 %v1325
    %v2015 = vunpack.c.h.b16 %v1325
    %v2016 = vunpack.c.l.b16 %v1326
    %v2017 = vunpack.c.h.b16 %v1326
    %v2018 = vunpack.c.l.b16 %v1327
    %v2019 = vunpack.c.h.b16 %v1327
    %v2020 = vunpack.c.l.b16 %v1328
    %v2021 = vunpack.c.h.b16 %v1328
    %v2022 = vunpack.c.l.b16 %v1329
    %v2023 = vunpack.c.h.b16 %v1329
    %v2024 = vunpack.c.l.b16 %v1330
    %v2025 = vunpack.c.h.b16 %v1330
    %v2026 = vunpack.c.l.b16 %v1331
    %v2027 = vunpack.c.h.b16 %v1331
    %v2028 = vunpack.c.l.b16 %v1332
    %v2029 = vunpack.c.h.b16 %v1332
    %v2030 = vunpack.c.l.b16 %v1333
    %v2031 = vunpack.c.h.b16 %v1333
    %v2032 = vunpack.c.l.b16 %v1334
    %v2033 = vunpack.c.h.b16 %v1334
    %v2034 = vunpack.c.l.b16 %v1335
    %v2035 = vunpack.c.h.b16 %v1335
    %v2036 = vunpack.c.l.b16 %v1336
    %v2037 = vunpack.c.h.b16 %v1336
    %v2038 = vunpack.c.l.b16 %v1337
    %v2039 = vunpack.c.h.b16 %v1337
    %v2040 = vunpack.c.l.b16 %v1338
    %v2041 = vunpack.c.h.b16 %v1338
    %v2042 = vunpack.c.l.b16 %v1339
    %v2043 = vunpack.c.h.b16 %v1339
    %v2044 = vunpack.c.l.b16 %v1340
    %v2045 = vunpack.c.h.b16 %v1340
    %v2046 = vunpack.c.l.b16 %v1341
    %v2047 = vunpack.c.h.b16 %v1341
    %v2048 = vunpack.c.l.b16 %v1342
    %v2049 = vunpack.c.h.b16 %v1342
    %v2050 = vunpack.c.l.b16 %v1343
    %v2051 = vunpack.c.h.b16 %v1343
    %v2052 = vunpack.c.l.b16 %v1344
    %v2053 = vunpack.c.h.b16 %v1344
    %v2054 = vunpack.c.l.b16 %v1345
    %v2055 = vunpack.c.h.b16 %v1345
    %v2056 = vunpack.c.l.b16 %v1346
    %v2057 = vunpack.c.h.b16 %v1346
    %v2058 = vunpack.c.l.b16 %v1347
    %v2059 = vunpack.c.h.b16 %v1347
    %v2060 = vunpack.c.l.b16 %v1348
    %v2061 = vunpack.c.h.b16 %v1348
    %v2062 = vunpack.c.l.b16 %v1349
    %v2063 = vunpack.c.h.b16 %v1349
    %v2064 = vunpack.c.l.b16 %v1350
    %v2065 = vunpack.c.h.b16 %v1350
    %v2066 = vunpack.c.l.b16 %v1351
    %v2067 = vunpack.c.h.b16 %v1351
    %v2068 = vunpack.c.l.b16 %v1352
    %v2069 = vunpack.c.h.b16 %v1352
    %v2070 = vunpack.c.l.b16 %v1353
    %v2071 = vunpack.c.h.b16 %v1353
    %v2072 = vunpack.c.l.b16 %v1354
    %v2073 = vunpack.c.h.b16 %v1354
    %v2074 = vunpack.c.l.b16 %v1355
    %v2075 = vunpack.c.h.b16 %v1355
    %v2076 = vunpack.c.l.b16 %v1356
    %v2077 = vunpack.c.h.b16 %v1356
    %v2078 = vunpack.c.l.b16 %v1357
    %v2079 = vunpack.c.h.b16 %v1357
    %v2080 = vunpack.c.l.b16 %v1358
    %v2081 = vunpack.c.h.b16 %v1358
    %v2082 = vunpack.c.l.b16 %v1359
    %v2083 = vunpack.c.h.b16 %v1359
    %v2084 = vunpack.c.l.b16 %v1360
    %v2085 = vunpack.c.h.b16 %v1360
    %v2086 = vunpack.c.l.b16 %v1361
    %v2087 = vunpack.c.h.b16 %v1361
    %v2088 = vunpack.c.l.b16 %v1362
    %v2089 = vunpack.c.h.b16 %v1362
    %v2090 = vunpack.c.l.b16 %v1363
    %v2091 = vunpack.c.h.b16 %v1363
    %v2092 = vunpack.c.l.b16 %v1364
    %v2093 = vunpack.c.h.b16 %v1364
    %v2094 = vunpack.c.l.b16 %v1365
    %v2095 = vunpack.c.h.b16 %v1365
    %v2096 = vunpack.c.l.b16 %v1366
    %v2097 = vunpack.c.h.b16 %v1366
    %v2098 = vunpack.c.l.b16 %v1367
    %v2099 = vunpack.c.h.b16 %v1367
    %v2100 = vunpack.c.l.b16 %v1368
    %v2101 = vunpack.c.h.b16 %v1368
    %v2102 = vunpack.c.l.b16 %v1369
    %v2103 = vunpack.c.h.b16 %v1369
    %v2104 = vunpack.c.l.b16 %v1370
    %v2105 = vunpack.c.h.b16 %v1370
    %v2106 = vunpack.c.l.b16 %v1371
    %v2107 = vunpack.c.h.b16 %v1371
    %v2108 = vunpack.c.l.b16 %v1372
    %v2109 = vunpack.c.h.b16 %v1372
    %v2110 = vunpack.c.l.b16 %v1373
    %v2111 = vunpack.c.h.b16 %v1373
    %v2112 = vunpack.c.l.b16 %v1374
    %v2113 = vunpack.c.h.b16 %v1374
    %v2114 = vunpack.c.l.b16 %v1375
    %v2115 = vunpack.c.h.b16 %v1375
    %v2116 = vunpack.c.l.b16 %v1376
    %v2117 = vunpack.c.h.b16 %v1376
    %v2118 = vunpack.c.l.b16 %v1377
    %v2119 = vunpack.c.h.b16 %v1377
    %v2120 = vunpack.c.l.b16 %v1378
    %v2121 = vunpack.c.h.b16 %v1378
    %v2122 = vunpack.c.l.b16 %v1379
    %v2123 = vunpack.c.h.b16 %v1379
    %v2124 = vunpack.c.l.b16 %v1380
    %v2125 = vunpack.c.h.b16 %v1380
    %v2126 = vunpack.c.l.b16 %v1381
    %v2127 = vunpack.c.h.b16 %v1381
    %v2128 = vunpack.c.l.b16 %v1382
    %v2129 = vunpack.c.h.b16 %v1382
    %v2130 = vunpack.c.l.b16 %v1383
    %v2131 = vunpack.c.h.b16 %v1383
    %v2132 = vunpack.c.l.b16 %v1384
    %v2133 = vunpack.c.h.b16 %v1384
    %v2134 = vunpack.c.l.b16 %v1385
    %v2135 = vunpack.c.h.b16 %v1385
    %v2136 = vunpack.c.l.b16 %v1386
    %v2137 = vunpack.c.h.b16 %v1386
    %v2138 = vunpack.c.l.b16 %v1387
    %v2139 = vunpack.c.h.b16 %v1387
    %v2140 = vunpack.c.l.b16 %v1388
    %v2141 = vunpack.c.h.b16 %v1388
    %v2142 = vunpack.c.l.b16 %v1389
    %v2143 = vunpack.c.h.b16 %v1389
    %v2144 = vunpack.c.l.b16 %v1390
    %v2145 = vunpack.c.h.b16 %v1390
    %v2146 = vunpack.c.l.b16 %v1391
    %v2147 = vunpack.c.h.b16 %v1391
    %v2148 = vunpack.c.l.b16 %v1392
    %v2149 = vunpack.c.h.b16 %v1392
    %v2150 = vunpack.c.l.b16 %v1393
    %v2151 = vunpack.c.h.b16 %v1393
    %v2152 = vunpack.c.l.b16 %v1394
    %v2153 = vunpack.c.h.b16 %v1394
    %v2154 = vunpack.c.l.b16 %v1395
    %v2155 = vunpack.c.h.b16 %v1395
    %v2156 = vunpack.c.l.b16 %v1396
    %v2157 = vunpack.c.h.b16 %v1396
    %v2158 = vunpack.c.l.b16 %v1397
    %v2159 = vunpack.c.h.b16 %v1397
    %v2160 = vunpack.c.l.b16 %v1398
    %v2161 = vunpack.c.h.b16 %v1398
    %v2162 = vunpack.c.l.b16 %v1399
    %v2163 = vunpack.c.h.b16 %v1399
    %v2164 = vunpack.c.l.b16 %v1400
    %v2165 = vunpack.c.h.b16 %v1400
    %v2166 = vunpack.c.l.b16 %v1401
    %v2167 = vunpack.c.h.b16 %v1401
    %v2168 = vunpack.c.l.b16 %v1402
    %v2169 = vunpack.c.h.b16 %v1402
    %v2170 = vunpack.c.l.b16 %v1403
    %v2171 = vunpack.c.h.b16 %v1403
    %v2172 = vunpack.c.l.b16 %v1404
    %v2173 = vunpack.c.h.b16 %v1404
    %v2174 = vunpack.c.l.b16 %v1405
    %v2175 = vunpack.c.h.b16 %v1405
    %v2176 = vunpack.c.l.b16 %v1406
    %v2177 = vunpack.c.h.b16 %v1406
    %v2178 = vunpack.c.l.b16 %v1407
    %v2179 = vunpack.c.h.b16 %v1407
    %v2180 = vunpack.c.l.b16 %v1408
    %v2181 = vunpack.c.h.b16 %v1408
    %v2182 = vunpack.c.l.b16 %v1409
    %v2183 = vunpack.c.h.b16 %v1409
    %v2184 = vunpack.c.l.b16 %v1410
    %v2185 = vunpack.c.h.b16 %v1410
    %v2186 = vunpack.c.l.b16 %v1411
    %v2187 = vunpack.c.h.b16 %v1411
    %v2188 = vunpack.c.l.b16 %v1412
    %v2189 = vunpack.c.h.b16 %v1412
    %v2190 = vunpack.c.l.b16 %v1413
    %v2191 = vunpack.c.h.b16 %v1413
    %v2192 = vunpack.c.l.b16 %v1414
    %v2193 = vunpack.c.h.b16 %v1414
    %v2194 = vunpack.c.l.b16 %v1415
    %v2195 = vunpack.c.h.b16 %v1415
    %v2196 = vunpack.c.l.b16 %v1416
    %v2197 = vunpack.c.h.b16 %v1416
    %v2198 = vunpack.c.l.b16 %v1417
    %v2199 = vunpack.c.h.b16 %v1417
    %v2200 = vunpack.c.l.b16 %v1418
    %v2201 = vunpack.c.h.b16 %v1418
    %v2202 = vunpack.c.l.b16 %v1419
    %v2203 = vunpack.c.h.b16 %v1419
    %v2204 = vunpack.c.l.b16 %v1420
    %v2205 = vunpack.c.h.b16 %v1420
    %v2206 = vunpack.c.l.b16 %v1421
    %v2207 = vunpack.c.h.b16 %v1421
    %v2208 = vunpack.c.l.b16 %v1422
    %v2209 = vunpack.c.h.b16 %v1422
    %v2210 = vunpack.c.l.b16 %v1423
    %v2211 = vunpack.c.h.b16 %v1423
    %v2212 = vunpack.c.l.b16 %v1424
    %v2213 = vunpack.c.h.b16 %v1424
    %v2214 = vunpack.c.l.b16 %v1425
    %v2215 = vunpack.c.h.b16 %v1425
    %v2216 = vpack.c.b16 %v1708, %v1704
    %v2217 = vpack.c.b16 %v1709, %v1705
    %v2218 = vpack.c.b16 %v1710, %v1706
    %v2219 = vpack.c.b16 %v1711, %v1707
    %v2220 = vpack.c.b16 %v1716, %v1712
    %v2221 = vpack.c.b16 %v1717, %v1713
    %v2222 = vpack.c.b16 %v1718, %v1714
    %v2223 = vpack.c.b16 %v1719, %v1715
    %v2224 = vpack.c.b16 %v1724, %v1720
    %v2225 = vpack.c.b16 %v1725, %v1721
    %v2226 = vpack.c.b16 %v1726, %v1722
    %v2227 = vpack.c.b16 %v1727, %v1723
    %v2228 = vpack.c.b16 %v1732, %v1728
    %v2229 = vpack.c.b16 %v1733, %v1729
    %v2230 = vpack.c.b16 %v1734, %v1730
    %v2231 = vpack.c.b16 %v1735, %v1731
    %v2232 = vpack.c.b16 %v1740, %v1736
    %v2233 = vpack.c.b16 %v1741, %v1737
    %v2234 = vpack.c.b16 %v1742, %v1738
    %v2235 = vpack.c.b16 %v1743, %v1739
    %v2236 = vpack.c.b16 %v1748, %v1744
    %v2237 = vpack.c.b16 %v1749, %v1745
    %v2238 = vpack.c.b16 %v1750, %v1746
    %v2239 = vpack.c.b16 %v1751, %v1747
    %v2240 = vpack.c.b16 %v1756, %v1752
    %v2241 = vpack.c.b16 %v1757, %v1753
    %v2242 = vpack.c.b16 %v1758, %v1754
    %v2243 = vpack.c.b16 %v1759, %v1755
    %v2244 = vpack.c.b16 %v1764, %v1760
    %v2245 = vpack.c.b16 %v1765, %v1761
    %v2246 = vpack.c.b16 %v1766, %v1762
    %v2247 = vpack.c.b16 %v1767, %v1763
    %v2248 = vpack.c.b16 %v1772, %v1768
    %v2249 = vpack.c.b16 %v1773, %v1769
    %v2250 = vpack.c.b16 %v1774, %v1770
    %v2251 = vpack.c.b16 %v1775, %v1771
    %v2252 = vpack.c.b16 %v1780, %v1776
    %v2253 = vpack.c.b16 %v1781, %v1777
    %v2254 = vpack.c.b16 %v1782, %v1778
    %v2255 = vpack.c.b16 %v1783, %v1779
    %v2256 = vpack.c.b16 %v1788, %v1784
    %v2257 = vpack.c.b16 %v1789, %v1785
    %v2258 = vpack.c.b16 %v1790, %v1786
    %v2259 = vpack.c.b16 %v1791, %v1787
    %v2260 = vpack.c.b16 %v1796, %v1792
    %v2261 = vpack.c.b16 %v1797, %v1793
    %v2262 = vpack.c.b16 %v1798, %v1794
    %v2263 = vpack.c.b16 %v1799, %v1795
    %v2264 = vpack.c.b16 %v1804, %v1800
    %v2265 = vpack.c.b16 %v1805, %v1801
    %v2266 = vpack.c.b16 %v1806, %v1802
    %v2267 = vpack.c.b16 %v1807, %v1803
    %v2268 = vpack.c.b16 %v1812, %v1808
    %v2269 = vpack.c.b16 %v1813, %v1809
    %v2270 = vpack.c.b16 %v1814, %v1810
    %v2271 = vpack.c.b16 %v1815, %v1811
    %v2272 = vpack.c.b16 %v1820, %v1816
    %v2273 = vpack.c.b16 %v1821, %v1817
    %v2274 = vpack.c.b16 %v1822, %v1818
    %v2275 = vpack.c.b16 %v1823, %v1819
    %v2276 = vpack.c.b16 %v1828, %v1824
    %v2277 = vpack.c.b16 %v1829, %v1825
    %v2278 = vpack.c.b16 %v1830, %v1826
    %v2279 = vpack.c.b16 %v1831, %v1827
    %v2280 = vpack.c.b16 %v1836, %v1832
    %v2281 = vpack.c.b16 %v1837, %v1833
    %v2282 = vpack.c.b16 %v1838, %v1834
    %v2283 = vpack.c.b16 %v1839, %v1835
    %v2284 = vpack.c.b16 %v1844, %v1840
    %v2285 = vpack.c.b16 %v1845, %v1841
    %v2286 = vpack.c.b16 %v1846, %v1842
    %v2287 = vpack.c.b16 %v1847, %v1843
    %v2288 = vpack.c.b16 %v1852, %v1848
    %v2289 = vpack.c.b16 %v1853, %v1849
    %v2290 = vpack.c.b16 %v1854, %v1850
    %v2291 = vpack.c.b16 %v1855, %v1851
    %v2292 = vpack.c.b16 %v1860, %v1856
    %v2293 = vpack.c.b16 %v1861, %v1857
    %v2294 = vpack.c.b16 %v1862, %v1858
    %v2295 = vpack.c.b16 %v1863, %v1859
    %v2296 = vpack.c.b16 %v1868, %v1864
    %v2297 = vpack.c.b16 %v1869, %v1865
    %v2298 = vpack.c.b16 %v1870, %v1866
    %v2299 = vpack.c.b16 %v1871, %v1867
    %v2300 = vpack.c.b16 %v1876, %v1872
    %v2301 = vpack.c.b16 %v1877, %v1873
    %v2302 = vpack.c.b16 %v1878, %v1874
    %v2303 = vpack.c.b16 %v1879, %v1875
    %v2304 = vpack.c.b16 %v1884, %v1880
    %v2305 = vpack.c.b16 %v1885, %v1881
    %v2306 = vpack.c.b16 %v1886, %v1882
    %v2307 = vpack.c.b16 %v1887, %v1883
    %v2308 = vpack.c.b16 %v1892, %v1888
    %v2309 = vpack.c.b16 %v1893, %v1889
    %v2310 = vpack.c.b16 %v1894, %v1890
    %v2311 = vpack.c.b16 %v1895, %v1891
    %v2312 = vpack.c.b16 %v1900, %v1896
    %v2313 = vpack.c.b16 %v1901, %v1897
    %v2314 = vpack.c.b16 %v1902, %v1898
    %v2315 = vpack.c.b16 %v1903, %v1899
    %v2316 = vpack.c.b16 %v1908, %v1904
    %v2317 = vpack.c.b16 %v1909, %v1905
    %v2318 = vpack.c.b16 %v1910, %v1906
    %v2319 = vpack.c.b16 %v1911, %v1907
    %v2320 = vpack.c.b16 %v1916, %v1912
    %v2321 = vpack.c.b16 %v1917, %v1913
    %v2322 = vpack.c.b16 %v1918, %v1914
    %v2323 = vpack.c.b16 %v1919, %v1915
    %v2324 = vpack.c.b16 %v1924, %v1920
    %v2325 = vpack.c.b16 %v1925, %v1921
    %v2326 = vpack.c.b16 %v1926, %v1922
    %v2327 = vpack.c.b16 %v1927, %v1923
    %v2328 = vpack.c.b16 %v1932, %v1928
    %v2329 = vpack.c.b16 %v1933, %v1929
    %v2330 = vpack.c.b16 %v1934, %v1930
    %v2331 = vpack.c.b16 %v1935, %v1931
    %v2332 = vpack.c.b16 %v1940, %v1936
    %v2333 = vpack.c.b16 %v1941, %v1937
    %v2334 = vpack.c.b16 %v1942, %v1938
    %v2335 = vpack.c.b16 %v1943, %v1939
    %v2336 = vpack.c.b16 %v1948, %v1944
    %v2337 = vpack.c.b16 %v1949, %v1945
    %v2338 = vpack.c.b16 %v1950, %v1946
    %v2339 = vpack.c.b16 %v1951, %v1947
    %v2340 = vpack.c.b16 %v1956, %v1952
    %v2341 = vpack.c.b16 %v1957, %v1953
    %v2342 = vpack.c.b16 %v1958, %v1954
    %v2343 = vpack.c.b16 %v1959, %v1955
    %v2344 = vpack.c.b16 %v1964, %v1960
    %v2345 = vpack.c.b16 %v1965, %v1961
    %v2346 = vpack.c.b16 %v1966, %v1962
    %v2347 = vpack.c.b16 %v1967, %v1963
    %v2348 = vpack.c.b16 %v1972, %v1968
    %v2349 = vpack.c.b16 %v1973, %v1969
    %v2350 = vpack.c.b16 %v1974, %v1970
    %v2351 = vpack.c.b16 %v1975, %v1971
    %v2352 = vpack.c.b16 %v1980, %v1976
    %v2353 = vpack.c.b16 %v1981, %v1977
    %v2354 = vpack.c.b16 %v1982, %v1978
    %v2355 = vpack.c.b16 %v1983, %v1979
    %v2356 = vpack.c.b16 %v1988, %v1984
    %v2357 = vpack.c.b16 %v1989, %v1985
    %v2358 = vpack.c.b16 %v1990, %v1986
    %v2359 = vpack.c.b16 %v1991, %v1987
    %v2360 = vpack.c.b16 %v1996, %v1992
    %v2361 = vpack.c.b16 %v1997, %v1993
    %v2362 = vpack.c.b16 %v1998, %v1994
    %v2363 = vpack.c.b16 %v1999, %v1995
    %v2364 = vpack.c.b16 %v2004, %v2000
    %v2365 = vpack.c.b16 %v2005, %v2001
    %v2366 = vpack.c.b16 %v2006, %v2002
    %v2367 = vpack.c.b16 %v2007, %v2003
    %v2368 = vpack.c.b16 %v2012, %v2008
    %v2369 = vpack.c.b16 %v2013, %v2009
    %v2370 = vpack.c.b16 %v2014, %v2010
    %v2371 = vpack.c.b16 %v2015, %v2011
    %v2372 = vpack.c.b16 %v2020, %v2016
    %v2373 = vpack.c.b16 %v2021, %v2017
    %v2374 = vpack.c.b16 %v2022, %v2018
    %v2375 = vpack.c.b16 %v2023, %v2019
    %v2376 = vpack.c.b16 %v2028, %v2024
    %v2377 = vpack.c.b16 %v2029, %v2025
    %v2378 = vpack.c.b16 %v2030, %v2026
    %v2379 = vpack.c.b16 %v2031, %v2027
    %v2380 = vpack.c.b16 %v2036, %v2032
    %v2381 = vpack.c.b16 %v2037, %v2033
    %v2382 = vpack.c.b16 %v2038, %v2034
    %v2383 = vpack.c.b16 %v2039, %v2035
    %v2384 = vpack.c.b16 %v2044, %v2040
    %v2385 = vpack.c.b16 %v2045, %v2041
    %v2386 = vpack.c.b16 %v2046, %v2042
    %v2387 = vpack.c.b16 %v2047, %v2043
    %v2388 = vpack.c.b16 %v2052, %v2048
    %v2389 = vpack.c.b16 %v2053, %v2049
    %v2390 = vpack.c.b16 %v2054, %v2050
    %v2391 = vpack.c.b16 %v2055, %v2051
    %v2392 = vpack.c.b16 %v2060, %v2056
    %v2393 = vpack.c.b16 %v2061, %v2057
    %v2394 = vpack.c.b16 %v2062, %v2058
    %v2395 = vpack.c.b16 %v2063, %v2059
    %v2396 = vpack.c.b16 %v2068, %v2064
    %v2397 = vpack.c.b16 %v2069, %v2065
    %v2398 = vpack.c.b16 %v2070, %v2066
    %v2399 = vpack.c.b16 %v2071, %v2067
    %v2400 = vpack.c.b16 %v2076, %v2072
    %v2401 = vpack.c.b16 %v2077, %v2073
    %v2402 = vpack.c.b16 %v2078, %v2074
    %v2403 = vpack.c.b16 %v2079, %v2075
    %v2404 = vpack.c.b16 %v2084, %v2080
    %v2405 = vpack.c.b16 %v2085, %v2081
    %v2406 = vpack.c.b16 %v2086, %v2082
    %v2407 = vpack.c.b16 %v2087, %v2083
    %v2408 = vpack.c.b16 %v2092, %v2088
    %v2409 = vpack.c.b16 %v2093, %v2089
    %v2410 = vpack.c.b16 %v2094, %v2090
    %v2411 = vpack.c.b16 %v2095, %v2091
    %v2412 = vpack.c.b16 %v2100, %v2096
    %v2413 = vpack.c.b16 %v2101, %v2097
    %v2414 = vpack.c.b16 %v2102, %v2098
    %v2415 = vpack.c.b16 %v2103, %v2099
    %v2416 = vpack.c.b16 %v2108, %v2104
    %v2417 = vpack.c.b16 %v2109, %v2105
    %v2418 = vpack.c.b16 %v2110, %v2106
    %v2419 = vpack.c.b16 %v2111, %v2107
    %v2420 = vpack.c.b16 %v2116, %v2112
    %v2421 = vpack.c.b16 %v2117, %v2113
    %v2422 = vpack.c.b16 %v2118, %v2114
    %v2423 = vpack.c.b16 %v2119, %v2115
    %v2424 = vpack.c.b16 %v2124, %v2120
    %v2425 = vpack.c.b16 %v2125, %v2121
    %v2426 = vpack.c.b16 %v2126, %v2122
    %v2427 = vpack.c.b16 %v2127, %v2123
    %v2428 = vpack.c.b16 %v2132, %v2128
    %v2429 = vpack.c.b16 %v2133, %v2129
    %v2430 = vpack.c.b16 %v2134, %v2130
    %v2431 = vpack.c.b16 %v2135, %v2131
    %v2432 = vpack.c.b16 %v2140, %v2136
    %v2433 = vpack.c.b16 %v2141, %v2137
    %v2434 = vpack.c.b16 %v2142, %v2138
    %v2435 = vpack.c.b16 %v2143, %v2139
    %v2436 = vpack.c.b16 %v2148, %v2144
    %v2437 = vpack.c.b16 %v2149, %v2145
    %v2438 = vpack.c.b16 %v2150, %v2146
    %v2439 = vpack.c.b16 %v2151, %v2147
    %v2440 = vpack.c.b16 %v2156, %v2152
    %v2441 = vpack.c.b16 %v2157, %v2153
    %v2442 = vpack.c.b16 %v2158, %v2154
    %v2443 = vpack.c.b16 %v2159, %v2155
    %v2444 = vpack.c.b16 %v2164, %v2160
    %v2445 = vpack.c.b16 %v2165, %v2161
    %v2446 = vpack.c.b16 %v2166, %v2162
    %v2447 = vpack.c.b16 %v2167, %v2163
    %v2448 = vpack.c.b16 %v2172, %v2168
    %v2449 = vpack.c.b16 %v2173, %v2169
    %v2450 = vpack.c.b16 %v2174, %v2170
    %v2451 = vpack.c.b16 %v2175, %v2171
    %v2452 = vpack.c.b16 %v2180, %v2176
    %v2453 = vpack.c.b16 %v2181, %v2177
    %v2454 = vpack.c.b16 %v2182, %v2178
    %v2455 = vpack.c.b16 %v2183, %v2179
    %v2456 = vpack.c.b16 %v2188, %v2184
    %v2457 = vpack.c.b16 %v2189, %v2185
    %v2458 = vpack.c.b16 %v2190, %v2186
    %v2459 = vpack.c.b16 %v2191, %v2187
    %v2460 = vpack.c.b16 %v2196, %v2192
    %v2461 = vpack.c.b16 %v2197, %v2193
    %v2462 = vpack.c.b16 %v2198, %v2194
    %v2463 = vpack.c.b16 %v2199, %v2195
    %v2464 = vpack.c.b16 %v2204, %v2200
    %v2465 = vpack.c.b16 %v2205, %v2201
    %v2466 = vpack.c.b16 %v2206, %v2202
    %v2467 = vpack.c.b16 %v2207, %v2203
    %v2468 = vpack.c.b16 %v2212, %v2208
    %v2469 = vpack.c.b16 %v2213, %v2209
    %v2470 = vpack.c.b16 %v2214, %v2210
    %v2471 = vpack.c.b16 %v2215, %v2211
    %2728 = vmatprep.subr.bf16.mxu0 %v2245
    %2729 = vmatpush1.bf16.msra.mxu0 %v2244
    %2730 = vmatprep.subr.bf16.mxu0 %v2241
    %2731 = vmatpush1.bf16.msra.mxu0 %v2240
    %2732 = vmatprep.subr.bf16.mxu0 %v2237
    %2733 = vmatpush1.bf16.msra.mxu0 %v2236
    %2734 = vmatprep.subr.bf16.mxu0 %v2233
    %2735 = vmatpush1.bf16.msra.mxu0 %v2232
    %2736 = vmatprep.subr.bf16.mxu0 %v2229
    %2737 = vmatpush1.bf16.msra.mxu0 %v2228
    %2738 = vmatprep.subr.bf16.mxu0 %v2225
    %2739 = vmatpush1.bf16.msra.mxu0 %v2224
    %2740 = vmatprep.subr.bf16.mxu0 %v2221
    %2741 = vmatpush1.bf16.msra.mxu0 %v2220
    %2742 = vmatprep.subr.bf16.mxu0 %v2217
    %2743 = vmatpush1.bf16.msra.mxu0 %v2216
    %2744 = vmatprep.subr.bf16.mxu0 %v2277
    %2745 = vmatpush2.bf16.msra.mxu0 %v2276
    %2746 = vmatprep.subr.bf16.mxu0 %v2273
    %2747 = vmatpush2.bf16.msra.mxu0 %v2272
    %2748 = vmatprep.subr.bf16.mxu0 %v2269
    %2749 = vmatpush2.bf16.msra.mxu0 %v2268
    %2750 = vmatprep.subr.bf16.mxu0 %v2265
    %2751 = vmatpush2.bf16.msra.mxu0 %v2264
    %2752 = vmatprep.subr.bf16.mxu0 %v2261
    %2753 = vmatpush2.bf16.msra.mxu0 %v2260
    %2754 = vmatprep.subr.bf16.mxu0 %v2257
    %2755 = vmatpush2.bf16.msra.mxu0 %v2256
    %2756 = vmatprep.subr.bf16.mxu0 %v2253
    %2757 = vmatpush2.bf16.msra.mxu0 %v2252
    %2758 = vmatprep.subr.bf16.mxu0 %v2249
    %2759 = vmatpush2.bf16.msra.mxu0 %v2248
    %2760 = vmatprep.mubr.bf16.mxu0 %v1163
    %2761 = vmatmul.mubr.bf16.gmra.mxu0 %v1162
    %v2762 = vpop.f32.mrf.mxu0
    %v2763 = vadd.f32 %v1431, %v2762
    %v2764 = vpop.f32.mrf.mxu0
    %v2765 = vadd.f32 %v1435, %v2764
    %v2766 = vpop.f32.mrf.mxu0
    %v2767 = vpop.f32.mrf.mxu0
    %2768 = vdwg.mxu0
    %2769 = vmatprep.subr.bf16.mxu0 %v2309
    %2770 = vmatpush1.bf16.msra.mxu0 %v2308
    %2771 = vmatprep.subr.bf16.mxu0 %v2305
    %2772 = vmatpush1.bf16.msra.mxu0 %v2304
    %2773 = vmatprep.subr.bf16.mxu0 %v2301
    %2774 = vmatpush1.bf16.msra.mxu0 %v2300
    %2775 = vmatprep.subr.bf16.mxu0 %v2297
    %2776 = vmatpush1.bf16.msra.mxu0 %v2296
    %2777 = vmatprep.subr.bf16.mxu0 %v2293
    %2778 = vmatpush1.bf16.msra.mxu0 %v2292
    %2779 = vmatprep.subr.bf16.mxu0 %v2289
    %2780 = vmatpush1.bf16.msra.mxu0 %v2288
    %2781 = vmatprep.subr.bf16.mxu0 %v2285
    %2782 = vmatpush1.bf16.msra.mxu0 %v2284
    %2783 = vmatprep.subr.bf16.mxu0 %v2281
    %2784 = vmatpush1.bf16.msra.mxu0 %v2280
    %2785 = vmatprep.subr.bf16.mxu0 %v2341
    %2786 = vmatpush2.bf16.msra.mxu0 %v2340
    %2787 = vmatprep.subr.bf16.mxu0 %v2337
    %2788 = vmatpush2.bf16.msra.mxu0 %v2336
    %2789 = vmatprep.subr.bf16.mxu0 %v2333
    %2790 = vmatpush2.bf16.msra.mxu0 %v2332
    %2791 = vmatprep.subr.bf16.mxu0 %v2329
    %2792 = vmatpush2.bf16.msra.mxu0 %v2328
    %2793 = vmatprep.subr.bf16.mxu0 %v2325
    %2794 = vmatpush2.bf16.msra.mxu0 %v2324
    %2795 = vmatprep.subr.bf16.mxu0 %v2321
    %2796 = vmatpush2.bf16.msra.mxu0 %v2320
    %2797 = vmatprep.subr.bf16.mxu0 %v2317
    %2798 = vmatpush2.bf16.msra.mxu0 %v2316
    %2799 = vmatprep.subr.bf16.mxu0 %v2313
    %2800 = vmatpush2.bf16.msra.mxu0 %v2312
    %2801 = vmatprep.mubr.bf16.mxu0 %v1165
    %2802 = vmatmul.mubr.bf16.gmra.mxu0 %v1164
    %v2803 = vpop.f32.mrf.mxu0
    %v2804 = vadd.f32 %v2763, %v2803
    %v2805 = vpop.f32.mrf.mxu0
    %v2806 = vadd.f32 %v2765, %v2805
    %v2807 = vpop.f32.mrf.mxu0
    %v2808 = vpop.f32.mrf.mxu0
    %2809 = vdwg.mxu0
    %2810 = vmatprep.subr.bf16.mxu0 %v2373
    %2811 = vmatpush1.bf16.msra.mxu0 %v2372
    %2812 = vmatprep.subr.bf16.mxu0 %v2369
    %2813 = vmatpush1.bf16.msra.mxu0 %v2368
    %2814 = vmatprep.subr.bf16.mxu0 %v2365
    %2815 = vmatpush1.bf16.msra.mxu0 %v2364
    %2816 = vmatprep.subr.bf16.mxu0 %v2361
    %2817 = vmatpush1.bf16.msra.mxu0 %v2360
    %2818 = vmatprep.subr.bf16.mxu0 %v2357
    %2819 = vmatpush1.bf16.msra.mxu0 %v2356
    %2820 = vmatprep.subr.bf16.mxu0 %v2353
    %2821 = vmatpush1.bf16.msra.mxu0 %v2352
    %2822 = vmatprep.subr.bf16.mxu0 %v2349
    %2823 = vmatpush1.bf16.msra.mxu0 %v2348
    %2824 = vmatprep.subr.bf16.mxu0 %v2345
    %2825 = vmatpush1.bf16.msra.mxu0 %v2344
    %2826 = vmatprep.subr.bf16.mxu0 %v2405
    %2827 = vmatpush2.bf16.msra.mxu0 %v2404
    %2828 = vmatprep.subr.bf16.mxu0 %v2401
    %2829 = vmatpush2.bf16.msra.mxu0 %v2400
    %2830 = vmatprep.subr.bf16.mxu0 %v2397
    %2831 = vmatpush2.bf16.msra.mxu0 %v2396
    %2832 = vmatprep.subr.bf16.mxu0 %v2393
    %2833 = vmatpush2.bf16.msra.mxu0 %v2392
    %2834 = vmatprep.subr.bf16.mxu0 %v2389
    %2835 = vmatpush2.bf16.msra.mxu0 %v2388
    %2836 = vmatprep.subr.bf16.mxu0 %v2385
    %2837 = vmatpush2.bf16.msra.mxu0 %v2384
    %2838 = vmatprep.subr.bf16.mxu0 %v2381
    %2839 = vmatpush2.bf16.msra.mxu0 %v2380
    %2840 = vmatprep.subr.bf16.mxu0 %v2377
    %2841 = vmatpush2.bf16.msra.mxu0 %v2376
    %2842 = vmatprep.mubr.bf16.mxu0 %v1167
    %2843 = vmatmul.mubr.bf16.gmra.mxu0 %v1166
    %v2844 = vpop.f32.mrf.mxu0
    %v2845 = vadd.f32 %v2804, %v2844
    %v2846 = vpop.f32.mrf.mxu0
    %v2847 = vadd.f32 %v2806, %v2846
    %v2848 = vpop.f32.mrf.mxu0
    %v2849 = vpop.f32.mrf.mxu0
    %2850 = vdwg.mxu0
    %2851 = vmatprep.subr.bf16.mxu0 %v2437
    %2852 = vmatpush1.bf16.msra.mxu0 %v2436
    %2853 = vmatprep.subr.bf16.mxu0 %v2433
    %2854 = vmatpush1.bf16.msra.mxu0 %v2432
    %2855 = vmatprep.subr.bf16.mxu0 %v2429
    %2856 = vmatpush1.bf16.msra.mxu0 %v2428
    %2857 = vmatprep.subr.bf16.mxu0 %v2425
    %2858 = vmatpush1.bf16.msra.mxu0 %v2424
    %2859 = vmatprep.subr.bf16.mxu0 %v2421
    %2860 = vmatpush1.bf16.msra.mxu0 %v2420
    %2861 = vmatprep.subr.bf16.mxu0 %v2417
    %2862 = vmatpush1.bf16.msra.mxu0 %v2416
    %2863 = vmatprep.subr.bf16.mxu0 %v2413
    %2864 = vmatpush1.bf16.msra.mxu0 %v2412
    %2865 = vmatprep.subr.bf16.mxu0 %v2409
    %2866 = vmatpush1.bf16.msra.mxu0 %v2408
    %2867 = vmatprep.subr.bf16.mxu0 %v2469
    %2868 = vmatpush2.bf16.msra.mxu0 %v2468
    %2869 = vmatprep.subr.bf16.mxu0 %v2465
    %2870 = vmatpush2.bf16.msra.mxu0 %v2464
    %2871 = vmatprep.subr.bf16.mxu0 %v2461
    %2872 = vmatpush2.bf16.msra.mxu0 %v2460
    %2873 = vmatprep.subr.bf16.mxu0 %v2457
    %2874 = vmatpush2.bf16.msra.mxu0 %v2456
    %2875 = vmatprep.subr.bf16.mxu0 %v2453
    %2876 = vmatpush2.bf16.msra.mxu0 %v2452
    %2877 = vmatprep.subr.bf16.mxu0 %v2449
    %2878 = vmatpush2.bf16.msra.mxu0 %v2448
    %2879 = vmatprep.subr.bf16.mxu0 %v2445
    %2880 = vmatpush2.bf16.msra.mxu0 %v2444
    %2881 = vmatprep.subr.bf16.mxu0 %v2441
    %2882 = vmatpush2.bf16.msra.mxu0 %v2440
    %2883 = vmatprep.mubr.bf16.mxu0 %v1169
    %2884 = vmatmul.mubr.bf16.gmra.mxu0 %v1168
    %v2885 = vpop.f32.mrf.mxu0
    %v2886 = vadd.f32 %v2845, %v2885
    %v2887 = vpop.f32.mrf.mxu0
    %v2888 = vadd.f32 %v2847, %v2887
    %v2889 = vpop.f32.mrf.mxu0
    %v2890 = vpop.f32.mrf.mxu0
    %2891 = vdwg.mxu0
    %2892 = vmatprep.subr.bf16.mxu0 %v2247
    %2893 = vmatpush1.bf16.msra.mxu0 %v2246
    %2894 = vmatprep.subr.bf16.mxu0 %v2243
    %2895 = vmatpush1.bf16.msra.mxu0 %v2242
    %2896 = vmatprep.subr.bf16.mxu0 %v2239
    %2897 = vmatpush1.bf16.msra.mxu0 %v2238
    %2898 = vmatprep.subr.bf16.mxu0 %v2235
    %2899 = vmatpush1.bf16.msra.mxu0 %v2234
    %2900 = vmatprep.subr.bf16.mxu0 %v2231
    %2901 = vmatpush1.bf16.msra.mxu0 %v2230
    %2902 = vmatprep.subr.bf16.mxu0 %v2227
    %2903 = vmatpush1.bf16.msra.mxu0 %v2226
    %2904 = vmatprep.subr.bf16.mxu0 %v2223
    %2905 = vmatpush1.bf16.msra.mxu0 %v2222
    %2906 = vmatprep.subr.bf16.mxu0 %v2219
    %2907 = vmatpush1.bf16.msra.mxu0 %v2218
    %2908 = vmatprep.subr.bf16.mxu0 %v2279
    %2909 = vmatpush2.bf16.msra.mxu0 %v2278
    %2910 = vmatprep.subr.bf16.mxu0 %v2275
    %2911 = vmatpush2.bf16.msra.mxu0 %v2274
    %2912 = vmatprep.subr.bf16.mxu0 %v2271
    %2913 = vmatpush2.bf16.msra.mxu0 %v2270
    %2914 = vmatprep.subr.bf16.mxu0 %v2267
    %2915 = vmatpush2.bf16.msra.mxu0 %v2266
    %2916 = vmatprep.subr.bf16.mxu0 %v2263
    %2917 = vmatpush2.bf16.msra.mxu0 %v2262
    %2918 = vmatprep.subr.bf16.mxu0 %v2259
    %2919 = vmatpush2.bf16.msra.mxu0 %v2258
    %2920 = vmatprep.subr.bf16.mxu0 %v2255
    %2921 = vmatpush2.bf16.msra.mxu0 %v2254
    %2922 = vmatprep.subr.bf16.mxu0 %v2251
    %2923 = vmatpush2.bf16.msra.mxu0 %v2250
    %2924 = vmatprep.mubr.bf16.mxu0 %v1163
    %2925 = vmatmul.mubr.bf16.gmra.mxu0 %v1162
    %v2926 = vpop.f32.mrf.mxu0
    %v2927 = vadd.f32 %v1439, %v2926
    %v2928 = vpop.f32.mrf.mxu0
    %v2929 = vadd.f32 %v1443, %v2928
    %v2930 = vpop.f32.mrf.mxu0
    %v2931 = vpop.f32.mrf.mxu0
    %2932 = vdwg.mxu0
    %2933 = vmatprep.subr.bf16.mxu0 %v2311
    %2934 = vmatpush1.bf16.msra.mxu0 %v2310
    %2935 = vmatprep.subr.bf16.mxu0 %v2307
    %2936 = vmatpush1.bf16.msra.mxu0 %v2306
    %2937 = vmatprep.subr.bf16.mxu0 %v2303
    %2938 = vmatpush1.bf16.msra.mxu0 %v2302
    %2939 = vmatprep.subr.bf16.mxu0 %v2299
    %2940 = vmatpush1.bf16.msra.mxu0 %v2298
    %2941 = vmatprep.subr.bf16.mxu0 %v2295
    %2942 = vmatpush1.bf16.msra.mxu0 %v2294
    %2943 = vmatprep.subr.bf16.mxu0 %v2291
    %2944 = vmatpush1.bf16.msra.mxu0 %v2290
    %2945 = vmatprep.subr.bf16.mxu0 %v2287
    %2946 = vmatpush1.bf16.msra.mxu0 %v2286
    %2947 = vmatprep.subr.bf16.mxu0 %v2283
    %2948 = vmatpush1.bf16.msra.mxu0 %v2282
    %2949 = vmatprep.subr.bf16.mxu0 %v2343
    %2950 = vmatpush2.bf16.msra.mxu0 %v2342
    %2951 = vmatprep.subr.bf16.mxu0 %v2339
    %2952 = vmatpush2.bf16.msra.mxu0 %v2338
    %2953 = vmatprep.subr.bf16.mxu0 %v2335
    %2954 = vmatpush2.bf16.msra.mxu0 %v2334
    %2955 = vmatprep.subr.bf16.mxu0 %v2331
    %2956 = vmatpush2.bf16.msra.mxu0 %v2330
    %2957 = vmatprep.subr.bf16.mxu0 %v2327
    %2958 = vmatpush2.bf16.msra.mxu0 %v2326
    %2959 = vmatprep.subr.bf16.mxu0 %v2323
    %2960 = vmatpush2.bf16.msra.mxu0 %v2322
    %2961 = vmatprep.subr.bf16.mxu0 %v2319
    %2962 = vmatpush2.bf16.msra.mxu0 %v2318
    %2963 = vmatprep.subr.bf16.mxu0 %v2315
    %2964 = vmatpush2.bf16.msra.mxu0 %v2314
    %2965 = vmatprep.mubr.bf16.mxu0 %v1165
    %2966 = vmatmul.mubr.bf16.gmra.mxu0 %v1164
    %v2967 = vpop.f32.mrf.mxu0
    %v2968 = vadd.f32 %v2927, %v2967
    %v2969 = vpop.f32.mrf.mxu0
    %v2970 = vadd.f32 %v2929, %v2969
    %v2971 = vpop.f32.mrf.mxu0
    %v2972 = vpop.f32.mrf.mxu0
    %2973 = vdwg.mxu0
    %2974 = vmatprep.subr.bf16.mxu0 %v2375
    %2975 = vmatpush1.bf16.msra.mxu0 %v2374
    %2976 = vmatprep.subr.bf16.mxu0 %v2371
    %2977 = vmatpush1.bf16.msra.mxu0 %v2370
    %2978 = vmatprep.subr.bf16.mxu0 %v2367
    %2979 = vmatpush1.bf16.msra.mxu0 %v2366
    %2980 = vmatprep.subr.bf16.mxu0 %v2363
    %2981 = vmatpush1.bf16.msra.mxu0 %v2362
    %2982 = vmatprep.subr.bf16.mxu0 %v2359
    %2983 = vmatpush1.bf16.msra.mxu0 %v2358
    %2984 = vmatprep.subr.bf16.mxu0 %v2355
    %2985 = vmatpush1.bf16.msra.mxu0 %v2354
    %2986 = vmatprep.subr.bf16.mxu0 %v2351
    %2987 = vmatpush1.bf16.msra.mxu0 %v2350
    %2988 = vmatprep.subr.bf16.mxu0 %v2347
    %2989 = vmatpush1.bf16.msra.mxu0 %v2346
    %2990 = vmatprep.subr.bf16.mxu0 %v2407
    %2991 = vmatpush2.bf16.msra.mxu0 %v2406
    %2992 = vmatprep.subr.bf16.mxu0 %v2403
    %2993 = vmatpush2.bf16.msra.mxu0 %v2402
    %2994 = vmatprep.subr.bf16.mxu0 %v2399
    %2995 = vmatpush2.bf16.msra.mxu0 %v2398
    %2996 = vmatprep.subr.bf16.mxu0 %v2395
    %2997 = vmatpush2.bf16.msra.mxu0 %v2394
    %2998 = vmatprep.subr.bf16.mxu0 %v2391
    %2999 = vmatpush2.bf16.msra.mxu0 %v2390
    %3000 = vmatprep.subr.bf16.mxu0 %v2387
    %3001 = vmatpush2.bf16.msra.mxu0 %v2386
    %3002 = vmatprep.subr.bf16.mxu0 %v2383
    %3003 = vmatpush2.bf16.msra.mxu0 %v2382
    %3004 = vmatprep.subr.bf16.mxu0 %v2379
    %3005 = vmatpush2.bf16.msra.mxu0 %v2378
    %3006 = vmatprep.mubr.bf16.mxu0 %v1167
    %3007 = vmatmul.mubr.bf16.gmra.mxu0 %v1166
    %v3008 = vpop.f32.mrf.mxu0
    %v3009 = vadd.f32 %v2968, %v3008
    %v3010 = vpop.f32.mrf.mxu0
    %v3011 = vadd.f32 %v2970, %v3010
    %v3012 = vpop.f32.mrf.mxu0
    %v3013 = vpop.f32.mrf.mxu0
    %3014 = vdwg.mxu0
    %3015 = vmatprep.subr.bf16.mxu0 %v2439
    %3016 = vmatpush1.bf16.msra.mxu0 %v2438
    %3017 = vmatprep.subr.bf16.mxu0 %v2435
    %3018 = vmatpush1.bf16.msra.mxu0 %v2434
    %3019 = vmatprep.subr.bf16.mxu0 %v2431
    %3020 = vmatpush1.bf16.msra.mxu0 %v2430
    %3021 = vmatprep.subr.bf16.mxu0 %v2427
    %3022 = vmatpush1.bf16.msra.mxu0 %v2426
    %3023 = vmatprep.subr.bf16.mxu0 %v2423
    %3024 = vmatpush1.bf16.msra.mxu0 %v2422
    %3025 = vmatprep.subr.bf16.mxu0 %v2419
    %3026 = vmatpush1.bf16.msra.mxu0 %v2418
    %3027 = vmatprep.subr.bf16.mxu0 %v2415
    %3028 = vmatpush1.bf16.msra.mxu0 %v2414
    %3029 = vmatprep.subr.bf16.mxu0 %v2411
    %3030 = vmatpush1.bf16.msra.mxu0 %v2410
    %3031 = vmatprep.subr.bf16.mxu0 %v2471
    %3032 = vmatpush2.bf16.msra.mxu0 %v2470
    %3033 = vmatprep.subr.bf16.mxu0 %v2467
    %3034 = vmatpush2.bf16.msra.mxu0 %v2466
    %3035 = vmatprep.subr.bf16.mxu0 %v2463
    %3036 = vmatpush2.bf16.msra.mxu0 %v2462
    %3037 = vmatprep.subr.bf16.mxu0 %v2459
    %3038 = vmatpush2.bf16.msra.mxu0 %v2458
    %3039 = vmatprep.subr.bf16.mxu0 %v2455
    %3040 = vmatpush2.bf16.msra.mxu0 %v2454
    %3041 = vmatprep.subr.bf16.mxu0 %v2451
    %3042 = vmatpush2.bf16.msra.mxu0 %v2450
    %3043 = vmatprep.subr.bf16.mxu0 %v2447
    %3044 = vmatpush2.bf16.msra.mxu0 %v2446
    %3045 = vmatprep.subr.bf16.mxu0 %v2443
    %3046 = vmatpush2.bf16.msra.mxu0 %v2442
    %3047 = vmatprep.mubr.bf16.mxu0 %v1169
    %3048 = vmatmul.mubr.bf16.gmra.mxu0 %v1168
    %v3049 = vpop.f32.mrf.mxu0
    %v3050 = vadd.f32 %v3009, %v3049
    %v3051 = vpop.f32.mrf.mxu0
    %v3052 = vadd.f32 %v3011, %v3051
    %v3053 = vpop.f32.mrf.mxu0
    %v3054 = vpop.f32.mrf.mxu0
    %3055 = vdwg.mxu0
    %v3056 = vmax.f32 %v2886, 0.0
    %v3057 = vmax.f32 %v2888, 0.0
    %v3058 = vmax.f32 %v3050, 0.0
    %v3059 = vmax.f32 %v3052, 0.0
    %v3060 = vpack.c.bf16 %v3056, %v3056
    %v3061 = vpack.c.bf16 %v3057, %v3057
    %v3062 = vpack.c.bf16 %v3058, %v3058
    %v3063 = vpack.c.bf16 %v3059, %v3059
    %v3064 = vld [vmem:[#allocation6] sm:$0xff]
    %v3065 = vld [vmem:[#allocation6 + $0x8] sm:$0xff]
    %v3066 = vld [vmem:[#allocation6 + $0x10] sm:$0xff]
    %v3067 = vld [vmem:[#allocation6 + $0x18] sm:$0xff]
    %v3068 = vld [vmem:[#allocation6 + $0x20] sm:$0xff]
    %v3069 = vld [vmem:[#allocation6 + $0x28] sm:$0xff]
    %v3070 = vld [vmem:[#allocation6 + $0x30] sm:$0xff]
    %v3071 = vld [vmem:[#allocation6 + $0x38] sm:$0xff]
    %v3072 = vld [vmem:[#allocation6 + $0x40] sm:$0xff]
    %v3073 = vld [vmem:[#allocation6 + $0x48] sm:$0xff]
    %v3074 = vld [vmem:[#allocation6 + $0x50] sm:$0xff]
    %v3075 = vld [vmem:[#allocation6 + $0x58] sm:$0xff]
    %v3076 = vld [vmem:[#allocation6 + $0x60] sm:$0xff]
    %v3077 = vld [vmem:[#allocation6 + $0x68] sm:$0xff]
    %v3078 = vld [vmem:[#allocation6 + $0x70] sm:$0xff]
    %v3079 = vld [vmem:[#allocation6 + $0x78] sm:$0xff]
    %v3080 = vld [vmem:[#allocation6 + $0x80] sm:$0xff]
    %v3081 = vld [vmem:[#allocation6 + $0x88] sm:$0xff]
    %v3082 = vld [vmem:[#allocation6 + $0x90] sm:$0xff]
    %v3083 = vld [vmem:[#allocation6 + $0x98] sm:$0xff]
    %v3084 = vld [vmem:[#allocation6 + $0xa0] sm:$0xff]
    %v3085 = vld [vmem:[#allocation6 + $0xa8] sm:$0xff]
    %v3086 = vld [vmem:[#allocation6 + $0xb0] sm:$0xff]
    %v3087 = vld [vmem:[#allocation6 + $0xb8] sm:$0xff]
    %v3088 = vld [vmem:[#allocation6 + $0xc0] sm:$0xff]
    %v3089 = vld [vmem:[#allocation6 + $0xc8] sm:$0xff]
    %v3090 = vld [vmem:[#allocation6 + $0xd0] sm:$0xff]
    %v3091 = vld [vmem:[#allocation6 + $0xd8] sm:$0xff]
    %v3092 = vld [vmem:[#allocation6 + $0xe0] sm:$0xff]
    %v3093 = vld [vmem:[#allocation6 + $0xe8] sm:$0xff]
    %v3094 = vld [vmem:[#allocation6 + $0xf0] sm:$0xff]
    %v3095 = vld [vmem:[#allocation6 + $0xf8] sm:$0xff]
    %v3096 = vld [vmem:[#allocation6 + $0x100] sm:$0xff]
    %v3097 = vld [vmem:[#allocation6 + $0x108] sm:$0xff]
    %v3098 = vld [vmem:[#allocation6 + $0x110] sm:$0xff]
    %v3099 = vld [vmem:[#allocation6 + $0x118] sm:$0xff]
    %v3100 = vld [vmem:[#allocation6 + $0x120] sm:$0xff]
    %v3101 = vld [vmem:[#allocation6 + $0x128] sm:$0xff]
    %v3102 = vld [vmem:[#allocation6 + $0x130] sm:$0xff]
    %v3103 = vld [vmem:[#allocation6 + $0x138] sm:$0xff]
    %v3104 = vld [vmem:[#allocation6 + $0x140] sm:$0xff]
    %v3105 = vld [vmem:[#allocation6 + $0x148] sm:$0xff]
    %v3106 = vld [vmem:[#allocation6 + $0x150] sm:$0xff]
    %v3107 = vld [vmem:[#allocation6 + $0x158] sm:$0xff]
    %v3108 = vld [vmem:[#allocation6 + $0x160] sm:$0xff]
    %v3109 = vld [vmem:[#allocation6 + $0x168] sm:$0xff]
    %v3110 = vld [vmem:[#allocation6 + $0x170] sm:$0xff]
    %v3111 = vld [vmem:[#allocation6 + $0x178] sm:$0xff]
    %v3112 = vld [vmem:[#allocation6 + $0x180] sm:$0xff]
    %v3113 = vld [vmem:[#allocation6 + $0x188] sm:$0xff]
    %v3114 = vld [vmem:[#allocation6 + $0x190] sm:$0xff]
    %v3115 = vld [vmem:[#allocation6 + $0x198] sm:$0xff]
    %v3116 = vld [vmem:[#allocation6 + $0x1a0] sm:$0xff]
    %v3117 = vld [vmem:[#allocation6 + $0x1a8] sm:$0xff]
    %v3118 = vld [vmem:[#allocation6 + $0x1b0] sm:$0xff]
    %v3119 = vld [vmem:[#allocation6 + $0x1b8] sm:$0xff]
    %v3120 = vld [vmem:[#allocation6 + $0x1c0] sm:$0xff]
    %v3121 = vld [vmem:[#allocation6 + $0x1c8] sm:$0xff]
    %v3122 = vld [vmem:[#allocation6 + $0x1d0] sm:$0xff]
    %v3123 = vld [vmem:[#allocation6 + $0x1d8] sm:$0xff]
    %v3124 = vld [vmem:[#allocation6 + $0x1e0] sm:$0xff]
    %v3125 = vld [vmem:[#allocation6 + $0x1e8] sm:$0xff]
    %v3126 = vld [vmem:[#allocation6 + $0x1f0] sm:$0xff]
    %v3127 = vld [vmem:[#allocation6 + $0x1f8] sm:$0xff]
    %v3128 = vld [vmem:[%s6] sm:$0x3]
    %v3130 = vlaneseq
    %v3131 = vshrl.u32 %v3130, 7
    %v3132 = vsub.s32 0, %v3131
    %v3133 = vrot.slane %v3128, %v3132
    %v3134 = vlaneseq
    %v3135 = vshrl.u32 %v3134, 7
    %v3136 = vsub.s32 1, %v3135
    %v3137 = vrot.slane %v3128, %v3136
    %v3204 = vunpack.c.l.b16 %v3064
    %v3205 = vunpack.c.h.b16 %v3064
    %v3206 = vunpack.c.l.b16 %v3065
    %v3207 = vunpack.c.h.b16 %v3065
    %v3208 = vunpack.c.l.b16 %v3066
    %v3209 = vunpack.c.h.b16 %v3066
    %v3210 = vunpack.c.l.b16 %v3067
    %v3211 = vunpack.c.h.b16 %v3067
    %v3212 = vunpack.c.l.b16 %v3068
    %v3213 = vunpack.c.h.b16 %v3068
    %v3214 = vunpack.c.l.b16 %v3069
    %v3215 = vunpack.c.h.b16 %v3069
    %v3216 = vunpack.c.l.b16 %v3070
    %v3217 = vunpack.c.h.b16 %v3070
    %v3218 = vunpack.c.l.b16 %v3071
    %v3219 = vunpack.c.h.b16 %v3071
    %v3220 = vunpack.c.l.b16 %v3072
    %v3221 = vunpack.c.h.b16 %v3072
    %v3222 = vunpack.c.l.b16 %v3073
    %v3223 = vunpack.c.h.b16 %v3073
    %v3224 = vunpack.c.l.b16 %v3074
    %v3225 = vunpack.c.h.b16 %v3074
    %v3226 = vunpack.c.l.b16 %v3075
    %v3227 = vunpack.c.h.b16 %v3075
    %v3228 = vunpack.c.l.b16 %v3076
    %v3229 = vunpack.c.h.b16 %v3076
    %v3230 = vunpack.c.l.b16 %v3077
    %v3231 = vunpack.c.h.b16 %v3077
    %v3232 = vunpack.c.l.b16 %v3078
    %v3233 = vunpack.c.h.b16 %v3078
    %v3234 = vunpack.c.l.b16 %v3079
    %v3235 = vunpack.c.h.b16 %v3079
    %v3236 = vunpack.c.l.b16 %v3080
    %v3237 = vunpack.c.h.b16 %v3080
    %v3238 = vunpack.c.l.b16 %v3081
    %v3239 = vunpack.c.h.b16 %v3081
    %v3240 = vunpack.c.l.b16 %v3082
    %v3241 = vunpack.c.h.b16 %v3082
    %v3242 = vunpack.c.l.b16 %v3083
    %v3243 = vunpack.c.h.b16 %v3083
    %v3244 = vunpack.c.l.b16 %v3084
    %v3245 = vunpack.c.h.b16 %v3084
    %v3246 = vunpack.c.l.b16 %v3085
    %v3247 = vunpack.c.h.b16 %v3085
    %v3248 = vunpack.c.l.b16 %v3086
    %v3249 = vunpack.c.h.b16 %v3086
    %v3250 = vunpack.c.l.b16 %v3087
    %v3251 = vunpack.c.h.b16 %v3087
    %v3252 = vunpack.c.l.b16 %v3088
    %v3253 = vunpack.c.h.b16 %v3088
    %v3254 = vunpack.c.l.b16 %v3089
    %v3255 = vunpack.c.h.b16 %v3089
    %v3256 = vunpack.c.l.b16 %v3090
    %v3257 = vunpack.c.h.b16 %v3090
    %v3258 = vunpack.c.l.b16 %v3091
    %v3259 = vunpack.c.h.b16 %v3091
    %v3260 = vunpack.c.l.b16 %v3092
    %v3261 = vunpack.c.h.b16 %v3092
    %v3262 = vunpack.c.l.b16 %v3093
    %v3263 = vunpack.c.h.b16 %v3093
    %v3264 = vunpack.c.l.b16 %v3094
    %v3265 = vunpack.c.h.b16 %v3094
    %v3266 = vunpack.c.l.b16 %v3095
    %v3267 = vunpack.c.h.b16 %v3095
    %v3268 = vunpack.c.l.b16 %v3096
    %v3269 = vunpack.c.h.b16 %v3096
    %v3270 = vunpack.c.l.b16 %v3097
    %v3271 = vunpack.c.h.b16 %v3097
    %v3272 = vunpack.c.l.b16 %v3098
    %v3273 = vunpack.c.h.b16 %v3098
    %v3274 = vunpack.c.l.b16 %v3099
    %v3275 = vunpack.c.h.b16 %v3099
    %v3276 = vunpack.c.l.b16 %v3100
    %v3277 = vunpack.c.h.b16 %v3100
    %v3278 = vunpack.c.l.b16 %v3101
    %v3279 = vunpack.c.h.b16 %v3101
    %v3280 = vunpack.c.l.b16 %v3102
    %v3281 = vunpack.c.h.b16 %v3102
    %v3282 = vunpack.c.l.b16 %v3103
    %v3283 = vunpack.c.h.b16 %v3103
    %v3284 = vunpack.c.l.b16 %v3104
    %v3285 = vunpack.c.h.b16 %v3104
    %v3286 = vunpack.c.l.b16 %v3105
    %v3287 = vunpack.c.h.b16 %v3105
    %v3288 = vunpack.c.l.b16 %v3106
    %v3289 = vunpack.c.h.b16 %v3106
    %v3290 = vunpack.c.l.b16 %v3107
    %v3291 = vunpack.c.h.b16 %v3107
    %v3292 = vunpack.c.l.b16 %v3108
    %v3293 = vunpack.c.h.b16 %v3108
    %v3294 = vunpack.c.l.b16 %v3109
    %v3295 = vunpack.c.h.b16 %v3109
    %v3296 = vunpack.c.l.b16 %v3110
    %v3297 = vunpack.c.h.b16 %v3110
    %v3298 = vunpack.c.l.b16 %v3111
    %v3299 = vunpack.c.h.b16 %v3111
    %v3300 = vunpack.c.l.b16 %v3112
    %v3301 = vunpack.c.h.b16 %v3112
    %v3302 = vunpack.c.l.b16 %v3113
    %v3303 = vunpack.c.h.b16 %v3113
    %v3304 = vunpack.c.l.b16 %v3114
    %v3305 = vunpack.c.h.b16 %v3114
    %v3306 = vunpack.c.l.b16 %v3115
    %v3307 = vunpack.c.h.b16 %v3115
    %v3308 = vunpack.c.l.b16 %v3116
    %v3309 = vunpack.c.h.b16 %v3116
    %v3310 = vunpack.c.l.b16 %v3117
    %v3311 = vunpack.c.h.b16 %v3117
    %v3312 = vunpack.c.l.b16 %v3118
    %v3313 = vunpack.c.h.b16 %v3118
    %v3314 = vunpack.c.l.b16 %v3119
    %v3315 = vunpack.c.h.b16 %v3119
    %v3316 = vunpack.c.l.b16 %v3120
    %v3317 = vunpack.c.h.b16 %v3120
    %v3318 = vunpack.c.l.b16 %v3121
    %v3319 = vunpack.c.h.b16 %v3121
    %v3320 = vunpack.c.l.b16 %v3122
    %v3321 = vunpack.c.h.b16 %v3122
    %v3322 = vunpack.c.l.b16 %v3123
    %v3323 = vunpack.c.h.b16 %v3123
    %v3324 = vunpack.c.l.b16 %v3124
    %v3325 = vunpack.c.h.b16 %v3124
    %v3326 = vunpack.c.l.b16 %v3125
    %v3327 = vunpack.c.h.b16 %v3125
    %v3328 = vunpack.c.l.b16 %v3126
    %v3329 = vunpack.c.h.b16 %v3126
    %v3330 = vunpack.c.l.b16 %v3127
    %v3331 = vunpack.c.h.b16 %v3127
    %v3332 = vpack.c.b16 %v3206, %v3204
    %v3333 = vpack.c.b16 %v3207, %v3205
    %v3334 = vpack.c.b16 %v3210, %v3208
    %v3335 = vpack.c.b16 %v3211, %v3209
    %v3336 = vpack.c.b16 %v3214, %v3212
    %v3337 = vpack.c.b16 %v3215, %v3213
    %v3338 = vpack.c.b16 %v3218, %v3216
    %v3339 = vpack.c.b16 %v3219, %v3217
    %v3340 = vpack.c.b16 %v3222, %v3220
    %v3341 = vpack.c.b16 %v3223, %v3221
    %v3342 = vpack.c.b16 %v3226, %v3224
    %v3343 = vpack.c.b16 %v3227, %v3225
    %v3344 = vpack.c.b16 %v3230, %v3228
    %v3345 = vpack.c.b16 %v3231, %v3229
    %v3346 = vpack.c.b16 %v3234, %v3232
    %v3347 = vpack.c.b16 %v3235, %v3233
    %v3348 = vpack.c.b16 %v3238, %v3236
    %v3349 = vpack.c.b16 %v3239, %v3237
    %v3350 = vpack.c.b16 %v3242, %v3240
    %v3351 = vpack.c.b16 %v3243, %v3241
    %v3352 = vpack.c.b16 %v3246, %v3244
    %v3353 = vpack.c.b16 %v3247, %v3245
    %v3354 = vpack.c.b16 %v3250, %v3248
    %v3355 = vpack.c.b16 %v3251, %v3249
    %v3356 = vpack.c.b16 %v3254, %v3252
    %v3357 = vpack.c.b16 %v3255, %v3253
    %v3358 = vpack.c.b16 %v3258, %v3256
    %v3359 = vpack.c.b16 %v3259, %v3257
    %v3360 = vpack.c.b16 %v3262, %v3260
    %v3361 = vpack.c.b16 %v3263, %v3261
    %v3362 = vpack.c.b16 %v3266, %v3264
    %v3363 = vpack.c.b16 %v3267, %v3265
    %v3364 = vpack.c.b16 %v3270, %v3268
    %v3365 = vpack.c.b16 %v3271, %v3269
    %v3366 = vpack.c.b16 %v3274, %v3272
    %v3367 = vpack.c.b16 %v3275, %v3273
    %v3368 = vpack.c.b16 %v3278, %v3276
    %v3369 = vpack.c.b16 %v3279, %v3277
    %v3370 = vpack.c.b16 %v3282, %v3280
    %v3371 = vpack.c.b16 %v3283, %v3281
    %v3372 = vpack.c.b16 %v3286, %v3284
    %v3373 = vpack.c.b16 %v3287, %v3285
    %v3374 = vpack.c.b16 %v3290, %v3288
    %v3375 = vpack.c.b16 %v3291, %v3289
    %v3376 = vpack.c.b16 %v3294, %v3292
    %v3377 = vpack.c.b16 %v3295, %v3293
    %v3378 = vpack.c.b16 %v3298, %v3296
    %v3379 = vpack.c.b16 %v3299, %v3297
    %v3380 = vpack.c.b16 %v3302, %v3300
    %v3381 = vpack.c.b16 %v3303, %v3301
    %v3382 = vpack.c.b16 %v3306, %v3304
    %v3383 = vpack.c.b16 %v3307, %v3305
    %v3384 = vpack.c.b16 %v3310, %v3308
    %v3385 = vpack.c.b16 %v3311, %v3309
    %v3386 = vpack.c.b16 %v3314, %v3312
    %v3387 = vpack.c.b16 %v3315, %v3313
    %v3388 = vpack.c.b16 %v3318, %v3316
    %v3389 = vpack.c.b16 %v3319, %v3317
    %v3390 = vpack.c.b16 %v3322, %v3320
    %v3391 = vpack.c.b16 %v3323, %v3321
    %v3392 = vpack.c.b16 %v3326, %v3324
    %v3393 = vpack.c.b16 %v3327, %v3325
    %v3394 = vpack.c.b16 %v3330, %v3328
    %v3395 = vpack.c.b16 %v3331, %v3329
    %3460 = vmatprep.subr.bf16.mxu0 %v3347
    %3461 = vmatpush1.bf16.msra.mxu0 %v3346
    %3462 = vmatprep.subr.bf16.mxu0 %v3345
    %3463 = vmatpush1.bf16.msra.mxu0 %v3344
    %3464 = vmatprep.subr.bf16.mxu0 %v3343
    %3465 = vmatpush1.bf16.msra.mxu0 %v3342
    %3466 = vmatprep.subr.bf16.mxu0 %v3341
    %3467 = vmatpush1.bf16.msra.mxu0 %v3340
    %3468 = vmatprep.subr.bf16.mxu0 %v3339
    %3469 = vmatpush1.bf16.msra.mxu0 %v3338
    %3470 = vmatprep.subr.bf16.mxu0 %v3337
    %3471 = vmatpush1.bf16.msra.mxu0 %v3336
    %3472 = vmatprep.subr.bf16.mxu0 %v3335
    %3473 = vmatpush1.bf16.msra.mxu0 %v3334
    %3474 = vmatprep.subr.bf16.mxu0 %v3333
    %3475 = vmatpush1.bf16.msra.mxu0 %v3332
    %3476 = vmatprep.subr.bf16.mxu0 %v3363
    %3477 = vmatpush2.bf16.msra.mxu0 %v3362
    %3478 = vmatprep.subr.bf16.mxu0 %v3361
    %3479 = vmatpush2.bf16.msra.mxu0 %v3360
    %3480 = vmatprep.subr.bf16.mxu0 %v3359
    %3481 = vmatpush2.bf16.msra.mxu0 %v3358
    %3482 = vmatprep.subr.bf16.mxu0 %v3357
    %3483 = vmatpush2.bf16.msra.mxu0 %v3356
    %3484 = vmatprep.subr.bf16.mxu0 %v3355
    %3485 = vmatpush2.bf16.msra.mxu0 %v3354
    %3486 = vmatprep.subr.bf16.mxu0 %v3353
    %3487 = vmatpush2.bf16.msra.mxu0 %v3352
    %3488 = vmatprep.subr.bf16.mxu0 %v3351
    %3489 = vmatpush2.bf16.msra.mxu0 %v3350
    %3490 = vmatprep.subr.bf16.mxu0 %v3349
    %3491 = vmatpush2.bf16.msra.mxu0 %v3348
    %3492 = vmatprep.mubr.bf16.mxu0 %v3061
    %3493 = vmatmul.mubr.bf16.gmra.mxu0 %v3060
    %v3494 = vpop.f32.mrf.mxu0
    %v3495 = vadd.f32 %v3133, %v3494
    %v3496 = vpop.f32.mrf.mxu0
    %v3497 = vadd.f32 %v3137, %v3496
    %v3498 = vpop.f32.mrf.mxu0
    %v3499 = vpop.f32.mrf.mxu0
    %3500 = vdwg.mxu0
    %3501 = vmatprep.subr.bf16.mxu0 %v3379
    %3502 = vmatpush1.bf16.msra.mxu0 %v3378
    %3503 = vmatprep.subr.bf16.mxu0 %v3377
    %3504 = vmatpush1.bf16.msra.mxu0 %v3376
    %3505 = vmatprep.subr.bf16.mxu0 %v3375
    %3506 = vmatpush1.bf16.msra.mxu0 %v3374
    %3507 = vmatprep.subr.bf16.mxu0 %v3373
    %3508 = vmatpush1.bf16.msra.mxu0 %v3372
    %3509 = vmatprep.subr.bf16.mxu0 %v3371
    %3510 = vmatpush1.bf16.msra.mxu0 %v3370
    %3511 = vmatprep.subr.bf16.mxu0 %v3369
    %3512 = vmatpush1.bf16.msra.mxu0 %v3368
    %3513 = vmatprep.subr.bf16.mxu0 %v3367
    %3514 = vmatpush1.bf16.msra.mxu0 %v3366
    %3515 = vmatprep.subr.bf16.mxu0 %v3365
    %3516 = vmatpush1.bf16.msra.mxu0 %v3364
    %3517 = vmatprep.subr.bf16.mxu0 %v3395
    %3518 = vmatpush2.bf16.msra.mxu0 %v3394
    %3519 = vmatprep.subr.bf16.mxu0 %v3393
    %3520 = vmatpush2.bf16.msra.mxu0 %v3392
    %3521 = vmatprep.subr.bf16.mxu0 %v3391
    %3522 = vmatpush2.bf16.msra.mxu0 %v3390
    %3523 = vmatprep.subr.bf16.mxu0 %v3389
    %3524 = vmatpush2.bf16.msra.mxu0 %v3388
    %3525 = vmatprep.subr.bf16.mxu0 %v3387
    %3526 = vmatpush2.bf16.msra.mxu0 %v3386
    %3527 = vmatprep.subr.bf16.mxu0 %v3385
    %3528 = vmatpush2.bf16.msra.mxu0 %v3384
    %3529 = vmatprep.subr.bf16.mxu0 %v3383
    %3530 = vmatpush2.bf16.msra.mxu0 %v3382
    %3531 = vmatprep.subr.bf16.mxu0 %v3381
    %3532 = vmatpush2.bf16.msra.mxu0 %v3380
    %3533 = vmatprep.mubr.bf16.mxu0 %v3063
    %3534 = vmatmul.mubr.bf16.gmra.mxu0 %v3062
    %v3535 = vpop.f32.mrf.mxu0
    %v3536 = vadd.f32 %v3495, %v3535
    %v3537 = vpop.f32.mrf.mxu0
    %v3538 = vadd.f32 %v3497, %v3537
    %v3539 = vpop.f32.mrf.mxu0
    %v3540 = vpop.f32.mrf.mxu0
    %3541 = vdwg.mxu0
    %v3542 = vmax.f32 %v3536, 0.0
    %v3543 = vmax.f32 %v3538, 0.0
    %v3544 = vpack.c.bf16 %v3542, %v3542
    %v3545 = vpack.c.bf16 %v3543, %v3543
    %v3546 = vld [vmem:[#allocation7] sm:$0xf]
    %v3547 = vld [vmem:[#allocation7 + $0x4] sm:$0xf]
    %v3548 = vld [vmem:[#allocation7 + $0x8] sm:$0xf]
    %v3549 = vld [vmem:[#allocation7 + $0xc] sm:$0xf]
    %v3550 = vld [vmem:[#allocation7 + $0x10] sm:$0xf]
    %v3551 = vld [vmem:[#allocation7 + $0x14] sm:$0xf]
    %v3552 = vld [vmem:[#allocation7 + $0x18] sm:$0xf]
    %v3553 = vld [vmem:[#allocation7 + $0x1c] sm:$0xf]
    %v3554 = vld [vmem:[#allocation7 + $0x20] sm:$0xf]
    %v3555 = vld [vmem:[#allocation7 + $0x24] sm:$0xf]
    %v3556 = vld [vmem:[#allocation7 + $0x28] sm:$0xf]
    %v3557 = vld [vmem:[#allocation7 + $0x2c] sm:$0xf]
    %v3558 = vld [vmem:[#allocation7 + $0x30] sm:$0xf]
    %v3559 = vld [vmem:[#allocation7 + $0x34] sm:$0xf]
    %v3560 = vld [vmem:[#allocation7 + $0x38] sm:$0xf]
    %v3561 = vld [vmem:[#allocation7 + $0x3c] sm:$0xf]
    %v3562 = vld [vmem:[#allocation7 + $0x40] sm:$0xf]
    %v3563 = vld [vmem:[#allocation7 + $0x44] sm:$0xf]
    %v3564 = vld [vmem:[#allocation7 + $0x48] sm:$0xf]
    %v3565 = vld [vmem:[#allocation7 + $0x4c] sm:$0xf]
    %v3566 = vld [vmem:[#allocation7 + $0x50] sm:$0xf]
    %v3567 = vld [vmem:[#allocation7 + $0x54] sm:$0xf]
    %v3568 = vld [vmem:[#allocation7 + $0x58] sm:$0xf]
    %v3569 = vld [vmem:[#allocation7 + $0x5c] sm:$0xf]
    %v3570 = vld [vmem:[#allocation7 + $0x60] sm:$0xf]
    %v3571 = vld [vmem:[#allocation7 + $0x64] sm:$0xf]
    %v3572 = vld [vmem:[#allocation7 + $0x68] sm:$0xf]
    %v3573 = vld [vmem:[#allocation7 + $0x6c] sm:$0xf]
    %v3574 = vld [vmem:[#allocation7 + $0x70] sm:$0xf]
    %v3575 = vld [vmem:[#allocation7 + $0x74] sm:$0xf]
    %v3576 = vld [vmem:[#allocation7 + $0x78] sm:$0xf]
    %v3577 = vld [vmem:[#allocation7 + $0x7c] sm:$0xf]
    %v3578 = vld [vmem:[%s8] sm:$0x1]
    %v3580 = vlaneseq
    %v3581 = vshrl.u32 %v3580, 7
    %v3582 = vsub.s32 0, %v3581
    %v3583 = vrot.slane %v3578, %v3582
    %v3617 = vunpack.c.l.b16 %v3546
    %v3618 = vunpack.c.l.b16 %v3547
    %v3619 = vunpack.c.l.b16 %v3548
    %v3620 = vunpack.c.l.b16 %v3549
    %v3621 = vunpack.c.l.b16 %v3550
    %v3622 = vunpack.c.l.b16 %v3551
    %v3623 = vunpack.c.l.b16 %v3552
    %v3624 = vunpack.c.l.b16 %v3553
    %v3625 = vunpack.c.l.b16 %v3554
    %v3626 = vunpack.c.l.b16 %v3555
    %v3627 = vunpack.c.l.b16 %v3556
    %v3628 = vunpack.c.l.b16 %v3557
    %v3629 = vunpack.c.l.b16 %v3558
    %v3630 = vunpack.c.l.b16 %v3559
    %v3631 = vunpack.c.l.b16 %v3560
    %v3632 = vunpack.c.l.b16 %v3561
    %v3633 = vunpack.c.l.b16 %v3562
    %v3634 = vunpack.c.l.b16 %v3563
    %v3635 = vunpack.c.l.b16 %v3564
    %v3636 = vunpack.c.l.b16 %v3565
    %v3637 = vunpack.c.l.b16 %v3566
    %v3638 = vunpack.c.l.b16 %v3567
    %v3639 = vunpack.c.l.b16 %v3568
    %v3640 = vunpack.c.l.b16 %v3569
    %v3641 = vunpack.c.l.b16 %v3570
    %v3642 = vunpack.c.l.b16 %v3571
    %v3643 = vunpack.c.l.b16 %v3572
    %v3644 = vunpack.c.l.b16 %v3573
    %v3645 = vunpack.c.l.b16 %v3574
    %v3646 = vunpack.c.l.b16 %v3575
    %v3647 = vunpack.c.l.b16 %v3576
    %v3648 = vunpack.c.l.b16 %v3577
    %v3649 = vpack.c.b16 %v3618, %v3617
    %v3650 = vpack.c.b16 %v3620, %v3619
    %v3651 = vpack.c.b16 %v3622, %v3621
    %v3652 = vpack.c.b16 %v3624, %v3623
    %v3653 = vpack.c.b16 %v3626, %v3625
    %v3654 = vpack.c.b16 %v3628, %v3627
    %v3655 = vpack.c.b16 %v3630, %v3629
    %v3656 = vpack.c.b16 %v3632, %v3631
    %v3657 = vpack.c.b16 %v3634, %v3633
    %v3658 = vpack.c.b16 %v3636, %v3635
    %v3659 = vpack.c.b16 %v3638, %v3637
    %v3660 = vpack.c.b16 %v3640, %v3639
    %v3661 = vpack.c.b16 %v3642, %v3641
    %v3662 = vpack.c.b16 %v3644, %v3643
    %v3663 = vpack.c.b16 %v3646, %v3645
    %v3664 = vpack.c.b16 %v3648, %v3647
    %3681 = vmatprep.subr.bf16.mxu0 0
    %3682 = vmatpush1.bf16.msra.mxu0 %v3656
    %3683 = vmatprep.subr.bf16.mxu0 0
    %3684 = vmatpush1.bf16.msra.mxu0 %v3655
    %3685 = vmatprep.subr.bf16.mxu0 0
    %3686 = vmatpush1.bf16.msra.mxu0 %v3654
    %3687 = vmatprep.subr.bf16.mxu0 0
    %3688 = vmatpush1.bf16.msra.mxu0 %v3653
    %3689 = vmatprep.subr.bf16.mxu0 0
    %3690 = vmatpush1.bf16.msra.mxu0 %v3652
    %3691 = vmatprep.subr.bf16.mxu0 0
    %3692 = vmatpush1.bf16.msra.mxu0 %v3651
    %3693 = vmatprep.subr.bf16.mxu0 0
    %3694 = vmatpush1.bf16.msra.mxu0 %v3650
    %3695 = vmatprep.subr.bf16.mxu0 0
    %3696 = vmatpush1.bf16.msra.mxu0 %v3649
    %3697 = vmatprep.subr.bf16.mxu0 0
    %3698 = vmatpush2.bf16.msra.mxu0 %v3664
    %3699 = vmatprep.subr.bf16.mxu0 0
    %3700 = vmatpush2.bf16.msra.mxu0 %v3663
    %3701 = vmatprep.subr.bf16.mxu0 0
    %3702 = vmatpush2.bf16.msra.mxu0 %v3662
    %3703 = vmatprep.subr.bf16.mxu0 0
    %3704 = vmatpush2.bf16.msra.mxu0 %v3661
    %3705 = vmatprep.subr.bf16.mxu0 0
    %3706 = vmatpush2.bf16.msra.mxu0 %v3660
    %3707 = vmatprep.subr.bf16.mxu0 0
    %3708 = vmatpush2.bf16.msra.mxu0 %v3659
    %3709 = vmatprep.subr.bf16.mxu0 0
    %3710 = vmatpush2.bf16.msra.mxu0 %v3658
    %3711 = vmatprep.subr.bf16.mxu0 0
    %3712 = vmatpush2.bf16.msra.mxu0 %v3657
    %3713 = vmatprep.mubr.bf16.mxu0 %v3545
    %3714 = vmatmul.mubr.bf16.gmra.mxu0 %v3544
    %v3715 = vpop.f32.mrf.mxu0
    %v3716 = vadd.f32 %v3583, %v3715
    %v3717 = vpop.f32.mrf.mxu0
    %v3718 = vpop.f32.mrf.mxu0
    %v3719 = vpop.f32.mrf.mxu0
    %3720 = vdwg.mxu0
    %v3721 = vmax.f32 %v3716, 0.0
    %v3722 = vpack.c.bf16 %v3721, %v3721
    %v3723 = vld [vmem:[#allocation9] sm:$0xff]
    %v3724 = vld [vmem:[#allocation9 + $0x8] sm:$0xff]
    %v3725 = vld [vmem:[#allocation9 + $0x10] sm:$0xff]
    %v3726 = vld [vmem:[#allocation9 + $0x18] sm:$0xff]
    %v3727 = vld [vmem:[#allocation9 + $0x20] sm:$0xff]
    %v3728 = vld [vmem:[#allocation9 + $0x28] sm:$0xff]
    %v3729 = vld [vmem:[#allocation9 + $0x30] sm:$0xff]
    %v3730 = vld [vmem:[#allocation9 + $0x38] sm:$0xff]
    %v3731 = vld [vmem:[#allocation9 + $0x40] sm:$0xff]
    %v3732 = vld [vmem:[#allocation9 + $0x48] sm:$0xff]
    %v3733 = vld [vmem:[#allocation9 + $0x50] sm:$0xff]
    %v3734 = vld [vmem:[#allocation9 + $0x58] sm:$0xff]
    %v3735 = vld [vmem:[#allocation9 + $0x60] sm:$0xff]
    %v3736 = vld [vmem:[#allocation9 + $0x68] sm:$0xff]
    %v3737 = vld [vmem:[#allocation9 + $0x70] sm:$0xff]
    %v3738 = vld [vmem:[#allocation9 + $0x78] sm:$0xff]
    %v3739 = vld [vmem:[%s10] sm:$0x3]
    %v3741 = vlaneseq
    %v3742 = vshrl.u32 %v3741, 7
    %v3743 = vsub.s32 0, %v3742
    %v3744 = vrot.slane %v3739, %v3743
    %v3745 = vlaneseq
    %v3746 = vshrl.u32 %v3745, 7
    %v3747 = vsub.s32 1, %v3746
    %v3748 = vrot.slane %v3739, %v3747
    %v3767 = vunpack.c.l.b16 %v3723
    %v3768 = vunpack.c.h.b16 %v3723
    %v3769 = vunpack.c.l.b16 %v3724
    %v3770 = vunpack.c.h.b16 %v3724
    %v3771 = vunpack.c.l.b16 %v3725
    %v3772 = vunpack.c.h.b16 %v3725
    %v3773 = vunpack.c.l.b16 %v3726
    %v3774 = vunpack.c.h.b16 %v3726
    %v3775 = vunpack.c.l.b16 %v3727
    %v3776 = vunpack.c.h.b16 %v3727
    %v3777 = vunpack.c.l.b16 %v3728
    %v3778 = vunpack.c.h.b16 %v3728
    %v3779 = vunpack.c.l.b16 %v3729
    %v3780 = vunpack.c.h.b16 %v3729
    %v3781 = vunpack.c.l.b16 %v3730
    %v3782 = vunpack.c.h.b16 %v3730
    %v3783 = vunpack.c.l.b16 %v3731
    %v3784 = vunpack.c.h.b16 %v3731
    %v3785 = vunpack.c.l.b16 %v3732
    %v3786 = vunpack.c.h.b16 %v3732
    %v3787 = vunpack.c.l.b16 %v3733
    %v3788 = vunpack.c.h.b16 %v3733
    %v3789 = vunpack.c.l.b16 %v3734
    %v3790 = vunpack.c.h.b16 %v3734
    %v3791 = vunpack.c.l.b16 %v3735
    %v3792 = vunpack.c.h.b16 %v3735
    %v3793 = vunpack.c.l.b16 %v3736
    %v3794 = vunpack.c.h.b16 %v3736
    %v3795 = vunpack.c.l.b16 %v3737
    %v3796 = vunpack.c.h.b16 %v3737
    %v3797 = vunpack.c.l.b16 %v3738
    %v3798 = vunpack.c.h.b16 %v3738
    %v3799 = vpack.c.b16 %v3769, %v3767
    %v3800 = vpack.c.b16 %v3770, %v3768
    %v3801 = vpack.c.b16 %v3773, %v3771
    %v3802 = vpack.c.b16 %v3774, %v3772
    %v3803 = vpack.c.b16 %v3777, %v3775
    %v3804 = vpack.c.b16 %v3778, %v3776
    %v3805 = vpack.c.b16 %v3781, %v3779
    %v3806 = vpack.c.b16 %v3782, %v3780
    %v3807 = vpack.c.b16 %v3785, %v3783
    %v3808 = vpack.c.b16 %v3786, %v3784
    %v3809 = vpack.c.b16 %v3789, %v3787
    %v3810 = vpack.c.b16 %v3790, %v3788
    %v3811 = vpack.c.b16 %v3793, %v3791
    %v3812 = vpack.c.b16 %v3794, %v3792
    %v3813 = vpack.c.b16 %v3797, %v3795
    %v3814 = vpack.c.b16 %v3798, %v3796
    %3831 = vmatprep.subr.bf16.mxu0 %v3814
    %3832 = vmatpush1.bf16.msra.mxu0 %v3813
    %3833 = vmatprep.subr.bf16.mxu0 %v3812
    %3834 = vmatpush1.bf16.msra.mxu0 %v3811
    %3835 = vmatprep.subr.bf16.mxu0 %v3810
    %3836 = vmatpush1.bf16.msra.mxu0 %v3809
    %3837 = vmatprep.subr.bf16.mxu0 %v3808
    %3838 = vmatpush1.bf16.msra.mxu0 %v3807
    %3839 = vmatprep.subr.bf16.mxu0 %v3806
    %3840 = vmatpush1.bf16.msra.mxu0 %v3805
    %3841 = vmatprep.subr.bf16.mxu0 %v3804
    %3842 = vmatpush1.bf16.msra.mxu0 %v3803
    %3843 = vmatprep.subr.bf16.mxu0 %v3802
    %3844 = vmatpush1.bf16.msra.mxu0 %v3801
    %3845 = vmatprep.subr.bf16.mxu0 %v3800
    %3846 = vmatpush1.bf16.msra.mxu0 %v3799
    %3847 = vmatprep.subr.bf16.mxu0 0
    %3848 = vmatpush2.bf16.msra.mxu0 0
    %3849 = vmatprep.subr.bf16.mxu0 0
    %3850 = vmatpush2.bf16.msra.mxu0 0
    %3851 = vmatprep.subr.bf16.mxu0 0
    %3852 = vmatpush2.bf16.msra.mxu0 0
    %3853 = vmatprep.subr.bf16.mxu0 0
    %3854 = vmatpush2.bf16.msra.mxu0 0
    %3855 = vmatprep.subr.bf16.mxu0 0
    %3856 = vmatpush2.bf16.msra.mxu0 0
    %3857 = vmatprep.subr.bf16.mxu0 0
    %3858 = vmatpush2.bf16.msra.mxu0 0
    %3859 = vmatprep.subr.bf16.mxu0 0
    %3860 = vmatpush2.bf16.msra.mxu0 0
    %3861 = vmatprep.subr.bf16.mxu0 0
    %3862 = vmatpush2.bf16.msra.mxu0 0
    %3863 = vmatprep.mubr.bf16.mxu0 0
    %3864 = vmatmul.mubr.bf16.gmra.mxu0 %v3722
    %v3865 = vpop.f32.mrf.mxu0
    %v3866 = vadd.f32 %v3744, %v3865
    %v3867 = vpop.f32.mrf.mxu0
    %v3868 = vadd.f32 %v3748, %v3867
    %v3869 = vpop.f32.mrf.mxu0
    %v3870 = vpop.f32.mrf.mxu0
    %3871 = vdwg.mxu0
    %v3872 = vmax.f32 %v3866, 0.0
    %v3873 = vmax.f32 %v3868, 0.0
    %v3874 = vpack.c.bf16 %v3872, %v3872
    %v3875 = vpack.c.bf16 %v3873, %v3873
    %v3876 = vld [vmem:[#allocation10] sm:$0xff]
    %v3877 = vld [vmem:[#allocation10 + $0x8] sm:$0xff]
    %v3878 = vld [vmem:[#allocation10 + $0x10] sm:$0xff]
    %v3879 = vld [vmem:[#allocation10 + $0x18] sm:$0xff]
    %v3880 = vld [vmem:[#allocation10 + $0x20] sm:$0xff]
    %v3881 = vld [vmem:[#allocation10 + $0x28] sm:$0xff]
    %v3882 = vld [vmem:[#allocation10 + $0x30] sm:$0xff]
    %v3883 = vld [vmem:[#allocation10 + $0x38] sm:$0xff]
    %v3884 = vld [vmem:[#allocation10 + $0x40] sm:$0xff]
    %v3885 = vld [vmem:[#allocation10 + $0x48] sm:$0xff]
    %v3886 = vld [vmem:[#allocation10 + $0x50] sm:$0xff]
    %v3887 = vld [vmem:[#allocation10 + $0x58] sm:$0xff]
    %v3888 = vld [vmem:[#allocation10 + $0x60] sm:$0xff]
    %v3889 = vld [vmem:[#allocation10 + $0x68] sm:$0xff]
    %v3890 = vld [vmem:[#allocation10 + $0x70] sm:$0xff]
    %v3891 = vld [vmem:[#allocation10 + $0x78] sm:$0xff]
    %v3892 = vld [vmem:[#allocation10 + $0x80] sm:$0xff]
    %v3893 = vld [vmem:[#allocation10 + $0x88] sm:$0xff]
    %v3894 = vld [vmem:[#allocation10 + $0x90] sm:$0xff]
    %v3895 = vld [vmem:[#allocation10 + $0x98] sm:$0xff]
    %v3896 = vld [vmem:[#allocation10 + $0xa0] sm:$0xff]
    %v3897 = vld [vmem:[#allocation10 + $0xa8] sm:$0xff]
    %v3898 = vld [vmem:[#allocation10 + $0xb0] sm:$0xff]
    %v3899 = vld [vmem:[#allocation10 + $0xb8] sm:$0xff]
    %v3900 = vld [vmem:[#allocation10 + $0xc0] sm:$0xff]
    %v3901 = vld [vmem:[#allocation10 + $0xc8] sm:$0xff]
    %v3902 = vld [vmem:[#allocation10 + $0xd0] sm:$0xff]
    %v3903 = vld [vmem:[#allocation10 + $0xd8] sm:$0xff]
    %v3904 = vld [vmem:[#allocation10 + $0xe0] sm:$0xff]
    %v3905 = vld [vmem:[#allocation10 + $0xe8] sm:$0xff]
    %v3906 = vld [vmem:[#allocation10 + $0xf0] sm:$0xff]
    %v3907 = vld [vmem:[#allocation10 + $0xf8] sm:$0xff]
    %v3908 = vld [vmem:[#allocation10 + $0x100] sm:$0xff]
    %v3909 = vld [vmem:[#allocation10 + $0x108] sm:$0xff]
    %v3910 = vld [vmem:[#allocation10 + $0x110] sm:$0xff]
    %v3911 = vld [vmem:[#allocation10 + $0x118] sm:$0xff]
    %v3912 = vld [vmem:[#allocation10 + $0x120] sm:$0xff]
    %v3913 = vld [vmem:[#allocation10 + $0x128] sm:$0xff]
    %v3914 = vld [vmem:[#allocation10 + $0x130] sm:$0xff]
    %v3915 = vld [vmem:[#allocation10 + $0x138] sm:$0xff]
    %v3916 = vld [vmem:[#allocation10 + $0x140] sm:$0xff]
    %v3917 = vld [vmem:[#allocation10 + $0x148] sm:$0xff]
    %v3918 = vld [vmem:[#allocation10 + $0x150] sm:$0xff]
    %v3919 = vld [vmem:[#allocation10 + $0x158] sm:$0xff]
    %v3920 = vld [vmem:[#allocation10 + $0x160] sm:$0xff]
    %v3921 = vld [vmem:[#allocation10 + $0x168] sm:$0xff]
    %v3922 = vld [vmem:[#allocation10 + $0x170] sm:$0xff]
    %v3923 = vld [vmem:[#allocation10 + $0x178] sm:$0xff]
    %v3924 = vld [vmem:[#allocation10 + $0x180] sm:$0xff]
    %v3925 = vld [vmem:[#allocation10 + $0x188] sm:$0xff]
    %v3926 = vld [vmem:[#allocation10 + $0x190] sm:$0xff]
    %v3927 = vld [vmem:[#allocation10 + $0x198] sm:$0xff]
    %v3928 = vld [vmem:[#allocation10 + $0x1a0] sm:$0xff]
    %v3929 = vld [vmem:[#allocation10 + $0x1a8] sm:$0xff]
    %v3930 = vld [vmem:[#allocation10 + $0x1b0] sm:$0xff]
    %v3931 = vld [vmem:[#allocation10 + $0x1b8] sm:$0xff]
    %v3932 = vld [vmem:[#allocation10 + $0x1c0] sm:$0xff]
    %v3933 = vld [vmem:[#allocation10 + $0x1c8] sm:$0xff]
    %v3934 = vld [vmem:[#allocation10 + $0x1d0] sm:$0xff]
    %v3935 = vld [vmem:[#allocation10 + $0x1d8] sm:$0xff]
    %v3936 = vld [vmem:[#allocation10 + $0x1e0] sm:$0xff]
    %v3937 = vld [vmem:[#allocation10 + $0x1e8] sm:$0xff]
    %v3938 = vld [vmem:[#allocation10 + $0x1f0] sm:$0xff]
    %v3939 = vld [vmem:[#allocation10 + $0x1f8] sm:$0xff]
    %v3940 = vld [vmem:[%s12] sm:$0xf]
    %v3942 = vlaneseq
    %v3943 = vshrl.u32 %v3942, 7
    %v3944 = vsub.s32 0, %v3943
    %v3945 = vrot.slane %v3940, %v3944
    %v3946 = vlaneseq
    %v3947 = vshrl.u32 %v3946, 7
    %v3948 = vsub.s32 1, %v3947
    %v3949 = vrot.slane %v3940, %v3948
    %v3950 = vlaneseq
    %v3951 = vshrl.u32 %v3950, 7
    %v3952 = vsub.s32 2, %v3951
    %v3953 = vrot.slane %v3940, %v3952
    %v3954 = vlaneseq
    %v3955 = vshrl.u32 %v3954, 7
    %v3956 = vsub.s32 3, %v3955
    %v3957 = vrot.slane %v3940, %v3956
    %v4026 = vunpack.c.l.b16 %v3876
    %v4027 = vunpack.c.h.b16 %v3876
    %v4028 = vunpack.c.l.b16 %v3877
    %v4029 = vunpack.c.h.b16 %v3877
    %v4030 = vunpack.c.l.b16 %v3878
    %v4031 = vunpack.c.h.b16 %v3878
    %v4032 = vunpack.c.l.b16 %v3879
    %v4033 = vunpack.c.h.b16 %v3879
    %v4034 = vunpack.c.l.b16 %v3880
    %v4035 = vunpack.c.h.b16 %v3880
    %v4036 = vunpack.c.l.b16 %v3881
    %v4037 = vunpack.c.h.b16 %v3881
    %v4038 = vunpack.c.l.b16 %v3882
    %v4039 = vunpack.c.h.b16 %v3882
    %v4040 = vunpack.c.l.b16 %v3883
    %v4041 = vunpack.c.h.b16 %v3883
    %v4042 = vunpack.c.l.b16 %v3884
    %v4043 = vunpack.c.h.b16 %v3884
    %v4044 = vunpack.c.l.b16 %v3885
    %v4045 = vunpack.c.h.b16 %v3885
    %v4046 = vunpack.c.l.b16 %v3886
    %v4047 = vunpack.c.h.b16 %v3886
    %v4048 = vunpack.c.l.b16 %v3887
    %v4049 = vunpack.c.h.b16 %v3887
    %v4050 = vunpack.c.l.b16 %v3888
    %v4051 = vunpack.c.h.b16 %v3888
    %v4052 = vunpack.c.l.b16 %v3889
    %v4053 = vunpack.c.h.b16 %v3889
    %v4054 = vunpack.c.l.b16 %v3890
    %v4055 = vunpack.c.h.b16 %v3890
    %v4056 = vunpack.c.l.b16 %v3891
    %v4057 = vunpack.c.h.b16 %v3891
    %v4058 = vunpack.c.l.b16 %v3892
    %v4059 = vunpack.c.h.b16 %v3892
    %v4060 = vunpack.c.l.b16 %v3893
    %v4061 = vunpack.c.h.b16 %v3893
    %v4062 = vunpack.c.l.b16 %v3894
    %v4063 = vunpack.c.h.b16 %v3894
    %v4064 = vunpack.c.l.b16 %v3895
    %v4065 = vunpack.c.h.b16 %v3895
    %v4066 = vunpack.c.l.b16 %v3896
    %v4067 = vunpack.c.h.b16 %v3896
    %v4068 = vunpack.c.l.b16 %v3897
    %v4069 = vunpack.c.h.b16 %v3897
    %v4070 = vunpack.c.l.b16 %v3898
    %v4071 = vunpack.c.h.b16 %v3898
    %v4072 = vunpack.c.l.b16 %v3899
    %v4073 = vunpack.c.h.b16 %v3899
    %v4074 = vunpack.c.l.b16 %v3900
    %v4075 = vunpack.c.h.b16 %v3900
    %v4076 = vunpack.c.l.b16 %v3901
    %v4077 = vunpack.c.h.b16 %v3901
    %v4078 = vunpack.c.l.b16 %v3902
    %v4079 = vunpack.c.h.b16 %v3902
    %v4080 = vunpack.c.l.b16 %v3903
    %v4081 = vunpack.c.h.b16 %v3903
    %v4082 = vunpack.c.l.b16 %v3904
    %v4083 = vunpack.c.h.b16 %v3904
    %v4084 = vunpack.c.l.b16 %v3905
    %v4085 = vunpack.c.h.b16 %v3905
    %v4086 = vunpack.c.l.b16 %v3906
    %v4087 = vunpack.c.h.b16 %v3906
    %v4088 = vunpack.c.l.b16 %v3907
    %v4089 = vunpack.c.h.b16 %v3907
    %v4090 = vunpack.c.l.b16 %v3908
    %v4091 = vunpack.c.h.b16 %v3908
    %v4092 = vunpack.c.l.b16 %v3909
    %v4093 = vunpack.c.h.b16 %v3909
    %v4094 = vunpack.c.l.b16 %v3910
    %v4095 = vunpack.c.h.b16 %v3910
    %v4096 = vunpack.c.l.b16 %v3911
    %v4097 = vunpack.c.h.b16 %v3911
    %v4098 = vunpack.c.l.b16 %v3912
    %v4099 = vunpack.c.h.b16 %v3912
    %v4100 = vunpack.c.l.b16 %v3913
    %v4101 = vunpack.c.h.b16 %v3913
    %v4102 = vunpack.c.l.b16 %v3914
    %v4103 = vunpack.c.h.b16 %v3914
    %v4104 = vunpack.c.l.b16 %v3915
    %v4105 = vunpack.c.h.b16 %v3915
    %v4106 = vunpack.c.l.b16 %v3916
    %v4107 = vunpack.c.h.b16 %v3916
    %v4108 = vunpack.c.l.b16 %v3917
    %v4109 = vunpack.c.h.b16 %v3917
    %v4110 = vunpack.c.l.b16 %v3918
    %v4111 = vunpack.c.h.b16 %v3918
    %v4112 = vunpack.c.l.b16 %v3919
    %v4113 = vunpack.c.h.b16 %v3919
    %v4114 = vunpack.c.l.b16 %v3920
    %v4115 = vunpack.c.h.b16 %v3920
    %v4116 = vunpack.c.l.b16 %v3921
    %v4117 = vunpack.c.h.b16 %v3921
    %v4118 = vunpack.c.l.b16 %v3922
    %v4119 = vunpack.c.h.b16 %v3922
    %v4120 = vunpack.c.l.b16 %v3923
    %v4121 = vunpack.c.h.b16 %v3923
    %v4122 = vunpack.c.l.b16 %v3924
    %v4123 = vunpack.c.h.b16 %v3924
    %v4124 = vunpack.c.l.b16 %v3925
    %v4125 = vunpack.c.h.b16 %v3925
    %v4126 = vunpack.c.l.b16 %v3926
    %v4127 = vunpack.c.h.b16 %v3926
    %v4128 = vunpack.c.l.b16 %v3927
    %v4129 = vunpack.c.h.b16 %v3927
    %v4130 = vunpack.c.l.b16 %v3928
    %v4131 = vunpack.c.h.b16 %v3928
    %v4132 = vunpack.c.l.b16 %v3929
    %v4133 = vunpack.c.h.b16 %v3929
    %v4134 = vunpack.c.l.b16 %v3930
    %v4135 = vunpack.c.h.b16 %v3930
    %v4136 = vunpack.c.l.b16 %v3931
    %v4137 = vunpack.c.h.b16 %v3931
    %v4138 = vunpack.c.l.b16 %v3932
    %v4139 = vunpack.c.h.b16 %v3932
    %v4140 = vunpack.c.l.b16 %v3933
    %v4141 = vunpack.c.h.b16 %v3933
    %v4142 = vunpack.c.l.b16 %v3934
    %v4143 = vunpack.c.h.b16 %v3934
    %v4144 = vunpack.c.l.b16 %v3935
    %v4145 = vunpack.c.h.b16 %v3935
    %v4146 = vunpack.c.l.b16 %v3936
    %v4147 = vunpack.c.h.b16 %v3936
    %v4148 = vunpack.c.l.b16 %v3937
    %v4149 = vunpack.c.h.b16 %v3937
    %v4150 = vunpack.c.l.b16 %v3938
    %v4151 = vunpack.c.h.b16 %v3938
    %v4152 = vunpack.c.l.b16 %v3939
    %v4153 = vunpack.c.h.b16 %v3939
    %v4154 = vpack.c.b16 %v4030, %v4026
    %v4155 = vpack.c.b16 %v4031, %v4027
    %v4156 = vpack.c.b16 %v4032, %v4028
    %v4157 = vpack.c.b16 %v4033, %v4029
    %v4158 = vpack.c.b16 %v4038, %v4034
    %v4159 = vpack.c.b16 %v4039, %v4035
    %v4160 = vpack.c.b16 %v4040, %v4036
    %v4161 = vpack.c.b16 %v4041, %v4037
    %v4162 = vpack.c.b16 %v4046, %v4042
    %v4163 = vpack.c.b16 %v4047, %v4043
    %v4164 = vpack.c.b16 %v4048, %v4044
    %v4165 = vpack.c.b16 %v4049, %v4045
    %v4166 = vpack.c.b16 %v4054, %v4050
    %v4167 = vpack.c.b16 %v4055, %v4051
    %v4168 = vpack.c.b16 %v4056, %v4052
    %v4169 = vpack.c.b16 %v4057, %v4053
    %v4170 = vpack.c.b16 %v4062, %v4058
    %v4171 = vpack.c.b16 %v4063, %v4059
    %v4172 = vpack.c.b16 %v4064, %v4060
    %v4173 = vpack.c.b16 %v4065, %v4061
    %v4174 = vpack.c.b16 %v4070, %v4066
    %v4175 = vpack.c.b16 %v4071, %v4067
    %v4176 = vpack.c.b16 %v4072, %v4068
    %v4177 = vpack.c.b16 %v4073, %v4069
    %v4178 = vpack.c.b16 %v4078, %v4074
    %v4179 = vpack.c.b16 %v4079, %v4075
    %v4180 = vpack.c.b16 %v4080, %v4076
    %v4181 = vpack.c.b16 %v4081, %v4077
    %v4182 = vpack.c.b16 %v4086, %v4082
    %v4183 = vpack.c.b16 %v4087, %v4083
    %v4184 = vpack.c.b16 %v4088, %v4084
    %v4185 = vpack.c.b16 %v4089, %v4085
    %v4186 = vpack.c.b16 %v4094, %v4090
    %v4187 = vpack.c.b16 %v4095, %v4091
    %v4188 = vpack.c.b16 %v4096, %v4092
    %v4189 = vpack.c.b16 %v4097, %v4093
    %v4190 = vpack.c.b16 %v4102, %v4098
    %v4191 = vpack.c.b16 %v4103, %v4099
    %v4192 = vpack.c.b16 %v4104, %v4100
    %v4193 = vpack.c.b16 %v4105, %v4101
    %v4194 = vpack.c.b16 %v4110, %v4106
    %v4195 = vpack.c.b16 %v4111, %v4107
    %v4196 = vpack.c.b16 %v4112, %v4108
    %v4197 = vpack.c.b16 %v4113, %v4109
    %v4198 = vpack.c.b16 %v4118, %v4114
    %v4199 = vpack.c.b16 %v4119, %v4115
    %v4200 = vpack.c.b16 %v4120, %v4116
    %v4201 = vpack.c.b16 %v4121, %v4117
    %v4202 = vpack.c.b16 %v4126, %v4122
    %v4203 = vpack.c.b16 %v4127, %v4123
    %v4204 = vpack.c.b16 %v4128, %v4124
    %v4205 = vpack.c.b16 %v4129, %v4125
    %v4206 = vpack.c.b16 %v4134, %v4130
    %v4207 = vpack.c.b16 %v4135, %v4131
    %v4208 = vpack.c.b16 %v4136, %v4132
    %v4209 = vpack.c.b16 %v4137, %v4133
    %v4210 = vpack.c.b16 %v4142, %v4138
    %v4211 = vpack.c.b16 %v4143, %v4139
    %v4212 = vpack.c.b16 %v4144, %v4140
    %v4213 = vpack.c.b16 %v4145, %v4141
    %v4214 = vpack.c.b16 %v4150, %v4146
    %v4215 = vpack.c.b16 %v4151, %v4147
    %v4216 = vpack.c.b16 %v4152, %v4148
    %v4217 = vpack.c.b16 %v4153, %v4149
    %4282 = vmatprep.subr.bf16.mxu0 %v4183
    %4283 = vmatpush1.bf16.msra.mxu0 %v4182
    %4284 = vmatprep.subr.bf16.mxu0 %v4179
    %4285 = vmatpush1.bf16.msra.mxu0 %v4178
    %4286 = vmatprep.subr.bf16.mxu0 %v4175
    %4287 = vmatpush1.bf16.msra.mxu0 %v4174
    %4288 = vmatprep.subr.bf16.mxu0 %v4171
    %4289 = vmatpush1.bf16.msra.mxu0 %v4170
    %4290 = vmatprep.subr.bf16.mxu0 %v4167
    %4291 = vmatpush1.bf16.msra.mxu0 %v4166
    %4292 = vmatprep.subr.bf16.mxu0 %v4163
    %4293 = vmatpush1.bf16.msra.mxu0 %v4162
    %4294 = vmatprep.subr.bf16.mxu0 %v4159
    %4295 = vmatpush1.bf16.msra.mxu0 %v4158
    %4296 = vmatprep.subr.bf16.mxu0 %v4155
    %4297 = vmatpush1.bf16.msra.mxu0 %v4154
    %4298 = vmatprep.subr.bf16.mxu0 %v4215
    %4299 = vmatpush2.bf16.msra.mxu0 %v4214
    %4300 = vmatprep.subr.bf16.mxu0 %v4211
    %4301 = vmatpush2.bf16.msra.mxu0 %v4210
    %4302 = vmatprep.subr.bf16.mxu0 %v4207
    %4303 = vmatpush2.bf16.msra.mxu0 %v4206
    %4304 = vmatprep.subr.bf16.mxu0 %v4203
    %4305 = vmatpush2.bf16.msra.mxu0 %v4202
    %4306 = vmatprep.subr.bf16.mxu0 %v4199
    %4307 = vmatpush2.bf16.msra.mxu0 %v4198
    %4308 = vmatprep.subr.bf16.mxu0 %v4195
    %4309 = vmatpush2.bf16.msra.mxu0 %v4194
    %4310 = vmatprep.subr.bf16.mxu0 %v4191
    %4311 = vmatpush2.bf16.msra.mxu0 %v4190
    %4312 = vmatprep.subr.bf16.mxu0 %v4187
    %4313 = vmatpush2.bf16.msra.mxu0 %v4186
    %4314 = vmatprep.mubr.bf16.mxu0 %v3875
    %4315 = vmatmul.mubr.bf16.gmra.mxu0 %v3874
    %v4316 = vpop.f32.mrf.mxu0
    %v4317 = vadd.f32 %v3945, %v4316
    %v4318 = vpop.f32.mrf.mxu0
    %v4319 = vadd.f32 %v3949, %v4318
    %v4320 = vpop.f32.mrf.mxu0
    %v4321 = vpop.f32.mrf.mxu0
    %4322 = vdwg.mxu0
    %4323 = vmatprep.subr.bf16.mxu0 %v4185
    %4324 = vmatpush1.bf16.msra.mxu0 %v4184
    %4325 = vmatprep.subr.bf16.mxu0 %v4181
    %4326 = vmatpush1.bf16.msra.mxu0 %v4180
    %4327 = vmatprep.subr.bf16.mxu0 %v4177
    %4328 = vmatpush1.bf16.msra.mxu0 %v4176
    %4329 = vmatprep.subr.bf16.mxu0 %v4173
    %4330 = vmatpush1.bf16.msra.mxu0 %v4172
    %4331 = vmatprep.subr.bf16.mxu0 %v4169
    %4332 = vmatpush1.bf16.msra.mxu0 %v4168
    %4333 = vmatprep.subr.bf16.mxu0 %v4165
    %4334 = vmatpush1.bf16.msra.mxu0 %v4164
    %4335 = vmatprep.subr.bf16.mxu0 %v4161
    %4336 = vmatpush1.bf16.msra.mxu0 %v4160
    %4337 = vmatprep.subr.bf16.mxu0 %v4157
    %4338 = vmatpush1.bf16.msra.mxu0 %v4156
    %4339 = vmatprep.subr.bf16.mxu0 %v4217
    %4340 = vmatpush2.bf16.msra.mxu0 %v4216
    %4341 = vmatprep.subr.bf16.mxu0 %v4213
    %4342 = vmatpush2.bf16.msra.mxu0 %v4212
    %4343 = vmatprep.subr.bf16.mxu0 %v4209
    %4344 = vmatpush2.bf16.msra.mxu0 %v4208
    %4345 = vmatprep.subr.bf16.mxu0 %v4205
    %4346 = vmatpush2.bf16.msra.mxu0 %v4204
    %4347 = vmatprep.subr.bf16.mxu0 %v4201
    %4348 = vmatpush2.bf16.msra.mxu0 %v4200
    %4349 = vmatprep.subr.bf16.mxu0 %v4197
    %4350 = vmatpush2.bf16.msra.mxu0 %v4196
    %4351 = vmatprep.subr.bf16.mxu0 %v4193
    %4352 = vmatpush2.bf16.msra.mxu0 %v4192
    %4353 = vmatprep.subr.bf16.mxu0 %v4189
    %4354 = vmatpush2.bf16.msra.mxu0 %v4188
    %4355 = vmatprep.mubr.bf16.mxu0 %v3875
    %4356 = vmatmul.mubr.bf16.gmra.mxu0 %v3874
    %v4357 = vpop.f32.mrf.mxu0
    %v4358 = vadd.f32 %v3953, %v4357
    %v4359 = vpop.f32.mrf.mxu0
    %v4360 = vadd.f32 %v3957, %v4359
    %v4361 = vpop.f32.mrf.mxu0
    %v4362 = vpop.f32.mrf.mxu0
    %4363 = vdwg.mxu0
    %v4364 = vmax.f32 %v4317, 0.0
    %v4365 = vmax.f32 %v4319, 0.0
    %v4366 = vmax.f32 %v4358, 0.0
    %v4367 = vmax.f32 %v4360, 0.0
    %v4368 = vpack.c.bf16 %v4364, %v4364
    %v4369 = vpack.c.bf16 %v4365, %v4365
    %v4370 = vpack.c.bf16 %v4366, %v4366
    %v4371 = vpack.c.bf16 %v4367, %v4367
    %v4372 = vld [vmem:[#allocation12] sm:$0xff]
    %v4373 = vld [vmem:[#allocation12 + $0x8] sm:$0xff]
    %v4374 = vld [vmem:[#allocation12 + $0x10] sm:$0xff]
    %v4375 = vld [vmem:[#allocation12 + $0x18] sm:$0xff]
    %v4376 = vld [vmem:[#allocation12 + $0x20] sm:$0xff]
    %v4377 = vld [vmem:[#allocation12 + $0x28] sm:$0xff]
    %v4378 = vld [vmem:[#allocation12 + $0x30] sm:$0xff]
    %v4379 = vld [vmem:[#allocation12 + $0x38] sm:$0xff]
    %v4380 = vld [vmem:[#allocation12 + $0x40] sm:$0xff]
    %v4381 = vld [vmem:[#allocation12 + $0x48] sm:$0xff]
    %v4382 = vld [vmem:[#allocation12 + $0x50] sm:$0xff]
    %v4383 = vld [vmem:[#allocation12 + $0x58] sm:$0xff]
    %v4384 = vld [vmem:[#allocation12 + $0x60] sm:$0xff]
    %v4385 = vld [vmem:[#allocation12 + $0x68] sm:$0xff]
    %v4386 = vld [vmem:[#allocation12 + $0x70] sm:$0xff]
    %v4387 = vld [vmem:[#allocation12 + $0x78] sm:$0xff]
    %v4388 = vld [vmem:[#allocation12 + $0x80] sm:$0xff]
    %v4389 = vld [vmem:[#allocation12 + $0x88] sm:$0xff]
    %v4390 = vld [vmem:[#allocation12 + $0x90] sm:$0xff]
    %v4391 = vld [vmem:[#allocation12 + $0x98] sm:$0xff]
    %v4392 = vld [vmem:[#allocation12 + $0xa0] sm:$0xff]
    %v4393 = vld [vmem:[#allocation12 + $0xa8] sm:$0xff]
    %v4394 = vld [vmem:[#allocation12 + $0xb0] sm:$0xff]
    %v4395 = vld [vmem:[#allocation12 + $0xb8] sm:$0xff]
    %v4396 = vld [vmem:[#allocation12 + $0xc0] sm:$0xff]
    %v4397 = vld [vmem:[#allocation12 + $0xc8] sm:$0xff]
    %v4398 = vld [vmem:[#allocation12 + $0xd0] sm:$0xff]
    %v4399 = vld [vmem:[#allocation12 + $0xd8] sm:$0xff]
    %v4400 = vld [vmem:[#allocation12 + $0xe0] sm:$0xff]
    %v4401 = vld [vmem:[#allocation12 + $0xe8] sm:$0xff]
    %v4402 = vld [vmem:[#allocation12 + $0xf0] sm:$0xff]
    %v4403 = vld [vmem:[#allocation12 + $0xf8] sm:$0xff]
    %v4404 = vld [vmem:[#allocation12 + $0x100] sm:$0xff]
    %v4405 = vld [vmem:[#allocation12 + $0x108] sm:$0xff]
    %v4406 = vld [vmem:[#allocation12 + $0x110] sm:$0xff]
    %v4407 = vld [vmem:[#allocation12 + $0x118] sm:$0xff]
    %v4408 = vld [vmem:[#allocation12 + $0x120] sm:$0xff]
    %v4409 = vld [vmem:[#allocation12 + $0x128] sm:$0xff]
    %v4410 = vld [vmem:[#allocation12 + $0x130] sm:$0xff]
    %v4411 = vld [vmem:[#allocation12 + $0x138] sm:$0xff]
    %v4412 = vld [vmem:[#allocation12 + $0x140] sm:$0xff]
    %v4413 = vld [vmem:[#allocation12 + $0x148] sm:$0xff]
    %v4414 = vld [vmem:[#allocation12 + $0x150] sm:$0xff]
    %v4415 = vld [vmem:[#allocation12 + $0x158] sm:$0xff]
    %v4416 = vld [vmem:[#allocation12 + $0x160] sm:$0xff]
    %v4417 = vld [vmem:[#allocation12 + $0x168] sm:$0xff]
    %v4418 = vld [vmem:[#allocation12 + $0x170] sm:$0xff]
    %v4419 = vld [vmem:[#allocation12 + $0x178] sm:$0xff]
    %v4420 = vld [vmem:[#allocation12 + $0x180] sm:$0xff]
    %v4421 = vld [vmem:[#allocation12 + $0x188] sm:$0xff]
    %v4422 = vld [vmem:[#allocation12 + $0x190] sm:$0xff]
    %v4423 = vld [vmem:[#allocation12 + $0x198] sm:$0xff]
    %v4424 = vld [vmem:[#allocation12 + $0x1a0] sm:$0xff]
    %v4425 = vld [vmem:[#allocation12 + $0x1a8] sm:$0xff]
    %v4426 = vld [vmem:[#allocation12 + $0x1b0] sm:$0xff]
    %v4427 = vld [vmem:[#allocation12 + $0x1b8] sm:$0xff]
    %v4428 = vld [vmem:[#allocation12 + $0x1c0] sm:$0xff]
    %v4429 = vld [vmem:[#allocation12 + $0x1c8] sm:$0xff]
    %v4430 = vld [vmem:[#allocation12 + $0x1d0] sm:$0xff]
    %v4431 = vld [vmem:[#allocation12 + $0x1d8] sm:$0xff]
    %v4432 = vld [vmem:[#allocation12 + $0x1e0] sm:$0xff]
    %v4433 = vld [vmem:[#allocation12 + $0x1e8] sm:$0xff]
    %v4434 = vld [vmem:[#allocation12 + $0x1f0] sm:$0xff]
    %v4435 = vld [vmem:[#allocation12 + $0x1f8] sm:$0xff]
    %v4436 = vld [vmem:[#allocation12 + $0x200] sm:$0xff]
    %v4437 = vld [vmem:[#allocation12 + $0x208] sm:$0xff]
    %v4438 = vld [vmem:[#allocation12 + $0x210] sm:$0xff]
    %v4439 = vld [vmem:[#allocation12 + $0x218] sm:$0xff]
    %v4440 = vld [vmem:[#allocation12 + $0x220] sm:$0xff]
    %v4441 = vld [vmem:[#allocation12 + $0x228] sm:$0xff]
    %v4442 = vld [vmem:[#allocation12 + $0x230] sm:$0xff]
    %v4443 = vld [vmem:[#allocation12 + $0x238] sm:$0xff]
    %v4444 = vld [vmem:[#allocation12 + $0x240] sm:$0xff]
    %v4445 = vld [vmem:[#allocation12 + $0x248] sm:$0xff]
    %v4446 = vld [vmem:[#allocation12 + $0x250] sm:$0xff]
    %v4447 = vld [vmem:[#allocation12 + $0x258] sm:$0xff]
    %v4448 = vld [vmem:[#allocation12 + $0x260] sm:$0xff]
    %v4449 = vld [vmem:[#allocation12 + $0x268] sm:$0xff]
    %v4450 = vld [vmem:[#allocation12 + $0x270] sm:$0xff]
    %v4451 = vld [vmem:[#allocation12 + $0x278] sm:$0xff]
    %v4452 = vld [vmem:[#allocation12 + $0x280] sm:$0xff]
    %v4453 = vld [vmem:[#allocation12 + $0x288] sm:$0xff]
    %v4454 = vld [vmem:[#allocation12 + $0x290] sm:$0xff]
    %v4455 = vld [vmem:[#allocation12 + $0x298] sm:$0xff]
    %v4456 = vld [vmem:[#allocation12 + $0x2a0] sm:$0xff]
    %v4457 = vld [vmem:[#allocation12 + $0x2a8] sm:$0xff]
    %v4458 = vld [vmem:[#allocation12 + $0x2b0] sm:$0xff]
    %v4459 = vld [vmem:[#allocation12 + $0x2b8] sm:$0xff]
    %v4460 = vld [vmem:[#allocation12 + $0x2c0] sm:$0xff]
    %v4461 = vld [vmem:[#allocation12 + $0x2c8] sm:$0xff]
    %v4462 = vld [vmem:[#allocation12 + $0x2d0] sm:$0xff]
    %v4463 = vld [vmem:[#allocation12 + $0x2d8] sm:$0xff]
    %v4464 = vld [vmem:[#allocation12 + $0x2e0] sm:$0xff]
    %v4465 = vld [vmem:[#allocation12 + $0x2e8] sm:$0xff]
    %v4466 = vld [vmem:[#allocation12 + $0x2f0] sm:$0xff]
    %v4467 = vld [vmem:[#allocation12 + $0x2f8] sm:$0xff]
    %v4468 = vld [vmem:[#allocation12 + $0x300] sm:$0xff]
    %v4469 = vld [vmem:[#allocation12 + $0x308] sm:$0xff]
    %v4470 = vld [vmem:[#allocation12 + $0x310] sm:$0xff]
    %v4471 = vld [vmem:[#allocation12 + $0x318] sm:$0xff]
    %v4472 = vld [vmem:[#allocation12 + $0x320] sm:$0xff]
    %v4473 = vld [vmem:[#allocation12 + $0x328] sm:$0xff]
    %v4474 = vld [vmem:[#allocation12 + $0x330] sm:$0xff]
    %v4475 = vld [vmem:[#allocation12 + $0x338] sm:$0xff]
    %v4476 = vld [vmem:[#allocation12 + $0x340] sm:$0xff]
    %v4477 = vld [vmem:[#allocation12 + $0x348] sm:$0xff]
    %v4478 = vld [vmem:[#allocation12 + $0x350] sm:$0xff]
    %v4479 = vld [vmem:[#allocation12 + $0x358] sm:$0xff]
    %v4480 = vld [vmem:[#allocation12 + $0x360] sm:$0xff]
    %v4481 = vld [vmem:[#allocation12 + $0x368] sm:$0xff]
    %v4482 = vld [vmem:[#allocation12 + $0x370] sm:$0xff]
    %v4483 = vld [vmem:[#allocation12 + $0x378] sm:$0xff]
    %v4484 = vld [vmem:[#allocation12 + $0x380] sm:$0xff]
    %v4485 = vld [vmem:[#allocation12 + $0x388] sm:$0xff]
    %v4486 = vld [vmem:[#allocation12 + $0x390] sm:$0xff]
    %v4487 = vld [vmem:[#allocation12 + $0x398] sm:$0xff]
    %v4488 = vld [vmem:[#allocation12 + $0x3a0] sm:$0xff]
    %v4489 = vld [vmem:[#allocation12 + $0x3a8] sm:$0xff]
    %v4490 = vld [vmem:[#allocation12 + $0x3b0] sm:$0xff]
    %v4491 = vld [vmem:[#allocation12 + $0x3b8] sm:$0xff]
    %v4492 = vld [vmem:[#allocation12 + $0x3c0] sm:$0xff]
    %v4493 = vld [vmem:[#allocation12 + $0x3c8] sm:$0xff]
    %v4494 = vld [vmem:[#allocation12 + $0x3d0] sm:$0xff]
    %v4495 = vld [vmem:[#allocation12 + $0x3d8] sm:$0xff]
    %v4496 = vld [vmem:[#allocation12 + $0x3e0] sm:$0xff]
    %v4497 = vld [vmem:[#allocation12 + $0x3e8] sm:$0xff]
    %v4498 = vld [vmem:[#allocation12 + $0x3f0] sm:$0xff]
    %v4499 = vld [vmem:[#allocation12 + $0x3f8] sm:$0xff]
    %v4500 = vld [vmem:[#allocation12 + $0x400] sm:$0xff]
    %v4501 = vld [vmem:[#allocation12 + $0x408] sm:$0xff]
    %v4502 = vld [vmem:[#allocation12 + $0x410] sm:$0xff]
    %v4503 = vld [vmem:[#allocation12 + $0x418] sm:$0xff]
    %v4504 = vld [vmem:[#allocation12 + $0x420] sm:$0xff]
    %v4505 = vld [vmem:[#allocation12 + $0x428] sm:$0xff]
    %v4506 = vld [vmem:[#allocation12 + $0x430] sm:$0xff]
    %v4507 = vld [vmem:[#allocation12 + $0x438] sm:$0xff]
    %v4508 = vld [vmem:[#allocation12 + $0x440] sm:$0xff]
    %v4509 = vld [vmem:[#allocation12 + $0x448] sm:$0xff]
    %v4510 = vld [vmem:[#allocation12 + $0x450] sm:$0xff]
    %v4511 = vld [vmem:[#allocation12 + $0x458] sm:$0xff]
    %v4512 = vld [vmem:[#allocation12 + $0x460] sm:$0xff]
    %v4513 = vld [vmem:[#allocation12 + $0x468] sm:$0xff]
    %v4514 = vld [vmem:[#allocation12 + $0x470] sm:$0xff]
    %v4515 = vld [vmem:[#allocation12 + $0x478] sm:$0xff]
    %v4516 = vld [vmem:[#allocation12 + $0x480] sm:$0xff]
    %v4517 = vld [vmem:[#allocation12 + $0x488] sm:$0xff]
    %v4518 = vld [vmem:[#allocation12 + $0x490] sm:$0xff]
    %v4519 = vld [vmem:[#allocation12 + $0x498] sm:$0xff]
    %v4520 = vld [vmem:[#allocation12 + $0x4a0] sm:$0xff]
    %v4521 = vld [vmem:[#allocation12 + $0x4a8] sm:$0xff]
    %v4522 = vld [vmem:[#allocation12 + $0x4b0] sm:$0xff]
    %v4523 = vld [vmem:[#allocation12 + $0x4b8] sm:$0xff]
    %v4524 = vld [vmem:[#allocation12 + $0x4c0] sm:$0xff]
    %v4525 = vld [vmem:[#allocation12 + $0x4c8] sm:$0xff]
    %v4526 = vld [vmem:[#allocation12 + $0x4d0] sm:$0xff]
    %v4527 = vld [vmem:[#allocation12 + $0x4d8] sm:$0xff]
    %v4528 = vld [vmem:[#allocation12 + $0x4e0] sm:$0xff]
    %v4529 = vld [vmem:[#allocation12 + $0x4e8] sm:$0xff]
    %v4530 = vld [vmem:[#allocation12 + $0x4f0] sm:$0xff]
    %v4531 = vld [vmem:[#allocation12 + $0x4f8] sm:$0xff]
    %v4532 = vld [vmem:[#allocation12 + $0x500] sm:$0xff]
    %v4533 = vld [vmem:[#allocation12 + $0x508] sm:$0xff]
    %v4534 = vld [vmem:[#allocation12 + $0x510] sm:$0xff]
    %v4535 = vld [vmem:[#allocation12 + $0x518] sm:$0xff]
    %v4536 = vld [vmem:[#allocation12 + $0x520] sm:$0xff]
    %v4537 = vld [vmem:[#allocation12 + $0x528] sm:$0xff]
    %v4538 = vld [vmem:[#allocation12 + $0x530] sm:$0xff]
    %v4539 = vld [vmem:[#allocation12 + $0x538] sm:$0xff]
    %v4540 = vld [vmem:[#allocation12 + $0x540] sm:$0xff]
    %v4541 = vld [vmem:[#allocation12 + $0x548] sm:$0xff]
    %v4542 = vld [vmem:[#allocation12 + $0x550] sm:$0xff]
    %v4543 = vld [vmem:[#allocation12 + $0x558] sm:$0xff]
    %v4544 = vld [vmem:[#allocation12 + $0x560] sm:$0xff]
    %v4545 = vld [vmem:[#allocation12 + $0x568] sm:$0xff]
    %v4546 = vld [vmem:[#allocation12 + $0x570] sm:$0xff]
    %v4547 = vld [vmem:[#allocation12 + $0x578] sm:$0xff]
    %v4548 = vld [vmem:[#allocation12 + $0x580] sm:$0xff]
    %v4549 = vld [vmem:[#allocation12 + $0x588] sm:$0xff]
    %v4550 = vld [vmem:[#allocation12 + $0x590] sm:$0xff]
    %v4551 = vld [vmem:[#allocation12 + $0x598] sm:$0xff]
    %v4552 = vld [vmem:[#allocation12 + $0x5a0] sm:$0xff]
    %v4553 = vld [vmem:[#allocation12 + $0x5a8] sm:$0xff]
    %v4554 = vld [vmem:[#allocation12 + $0x5b0] sm:$0xff]
    %v4555 = vld [vmem:[#allocation12 + $0x5b8] sm:$0xff]
    %v4556 = vld [vmem:[#allocation12 + $0x5c0] sm:$0xff]
    %v4557 = vld [vmem:[#allocation12 + $0x5c8] sm:$0xff]
    %v4558 = vld [vmem:[#allocation12 + $0x5d0] sm:$0xff]
    %v4559 = vld [vmem:[#allocation12 + $0x5d8] sm:$0xff]
    %v4560 = vld [vmem:[#allocation12 + $0x5e0] sm:$0xff]
    %v4561 = vld [vmem:[#allocation12 + $0x5e8] sm:$0xff]
    %v4562 = vld [vmem:[#allocation12 + $0x5f0] sm:$0xff]
    %v4563 = vld [vmem:[#allocation12 + $0x5f8] sm:$0xff]
    %v4564 = vld [vmem:[#allocation12 + $0x600] sm:$0xff]
    %v4565 = vld [vmem:[#allocation12 + $0x608] sm:$0xff]
    %v4566 = vld [vmem:[#allocation12 + $0x610] sm:$0xff]
    %v4567 = vld [vmem:[#allocation12 + $0x618] sm:$0xff]
    %v4568 = vld [vmem:[#allocation12 + $0x620] sm:$0xff]
    %v4569 = vld [vmem:[#allocation12 + $0x628] sm:$0xff]
    %v4570 = vld [vmem:[#allocation12 + $0x630] sm:$0xff]
    %v4571 = vld [vmem:[#allocation12 + $0x638] sm:$0xff]
    %v4572 = vld [vmem:[#allocation12 + $0x640] sm:$0xff]
    %v4573 = vld [vmem:[#allocation12 + $0x648] sm:$0xff]
    %v4574 = vld [vmem:[#allocation12 + $0x650] sm:$0xff]
    %v4575 = vld [vmem:[#allocation12 + $0x658] sm:$0xff]
    %v4576 = vld [vmem:[#allocation12 + $0x660] sm:$0xff]
    %v4577 = vld [vmem:[#allocation12 + $0x668] sm:$0xff]
    %v4578 = vld [vmem:[#allocation12 + $0x670] sm:$0xff]
    %v4579 = vld [vmem:[#allocation12 + $0x678] sm:$0xff]
    %v4580 = vld [vmem:[#allocation12 + $0x680] sm:$0xff]
    %v4581 = vld [vmem:[#allocation12 + $0x688] sm:$0xff]
    %v4582 = vld [vmem:[#allocation12 + $0x690] sm:$0xff]
    %v4583 = vld [vmem:[#allocation12 + $0x698] sm:$0xff]
    %v4584 = vld [vmem:[#allocation12 + $0x6a0] sm:$0xff]
    %v4585 = vld [vmem:[#allocation12 + $0x6a8] sm:$0xff]
    %v4586 = vld [vmem:[#allocation12 + $0x6b0] sm:$0xff]
    %v4587 = vld [vmem:[#allocation12 + $0x6b8] sm:$0xff]
    %v4588 = vld [vmem:[#allocation12 + $0x6c0] sm:$0xff]
    %v4589 = vld [vmem:[#allocation12 + $0x6c8] sm:$0xff]
    %v4590 = vld [vmem:[#allocation12 + $0x6d0] sm:$0xff]
    %v4591 = vld [vmem:[#allocation12 + $0x6d8] sm:$0xff]
    %v4592 = vld [vmem:[#allocation12 + $0x6e0] sm:$0xff]
    %v4593 = vld [vmem:[#allocation12 + $0x6e8] sm:$0xff]
    %v4594 = vld [vmem:[#allocation12 + $0x6f0] sm:$0xff]
    %v4595 = vld [vmem:[#allocation12 + $0x6f8] sm:$0xff]
    %v4596 = vld [vmem:[#allocation12 + $0x700] sm:$0xff]
    %v4597 = vld [vmem:[#allocation12 + $0x708] sm:$0xff]
    %v4598 = vld [vmem:[#allocation12 + $0x710] sm:$0xff]
    %v4599 = vld [vmem:[#allocation12 + $0x718] sm:$0xff]
    %v4600 = vld [vmem:[#allocation12 + $0x720] sm:$0xff]
    %v4601 = vld [vmem:[#allocation12 + $0x728] sm:$0xff]
    %v4602 = vld [vmem:[#allocation12 + $0x730] sm:$0xff]
    %v4603 = vld [vmem:[#allocation12 + $0x738] sm:$0xff]
    %v4604 = vld [vmem:[#allocation12 + $0x740] sm:$0xff]
    %v4605 = vld [vmem:[#allocation12 + $0x748] sm:$0xff]
    %v4606 = vld [vmem:[#allocation12 + $0x750] sm:$0xff]
    %v4607 = vld [vmem:[#allocation12 + $0x758] sm:$0xff]
    %v4608 = vld [vmem:[#allocation12 + $0x760] sm:$0xff]
    %v4609 = vld [vmem:[#allocation12 + $0x768] sm:$0xff]
    %v4610 = vld [vmem:[#allocation12 + $0x770] sm:$0xff]
    %v4611 = vld [vmem:[#allocation12 + $0x778] sm:$0xff]
    %v4612 = vld [vmem:[#allocation12 + $0x780] sm:$0xff]
    %v4613 = vld [vmem:[#allocation12 + $0x788] sm:$0xff]
    %v4614 = vld [vmem:[#allocation12 + $0x790] sm:$0xff]
    %v4615 = vld [vmem:[#allocation12 + $0x798] sm:$0xff]
    %v4616 = vld [vmem:[#allocation12 + $0x7a0] sm:$0xff]
    %v4617 = vld [vmem:[#allocation12 + $0x7a8] sm:$0xff]
    %v4618 = vld [vmem:[#allocation12 + $0x7b0] sm:$0xff]
    %v4619 = vld [vmem:[#allocation12 + $0x7b8] sm:$0xff]
    %v4620 = vld [vmem:[#allocation12 + $0x7c0] sm:$0xff]
    %v4621 = vld [vmem:[#allocation12 + $0x7c8] sm:$0xff]
    %v4622 = vld [vmem:[#allocation12 + $0x7d0] sm:$0xff]
    %v4623 = vld [vmem:[#allocation12 + $0x7d8] sm:$0xff]
    %v4624 = vld [vmem:[#allocation12 + $0x7e0] sm:$0xff]
    %v4625 = vld [vmem:[#allocation12 + $0x7e8] sm:$0xff]
    %v4626 = vld [vmem:[#allocation12 + $0x7f0] sm:$0xff]
    %v4627 = vld [vmem:[#allocation12 + $0x7f8] sm:$0xff]
    %v4628 = vld [vmem:[%s14] sm:$0xff]
    %v4630 = vlaneseq
    %v4631 = vshrl.u32 %v4630, 7
    %v4632 = vsub.s32 0, %v4631
    %v4633 = vrot.slane %v4628, %v4632
    %v4634 = vlaneseq
    %v4635 = vshrl.u32 %v4634, 7
    %v4636 = vsub.s32 1, %v4635
    %v4637 = vrot.slane %v4628, %v4636
    %v4638 = vlaneseq
    %v4639 = vshrl.u32 %v4638, 7
    %v4640 = vsub.s32 2, %v4639
    %v4641 = vrot.slane %v4628, %v4640
    %v4642 = vlaneseq
    %v4643 = vshrl.u32 %v4642, 7
    %v4644 = vsub.s32 3, %v4643
    %v4645 = vrot.slane %v4628, %v4644
    %v4646 = vlaneseq
    %v4647 = vshrl.u32 %v4646, 7
    %v4648 = vsub.s32 4, %v4647
    %v4649 = vrot.slane %v4628, %v4648
    %v4650 = vlaneseq
    %v4651 = vshrl.u32 %v4650, 7
    %v4652 = vsub.s32 5, %v4651
    %v4653 = vrot.slane %v4628, %v4652
    %v4654 = vlaneseq
    %v4655 = vshrl.u32 %v4654, 7
    %v4656 = vsub.s32 6, %v4655
    %v4657 = vrot.slane %v4628, %v4656
    %v4658 = vlaneseq
    %v4659 = vshrl.u32 %v4658, 7
    %v4660 = vsub.s32 7, %v4659
    %v4661 = vrot.slane %v4628, %v4660
    %v4926 = vunpack.c.l.b16 %v4372
    %v4927 = vunpack.c.h.b16 %v4372
    %v4928 = vunpack.c.l.b16 %v4373
    %v4929 = vunpack.c.h.b16 %v4373
    %v4930 = vunpack.c.l.b16 %v4374
    %v4931 = vunpack.c.h.b16 %v4374
    %v4932 = vunpack.c.l.b16 %v4375
    %v4933 = vunpack.c.h.b16 %v4375
    %v4934 = vunpack.c.l.b16 %v4376
    %v4935 = vunpack.c.h.b16 %v4376
    %v4936 = vunpack.c.l.b16 %v4377
    %v4937 = vunpack.c.h.b16 %v4377
    %v4938 = vunpack.c.l.b16 %v4378
    %v4939 = vunpack.c.h.b16 %v4378
    %v4940 = vunpack.c.l.b16 %v4379
    %v4941 = vunpack.c.h.b16 %v4379
    %v4942 = vunpack.c.l.b16 %v4380
    %v4943 = vunpack.c.h.b16 %v4380
    %v4944 = vunpack.c.l.b16 %v4381
    %v4945 = vunpack.c.h.b16 %v4381
    %v4946 = vunpack.c.l.b16 %v4382
    %v4947 = vunpack.c.h.b16 %v4382
    %v4948 = vunpack.c.l.b16 %v4383
    %v4949 = vunpack.c.h.b16 %v4383
    %v4950 = vunpack.c.l.b16 %v4384
    %v4951 = vunpack.c.h.b16 %v4384
    %v4952 = vunpack.c.l.b16 %v4385
    %v4953 = vunpack.c.h.b16 %v4385
    %v4954 = vunpack.c.l.b16 %v4386
    %v4955 = vunpack.c.h.b16 %v4386
    %v4956 = vunpack.c.l.b16 %v4387
    %v4957 = vunpack.c.h.b16 %v4387
    %v4958 = vunpack.c.l.b16 %v4388
    %v4959 = vunpack.c.h.b16 %v4388
    %v4960 = vunpack.c.l.b16 %v4389
    %v4961 = vunpack.c.h.b16 %v4389
    %v4962 = vunpack.c.l.b16 %v4390
    %v4963 = vunpack.c.h.b16 %v4390
    %v4964 = vunpack.c.l.b16 %v4391
    %v4965 = vunpack.c.h.b16 %v4391
    %v4966 = vunpack.c.l.b16 %v4392
    %v4967 = vunpack.c.h.b16 %v4392
    %v4968 = vunpack.c.l.b16 %v4393
    %v4969 = vunpack.c.h.b16 %v4393
    %v4970 = vunpack.c.l.b16 %v4394
    %v4971 = vunpack.c.h.b16 %v4394
    %v4972 = vunpack.c.l.b16 %v4395
    %v4973 = vunpack.c.h.b16 %v4395
    %v4974 = vunpack.c.l.b16 %v4396
    %v4975 = vunpack.c.h.b16 %v4396
    %v4976 = vunpack.c.l.b16 %v4397
    %v4977 = vunpack.c.h.b16 %v4397
    %v4978 = vunpack.c.l.b16 %v4398
    %v4979 = vunpack.c.h.b16 %v4398
    %v4980 = vunpack.c.l.b16 %v4399
    %v4981 = vunpack.c.h.b16 %v4399
    %v4982 = vunpack.c.l.b16 %v4400
    %v4983 = vunpack.c.h.b16 %v4400
    %v4984 = vunpack.c.l.b16 %v4401
    %v4985 = vunpack.c.h.b16 %v4401
    %v4986 = vunpack.c.l.b16 %v4402
    %v4987 = vunpack.c.h.b16 %v4402
    %v4988 = vunpack.c.l.b16 %v4403
    %v4989 = vunpack.c.h.b16 %v4403
    %v4990 = vunpack.c.l.b16 %v4404
    %v4991 = vunpack.c.h.b16 %v4404
    %v4992 = vunpack.c.l.b16 %v4405
    %v4993 = vunpack.c.h.b16 %v4405
    %v4994 = vunpack.c.l.b16 %v4406
    %v4995 = vunpack.c.h.b16 %v4406
    %v4996 = vunpack.c.l.b16 %v4407
    %v4997 = vunpack.c.h.b16 %v4407
    %v4998 = vunpack.c.l.b16 %v4408
    %v4999 = vunpack.c.h.b16 %v4408
    %v5000 = vunpack.c.l.b16 %v4409
    %v5001 = vunpack.c.h.b16 %v4409
    %v5002 = vunpack.c.l.b16 %v4410
    %v5003 = vunpack.c.h.b16 %v4410
    %v5004 = vunpack.c.l.b16 %v4411
    %v5005 = vunpack.c.h.b16 %v4411
    %v5006 = vunpack.c.l.b16 %v4412
    %v5007 = vunpack.c.h.b16 %v4412
    %v5008 = vunpack.c.l.b16 %v4413
    %v5009 = vunpack.c.h.b16 %v4413
    %v5010 = vunpack.c.l.b16 %v4414
    %v5011 = vunpack.c.h.b16 %v4414
    %v5012 = vunpack.c.l.b16 %v4415
    %v5013 = vunpack.c.h.b16 %v4415
    %v5014 = vunpack.c.l.b16 %v4416
    %v5015 = vunpack.c.h.b16 %v4416
    %v5016 = vunpack.c.l.b16 %v4417
    %v5017 = vunpack.c.h.b16 %v4417
    %v5018 = vunpack.c.l.b16 %v4418
    %v5019 = vunpack.c.h.b16 %v4418
    %v5020 = vunpack.c.l.b16 %v4419
    %v5021 = vunpack.c.h.b16 %v4419
    %v5022 = vunpack.c.l.b16 %v4420
    %v5023 = vunpack.c.h.b16 %v4420
    %v5024 = vunpack.c.l.b16 %v4421
    %v5025 = vunpack.c.h.b16 %v4421
    %v5026 = vunpack.c.l.b16 %v4422
    %v5027 = vunpack.c.h.b16 %v4422
    %v5028 = vunpack.c.l.b16 %v4423
    %v5029 = vunpack.c.h.b16 %v4423
    %v5030 = vunpack.c.l.b16 %v4424
    %v5031 = vunpack.c.h.b16 %v4424
    %v5032 = vunpack.c.l.b16 %v4425
    %v5033 = vunpack.c.h.b16 %v4425
    %v5034 = vunpack.c.l.b16 %v4426
    %v5035 = vunpack.c.h.b16 %v4426
    %v5036 = vunpack.c.l.b16 %v4427
    %v5037 = vunpack.c.h.b16 %v4427
    %v5038 = vunpack.c.l.b16 %v4428
    %v5039 = vunpack.c.h.b16 %v4428
    %v5040 = vunpack.c.l.b16 %v4429
    %v5041 = vunpack.c.h.b16 %v4429
    %v5042 = vunpack.c.l.b16 %v4430
    %v5043 = vunpack.c.h.b16 %v4430
    %v5044 = vunpack.c.l.b16 %v4431
    %v5045 = vunpack.c.h.b16 %v4431
    %v5046 = vunpack.c.l.b16 %v4432
    %v5047 = vunpack.c.h.b16 %v4432
    %v5048 = vunpack.c.l.b16 %v4433
    %v5049 = vunpack.c.h.b16 %v4433
    %v5050 = vunpack.c.l.b16 %v4434
    %v5051 = vunpack.c.h.b16 %v4434
    %v5052 = vunpack.c.l.b16 %v4435
    %v5053 = vunpack.c.h.b16 %v4435
    %v5054 = vunpack.c.l.b16 %v4436
    %v5055 = vunpack.c.h.b16 %v4436
    %v5056 = vunpack.c.l.b16 %v4437
    %v5057 = vunpack.c.h.b16 %v4437
    %v5058 = vunpack.c.l.b16 %v4438
    %v5059 = vunpack.c.h.b16 %v4438
    %v5060 = vunpack.c.l.b16 %v4439
    %v5061 = vunpack.c.h.b16 %v4439
    %v5062 = vunpack.c.l.b16 %v4440
    %v5063 = vunpack.c.h.b16 %v4440
    %v5064 = vunpack.c.l.b16 %v4441
    %v5065 = vunpack.c.h.b16 %v4441
    %v5066 = vunpack.c.l.b16 %v4442
    %v5067 = vunpack.c.h.b16 %v4442
    %v5068 = vunpack.c.l.b16 %v4443
    %v5069 = vunpack.c.h.b16 %v4443
    %v5070 = vunpack.c.l.b16 %v4444
    %v5071 = vunpack.c.h.b16 %v4444
    %v5072 = vunpack.c.l.b16 %v4445
    %v5073 = vunpack.c.h.b16 %v4445
    %v5074 = vunpack.c.l.b16 %v4446
    %v5075 = vunpack.c.h.b16 %v4446
    %v5076 = vunpack.c.l.b16 %v4447
    %v5077 = vunpack.c.h.b16 %v4447
    %v5078 = vunpack.c.l.b16 %v4448
    %v5079 = vunpack.c.h.b16 %v4448
    %v5080 = vunpack.c.l.b16 %v4449
    %v5081 = vunpack.c.h.b16 %v4449
    %v5082 = vunpack.c.l.b16 %v4450
    %v5083 = vunpack.c.h.b16 %v4450
    %v5084 = vunpack.c.l.b16 %v4451
    %v5085 = vunpack.c.h.b16 %v4451
    %v5086 = vunpack.c.l.b16 %v4452
    %v5087 = vunpack.c.h.b16 %v4452
    %v5088 = vunpack.c.l.b16 %v4453
    %v5089 = vunpack.c.h.b16 %v4453
    %v5090 = vunpack.c.l.b16 %v4454
    %v5091 = vunpack.c.h.b16 %v4454
    %v5092 = vunpack.c.l.b16 %v4455
    %v5093 = vunpack.c.h.b16 %v4455
    %v5094 = vunpack.c.l.b16 %v4456
    %v5095 = vunpack.c.h.b16 %v4456
    %v5096 = vunpack.c.l.b16 %v4457
    %v5097 = vunpack.c.h.b16 %v4457
    %v5098 = vunpack.c.l.b16 %v4458
    %v5099 = vunpack.c.h.b16 %v4458
    %v5100 = vunpack.c.l.b16 %v4459
    %v5101 = vunpack.c.h.b16 %v4459
    %v5102 = vunpack.c.l.b16 %v4460
    %v5103 = vunpack.c.h.b16 %v4460
    %v5104 = vunpack.c.l.b16 %v4461
    %v5105 = vunpack.c.h.b16 %v4461
    %v5106 = vunpack.c.l.b16 %v4462
    %v5107 = vunpack.c.h.b16 %v4462
    %v5108 = vunpack.c.l.b16 %v4463
    %v5109 = vunpack.c.h.b16 %v4463
    %v5110 = vunpack.c.l.b16 %v4464
    %v5111 = vunpack.c.h.b16 %v4464
    %v5112 = vunpack.c.l.b16 %v4465
    %v5113 = vunpack.c.h.b16 %v4465
    %v5114 = vunpack.c.l.b16 %v4466
    %v5115 = vunpack.c.h.b16 %v4466
    %v5116 = vunpack.c.l.b16 %v4467
    %v5117 = vunpack.c.h.b16 %v4467
    %v5118 = vunpack.c.l.b16 %v4468
    %v5119 = vunpack.c.h.b16 %v4468
    %v5120 = vunpack.c.l.b16 %v4469
    %v5121 = vunpack.c.h.b16 %v4469
    %v5122 = vunpack.c.l.b16 %v4470
    %v5123 = vunpack.c.h.b16 %v4470
    %v5124 = vunpack.c.l.b16 %v4471
    %v5125 = vunpack.c.h.b16 %v4471
    %v5126 = vunpack.c.l.b16 %v4472
    %v5127 = vunpack.c.h.b16 %v4472
    %v5128 = vunpack.c.l.b16 %v4473
    %v5129 = vunpack.c.h.b16 %v4473
    %v5130 = vunpack.c.l.b16 %v4474
    %v5131 = vunpack.c.h.b16 %v4474
    %v5132 = vunpack.c.l.b16 %v4475
    %v5133 = vunpack.c.h.b16 %v4475
    %v5134 = vunpack.c.l.b16 %v4476
    %v5135 = vunpack.c.h.b16 %v4476
    %v5136 = vunpack.c.l.b16 %v4477
    %v5137 = vunpack.c.h.b16 %v4477
    %v5138 = vunpack.c.l.b16 %v4478
    %v5139 = vunpack.c.h.b16 %v4478
    %v5140 = vunpack.c.l.b16 %v4479
    %v5141 = vunpack.c.h.b16 %v4479
    %v5142 = vunpack.c.l.b16 %v4480
    %v5143 = vunpack.c.h.b16 %v4480
    %v5144 = vunpack.c.l.b16 %v4481
    %v5145 = vunpack.c.h.b16 %v4481
    %v5146 = vunpack.c.l.b16 %v4482
    %v5147 = vunpack.c.h.b16 %v4482
    %v5148 = vunpack.c.l.b16 %v4483
    %v5149 = vunpack.c.h.b16 %v4483
    %v5150 = vunpack.c.l.b16 %v4484
    %v5151 = vunpack.c.h.b16 %v4484
    %v5152 = vunpack.c.l.b16 %v4485
    %v5153 = vunpack.c.h.b16 %v4485
    %v5154 = vunpack.c.l.b16 %v4486
    %v5155 = vunpack.c.h.b16 %v4486
    %v5156 = vunpack.c.l.b16 %v4487
    %v5157 = vunpack.c.h.b16 %v4487
    %v5158 = vunpack.c.l.b16 %v4488
    %v5159 = vunpack.c.h.b16 %v4488
    %v5160 = vunpack.c.l.b16 %v4489
    %v5161 = vunpack.c.h.b16 %v4489
    %v5162 = vunpack.c.l.b16 %v4490
    %v5163 = vunpack.c.h.b16 %v4490
    %v5164 = vunpack.c.l.b16 %v4491
    %v5165 = vunpack.c.h.b16 %v4491
    %v5166 = vunpack.c.l.b16 %v4492
    %v5167 = vunpack.c.h.b16 %v4492
    %v5168 = vunpack.c.l.b16 %v4493
    %v5169 = vunpack.c.h.b16 %v4493
    %v5170 = vunpack.c.l.b16 %v4494
    %v5171 = vunpack.c.h.b16 %v4494
    %v5172 = vunpack.c.l.b16 %v4495
    %v5173 = vunpack.c.h.b16 %v4495
    %v5174 = vunpack.c.l.b16 %v4496
    %v5175 = vunpack.c.h.b16 %v4496
    %v5176 = vunpack.c.l.b16 %v4497
    %v5177 = vunpack.c.h.b16 %v4497
    %v5178 = vunpack.c.l.b16 %v4498
    %v5179 = vunpack.c.h.b16 %v4498
    %v5180 = vunpack.c.l.b16 %v4499
    %v5181 = vunpack.c.h.b16 %v4499
    %v5182 = vunpack.c.l.b16 %v4500
    %v5183 = vunpack.c.h.b16 %v4500
    %v5184 = vunpack.c.l.b16 %v4501
    %v5185 = vunpack.c.h.b16 %v4501
    %v5186 = vunpack.c.l.b16 %v4502
    %v5187 = vunpack.c.h.b16 %v4502
    %v5188 = vunpack.c.l.b16 %v4503
    %v5189 = vunpack.c.h.b16 %v4503
    %v5190 = vunpack.c.l.b16 %v4504
    %v5191 = vunpack.c.h.b16 %v4504
    %v5192 = vunpack.c.l.b16 %v4505
    %v5193 = vunpack.c.h.b16 %v4505
    %v5194 = vunpack.c.l.b16 %v4506
    %v5195 = vunpack.c.h.b16 %v4506
    %v5196 = vunpack.c.l.b16 %v4507
    %v5197 = vunpack.c.h.b16 %v4507
    %v5198 = vunpack.c.l.b16 %v4508
    %v5199 = vunpack.c.h.b16 %v4508
    %v5200 = vunpack.c.l.b16 %v4509
    %v5201 = vunpack.c.h.b16 %v4509
    %v5202 = vunpack.c.l.b16 %v4510
    %v5203 = vunpack.c.h.b16 %v4510
    %v5204 = vunpack.c.l.b16 %v4511
    %v5205 = vunpack.c.h.b16 %v4511
    %v5206 = vunpack.c.l.b16 %v4512
    %v5207 = vunpack.c.h.b16 %v4512
    %v5208 = vunpack.c.l.b16 %v4513
    %v5209 = vunpack.c.h.b16 %v4513
    %v5210 = vunpack.c.l.b16 %v4514
    %v5211 = vunpack.c.h.b16 %v4514
    %v5212 = vunpack.c.l.b16 %v4515
    %v5213 = vunpack.c.h.b16 %v4515
    %v5214 = vunpack.c.l.b16 %v4516
    %v5215 = vunpack.c.h.b16 %v4516
    %v5216 = vunpack.c.l.b16 %v4517
    %v5217 = vunpack.c.h.b16 %v4517
    %v5218 = vunpack.c.l.b16 %v4518
    %v5219 = vunpack.c.h.b16 %v4518
    %v5220 = vunpack.c.l.b16 %v4519
    %v5221 = vunpack.c.h.b16 %v4519
    %v5222 = vunpack.c.l.b16 %v4520
    %v5223 = vunpack.c.h.b16 %v4520
    %v5224 = vunpack.c.l.b16 %v4521
    %v5225 = vunpack.c.h.b16 %v4521
    %v5226 = vunpack.c.l.b16 %v4522
    %v5227 = vunpack.c.h.b16 %v4522
    %v5228 = vunpack.c.l.b16 %v4523
    %v5229 = vunpack.c.h.b16 %v4523
    %v5230 = vunpack.c.l.b16 %v4524
    %v5231 = vunpack.c.h.b16 %v4524
    %v5232 = vunpack.c.l.b16 %v4525
    %v5233 = vunpack.c.h.b16 %v4525
    %v5234 = vunpack.c.l.b16 %v4526
    %v5235 = vunpack.c.h.b16 %v4526
    %v5236 = vunpack.c.l.b16 %v4527
    %v5237 = vunpack.c.h.b16 %v4527
    %v5238 = vunpack.c.l.b16 %v4528
    %v5239 = vunpack.c.h.b16 %v4528
    %v5240 = vunpack.c.l.b16 %v4529
    %v5241 = vunpack.c.h.b16 %v4529
    %v5242 = vunpack.c.l.b16 %v4530
    %v5243 = vunpack.c.h.b16 %v4530
    %v5244 = vunpack.c.l.b16 %v4531
    %v5245 = vunpack.c.h.b16 %v4531
    %v5246 = vunpack.c.l.b16 %v4532
    %v5247 = vunpack.c.h.b16 %v4532
    %v5248 = vunpack.c.l.b16 %v4533
    %v5249 = vunpack.c.h.b16 %v4533
    %v5250 = vunpack.c.l.b16 %v4534
    %v5251 = vunpack.c.h.b16 %v4534
    %v5252 = vunpack.c.l.b16 %v4535
    %v5253 = vunpack.c.h.b16 %v4535
    %v5254 = vunpack.c.l.b16 %v4536
    %v5255 = vunpack.c.h.b16 %v4536
    %v5256 = vunpack.c.l.b16 %v4537
    %v5257 = vunpack.c.h.b16 %v4537
    %v5258 = vunpack.c.l.b16 %v4538
    %v5259 = vunpack.c.h.b16 %v4538
    %v5260 = vunpack.c.l.b16 %v4539
    %v5261 = vunpack.c.h.b16 %v4539
    %v5262 = vunpack.c.l.b16 %v4540
    %v5263 = vunpack.c.h.b16 %v4540
    %v5264 = vunpack.c.l.b16 %v4541
    %v5265 = vunpack.c.h.b16 %v4541
    %v5266 = vunpack.c.l.b16 %v4542
    %v5267 = vunpack.c.h.b16 %v4542
    %v5268 = vunpack.c.l.b16 %v4543
    %v5269 = vunpack.c.h.b16 %v4543
    %v5270 = vunpack.c.l.b16 %v4544
    %v5271 = vunpack.c.h.b16 %v4544
    %v5272 = vunpack.c.l.b16 %v4545
    %v5273 = vunpack.c.h.b16 %v4545
    %v5274 = vunpack.c.l.b16 %v4546
    %v5275 = vunpack.c.h.b16 %v4546
    %v5276 = vunpack.c.l.b16 %v4547
    %v5277 = vunpack.c.h.b16 %v4547
    %v5278 = vunpack.c.l.b16 %v4548
    %v5279 = vunpack.c.h.b16 %v4548
    %v5280 = vunpack.c.l.b16 %v4549
    %v5281 = vunpack.c.h.b16 %v4549
    %v5282 = vunpack.c.l.b16 %v4550
    %v5283 = vunpack.c.h.b16 %v4550
    %v5284 = vunpack.c.l.b16 %v4551
    %v5285 = vunpack.c.h.b16 %v4551
    %v5286 = vunpack.c.l.b16 %v4552
    %v5287 = vunpack.c.h.b16 %v4552
    %v5288 = vunpack.c.l.b16 %v4553
    %v5289 = vunpack.c.h.b16 %v4553
    %v5290 = vunpack.c.l.b16 %v4554
    %v5291 = vunpack.c.h.b16 %v4554
    %v5292 = vunpack.c.l.b16 %v4555
    %v5293 = vunpack.c.h.b16 %v4555
    %v5294 = vunpack.c.l.b16 %v4556
    %v5295 = vunpack.c.h.b16 %v4556
    %v5296 = vunpack.c.l.b16 %v4557
    %v5297 = vunpack.c.h.b16 %v4557
    %v5298 = vunpack.c.l.b16 %v4558
    %v5299 = vunpack.c.h.b16 %v4558
    %v5300 = vunpack.c.l.b16 %v4559
    %v5301 = vunpack.c.h.b16 %v4559
    %v5302 = vunpack.c.l.b16 %v4560
    %v5303 = vunpack.c.h.b16 %v4560
    %v5304 = vunpack.c.l.b16 %v4561
    %v5305 = vunpack.c.h.b16 %v4561
    %v5306 = vunpack.c.l.b16 %v4562
    %v5307 = vunpack.c.h.b16 %v4562
    %v5308 = vunpack.c.l.b16 %v4563
    %v5309 = vunpack.c.h.b16 %v4563
    %v5310 = vunpack.c.l.b16 %v4564
    %v5311 = vunpack.c.h.b16 %v4564
    %v5312 = vunpack.c.l.b16 %v4565
    %v5313 = vunpack.c.h.b16 %v4565
    %v5314 = vunpack.c.l.b16 %v4566
    %v5315 = vunpack.c.h.b16 %v4566
    %v5316 = vunpack.c.l.b16 %v4567
    %v5317 = vunpack.c.h.b16 %v4567
    %v5318 = vunpack.c.l.b16 %v4568
    %v5319 = vunpack.c.h.b16 %v4568
    %v5320 = vunpack.c.l.b16 %v4569
    %v5321 = vunpack.c.h.b16 %v4569
    %v5322 = vunpack.c.l.b16 %v4570
    %v5323 = vunpack.c.h.b16 %v4570
    %v5324 = vunpack.c.l.b16 %v4571
    %v5325 = vunpack.c.h.b16 %v4571
    %v5326 = vunpack.c.l.b16 %v4572
    %v5327 = vunpack.c.h.b16 %v4572
    %v5328 = vunpack.c.l.b16 %v4573
    %v5329 = vunpack.c.h.b16 %v4573
    %v5330 = vunpack.c.l.b16 %v4574
    %v5331 = vunpack.c.h.b16 %v4574
    %v5332 = vunpack.c.l.b16 %v4575
    %v5333 = vunpack.c.h.b16 %v4575
    %v5334 = vunpack.c.l.b16 %v4576
    %v5335 = vunpack.c.h.b16 %v4576
    %v5336 = vunpack.c.l.b16 %v4577
    %v5337 = vunpack.c.h.b16 %v4577
    %v5338 = vunpack.c.l.b16 %v4578
    %v5339 = vunpack.c.h.b16 %v4578
    %v5340 = vunpack.c.l.b16 %v4579
    %v5341 = vunpack.c.h.b16 %v4579
    %v5342 = vunpack.c.l.b16 %v4580
    %v5343 = vunpack.c.h.b16 %v4580
    %v5344 = vunpack.c.l.b16 %v4581
    %v5345 = vunpack.c.h.b16 %v4581
    %v5346 = vunpack.c.l.b16 %v4582
    %v5347 = vunpack.c.h.b16 %v4582
    %v5348 = vunpack.c.l.b16 %v4583
    %v5349 = vunpack.c.h.b16 %v4583
    %v5350 = vunpack.c.l.b16 %v4584
    %v5351 = vunpack.c.h.b16 %v4584
    %v5352 = vunpack.c.l.b16 %v4585
    %v5353 = vunpack.c.h.b16 %v4585
    %v5354 = vunpack.c.l.b16 %v4586
    %v5355 = vunpack.c.h.b16 %v4586
    %v5356 = vunpack.c.l.b16 %v4587
    %v5357 = vunpack.c.h.b16 %v4587
    %v5358 = vunpack.c.l.b16 %v4588
    %v5359 = vunpack.c.h.b16 %v4588
    %v5360 = vunpack.c.l.b16 %v4589
    %v5361 = vunpack.c.h.b16 %v4589
    %v5362 = vunpack.c.l.b16 %v4590
    %v5363 = vunpack.c.h.b16 %v4590
    %v5364 = vunpack.c.l.b16 %v4591
    %v5365 = vunpack.c.h.b16 %v4591
    %v5366 = vunpack.c.l.b16 %v4592
    %v5367 = vunpack.c.h.b16 %v4592
    %v5368 = vunpack.c.l.b16 %v4593
    %v5369 = vunpack.c.h.b16 %v4593
    %v5370 = vunpack.c.l.b16 %v4594
    %v5371 = vunpack.c.h.b16 %v4594
    %v5372 = vunpack.c.l.b16 %v4595
    %v5373 = vunpack.c.h.b16 %v4595
    %v5374 = vunpack.c.l.b16 %v4596
    %v5375 = vunpack.c.h.b16 %v4596
    %v5376 = vunpack.c.l.b16 %v4597
    %v5377 = vunpack.c.h.b16 %v4597
    %v5378 = vunpack.c.l.b16 %v4598
    %v5379 = vunpack.c.h.b16 %v4598
    %v5380 = vunpack.c.l.b16 %v4599
    %v5381 = vunpack.c.h.b16 %v4599
    %v5382 = vunpack.c.l.b16 %v4600
    %v5383 = vunpack.c.h.b16 %v4600
    %v5384 = vunpack.c.l.b16 %v4601
    %v5385 = vunpack.c.h.b16 %v4601
    %v5386 = vunpack.c.l.b16 %v4602
    %v5387 = vunpack.c.h.b16 %v4602
    %v5388 = vunpack.c.l.b16 %v4603
    %v5389 = vunpack.c.h.b16 %v4603
    %v5390 = vunpack.c.l.b16 %v4604
    %v5391 = vunpack.c.h.b16 %v4604
    %v5392 = vunpack.c.l.b16 %v4605
    %v5393 = vunpack.c.h.b16 %v4605
    %v5394 = vunpack.c.l.b16 %v4606
    %v5395 = vunpack.c.h.b16 %v4606
    %v5396 = vunpack.c.l.b16 %v4607
    %v5397 = vunpack.c.h.b16 %v4607
    %v5398 = vunpack.c.l.b16 %v4608
    %v5399 = vunpack.c.h.b16 %v4608
    %v5400 = vunpack.c.l.b16 %v4609
    %v5401 = vunpack.c.h.b16 %v4609
    %v5402 = vunpack.c.l.b16 %v4610
    %v5403 = vunpack.c.h.b16 %v4610
    %v5404 = vunpack.c.l.b16 %v4611
    %v5405 = vunpack.c.h.b16 %v4611
    %v5406 = vunpack.c.l.b16 %v4612
    %v5407 = vunpack.c.h.b16 %v4612
    %v5408 = vunpack.c.l.b16 %v4613
    %v5409 = vunpack.c.h.b16 %v4613
    %v5410 = vunpack.c.l.b16 %v4614
    %v5411 = vunpack.c.h.b16 %v4614
    %v5412 = vunpack.c.l.b16 %v4615
    %v5413 = vunpack.c.h.b16 %v4615
    %v5414 = vunpack.c.l.b16 %v4616
    %v5415 = vunpack.c.h.b16 %v4616
    %v5416 = vunpack.c.l.b16 %v4617
    %v5417 = vunpack.c.h.b16 %v4617
    %v5418 = vunpack.c.l.b16 %v4618
    %v5419 = vunpack.c.h.b16 %v4618
    %v5420 = vunpack.c.l.b16 %v4619
    %v5421 = vunpack.c.h.b16 %v4619
    %v5422 = vunpack.c.l.b16 %v4620
    %v5423 = vunpack.c.h.b16 %v4620
    %v5424 = vunpack.c.l.b16 %v4621
    %v5425 = vunpack.c.h.b16 %v4621
    %v5426 = vunpack.c.l.b16 %v4622
    %v5427 = vunpack.c.h.b16 %v4622
    %v5428 = vunpack.c.l.b16 %v4623
    %v5429 = vunpack.c.h.b16 %v4623
    %v5430 = vunpack.c.l.b16 %v4624
    %v5431 = vunpack.c.h.b16 %v4624
    %v5432 = vunpack.c.l.b16 %v4625
    %v5433 = vunpack.c.h.b16 %v4625
    %v5434 = vunpack.c.l.b16 %v4626
    %v5435 = vunpack.c.h.b16 %v4626
    %v5436 = vunpack.c.l.b16 %v4627
    %v5437 = vunpack.c.h.b16 %v4627
    %v5438 = vpack.c.b16 %v4934, %v4926
    %v5439 = vpack.c.b16 %v4935, %v4927
    %v5440 = vpack.c.b16 %v4936, %v4928
    %v5441 = vpack.c.b16 %v4937, %v4929
    %v5442 = vpack.c.b16 %v4938, %v4930
    %v5443 = vpack.c.b16 %v4939, %v4931
    %v5444 = vpack.c.b16 %v4940, %v4932
    %v5445 = vpack.c.b16 %v4941, %v4933
    %v5446 = vpack.c.b16 %v4950, %v4942
    %v5447 = vpack.c.b16 %v4951, %v4943
    %v5448 = vpack.c.b16 %v4952, %v4944
    %v5449 = vpack.c.b16 %v4953, %v4945
    %v5450 = vpack.c.b16 %v4954, %v4946
    %v5451 = vpack.c.b16 %v4955, %v4947
    %v5452 = vpack.c.b16 %v4956, %v4948
    %v5453 = vpack.c.b16 %v4957, %v4949
    %v5454 = vpack.c.b16 %v4966, %v4958
    %v5455 = vpack.c.b16 %v4967, %v4959
    %v5456 = vpack.c.b16 %v4968, %v4960
    %v5457 = vpack.c.b16 %v4969, %v4961
    %v5458 = vpack.c.b16 %v4970, %v4962
    %v5459 = vpack.c.b16 %v4971, %v4963
    %v5460 = vpack.c.b16 %v4972, %v4964
    %v5461 = vpack.c.b16 %v4973, %v4965
    %v5462 = vpack.c.b16 %v4982, %v4974
    %v5463 = vpack.c.b16 %v4983, %v4975
    %v5464 = vpack.c.b16 %v4984, %v4976
    %v5465 = vpack.c.b16 %v4985, %v4977
    %v5466 = vpack.c.b16 %v4986, %v4978
    %v5467 = vpack.c.b16 %v4987, %v4979
    %v5468 = vpack.c.b16 %v4988, %v4980
    %v5469 = vpack.c.b16 %v4989, %v4981
    %v5470 = vpack.c.b16 %v4998, %v4990
    %v5471 = vpack.c.b16 %v4999, %v4991
    %v5472 = vpack.c.b16 %v5000, %v4992
    %v5473 = vpack.c.b16 %v5001, %v4993
    %v5474 = vpack.c.b16 %v5002, %v4994
    %v5475 = vpack.c.b16 %v5003, %v4995
    %v5476 = vpack.c.b16 %v5004, %v4996
    %v5477 = vpack.c.b16 %v5005, %v4997
    %v5478 = vpack.c.b16 %v5014, %v5006
    %v5479 = vpack.c.b16 %v5015, %v5007
    %v5480 = vpack.c.b16 %v5016, %v5008
    %v5481 = vpack.c.b16 %v5017, %v5009
    %v5482 = vpack.c.b16 %v5018, %v5010
    %v5483 = vpack.c.b16 %v5019, %v5011
    %v5484 = vpack.c.b16 %v5020, %v5012
    %v5485 = vpack.c.b16 %v5021, %v5013
    %v5486 = vpack.c.b16 %v5030, %v5022
    %v5487 = vpack.c.b16 %v5031, %v5023
    %v5488 = vpack.c.b16 %v5032, %v5024
    %v5489 = vpack.c.b16 %v5033, %v5025
    %v5490 = vpack.c.b16 %v5034, %v5026
    %v5491 = vpack.c.b16 %v5035, %v5027
    %v5492 = vpack.c.b16 %v5036, %v5028
    %v5493 = vpack.c.b16 %v5037, %v5029
    %v5494 = vpack.c.b16 %v5046, %v5038
    %v5495 = vpack.c.b16 %v5047, %v5039
    %v5496 = vpack.c.b16 %v5048, %v5040
    %v5497 = vpack.c.b16 %v5049, %v5041
    %v5498 = vpack.c.b16 %v5050, %v5042
    %v5499 = vpack.c.b16 %v5051, %v5043
    %v5500 = vpack.c.b16 %v5052, %v5044
    %v5501 = vpack.c.b16 %v5053, %v5045
    %v5502 = vpack.c.b16 %v5062, %v5054
    %v5503 = vpack.c.b16 %v5063, %v5055
    %v5504 = vpack.c.b16 %v5064, %v5056
    %v5505 = vpack.c.b16 %v5065, %v5057
    %v5506 = vpack.c.b16 %v5066, %v5058
    %v5507 = vpack.c.b16 %v5067, %v5059
    %v5508 = vpack.c.b16 %v5068, %v5060
    %v5509 = vpack.c.b16 %v5069, %v5061
    %v5510 = vpack.c.b16 %v5078, %v5070
    %v5511 = vpack.c.b16 %v5079, %v5071
    %v5512 = vpack.c.b16 %v5080, %v5072
    %v5513 = vpack.c.b16 %v5081, %v5073
    %v5514 = vpack.c.b16 %v5082, %v5074
    %v5515 = vpack.c.b16 %v5083, %v5075
    %v5516 = vpack.c.b16 %v5084, %v5076
    %v5517 = vpack.c.b16 %v5085, %v5077
    %v5518 = vpack.c.b16 %v5094, %v5086
    %v5519 = vpack.c.b16 %v5095, %v5087
    %v5520 = vpack.c.b16 %v5096, %v5088
    %v5521 = vpack.c.b16 %v5097, %v5089
    %v5522 = vpack.c.b16 %v5098, %v5090
    %v5523 = vpack.c.b16 %v5099, %v5091
    %v5524 = vpack.c.b16 %v5100, %v5092
    %v5525 = vpack.c.b16 %v5101, %v5093
    %v5526 = vpack.c.b16 %v5110, %v5102
    %v5527 = vpack.c.b16 %v5111, %v5103
    %v5528 = vpack.c.b16 %v5112, %v5104
    %v5529 = vpack.c.b16 %v5113, %v5105
    %v5530 = vpack.c.b16 %v5114, %v5106
    %v5531 = vpack.c.b16 %v5115, %v5107
    %v5532 = vpack.c.b16 %v5116, %v5108
    %v5533 = vpack.c.b16 %v5117, %v5109
    %v5534 = vpack.c.b16 %v5126, %v5118
    %v5535 = vpack.c.b16 %v5127, %v5119
    %v5536 = vpack.c.b16 %v5128, %v5120
    %v5537 = vpack.c.b16 %v5129, %v5121
    %v5538 = vpack.c.b16 %v5130, %v5122
    %v5539 = vpack.c.b16 %v5131, %v5123
    %v5540 = vpack.c.b16 %v5132, %v5124
    %v5541 = vpack.c.b16 %v5133, %v5125
    %v5542 = vpack.c.b16 %v5142, %v5134
    %v5543 = vpack.c.b16 %v5143, %v5135
    %v5544 = vpack.c.b16 %v5144, %v5136
    %v5545 = vpack.c.b16 %v5145, %v5137
    %v5546 = vpack.c.b16 %v5146, %v5138
    %v5547 = vpack.c.b16 %v5147, %v5139
    %v5548 = vpack.c.b16 %v5148, %v5140
    %v5549 = vpack.c.b16 %v5149, %v5141
    %v5550 = vpack.c.b16 %v5158, %v5150
    %v5551 = vpack.c.b16 %v5159, %v5151
    %v5552 = vpack.c.b16 %v5160, %v5152
    %v5553 = vpack.c.b16 %v5161, %v5153
    %v5554 = vpack.c.b16 %v5162, %v5154
    %v5555 = vpack.c.b16 %v5163, %v5155
    %v5556 = vpack.c.b16 %v5164, %v5156
    %v5557 = vpack.c.b16 %v5165, %v5157
    %v5558 = vpack.c.b16 %v5174, %v5166
    %v5559 = vpack.c.b16 %v5175, %v5167
    %v5560 = vpack.c.b16 %v5176, %v5168
    %v5561 = vpack.c.b16 %v5177, %v5169
    %v5562 = vpack.c.b16 %v5178, %v5170
    %v5563 = vpack.c.b16 %v5179, %v5171
    %v5564 = vpack.c.b16 %v5180, %v5172
    %v5565 = vpack.c.b16 %v5181, %v5173
    %v5566 = vpack.c.b16 %v5190, %v5182
    %v5567 = vpack.c.b16 %v5191, %v5183
    %v5568 = vpack.c.b16 %v5192, %v5184
    %v5569 = vpack.c.b16 %v5193, %v5185
    %v5570 = vpack.c.b16 %v5194, %v5186
    %v5571 = vpack.c.b16 %v5195, %v5187
    %v5572 = vpack.c.b16 %v5196, %v5188
    %v5573 = vpack.c.b16 %v5197, %v5189
    %v5574 = vpack.c.b16 %v5206, %v5198
    %v5575 = vpack.c.b16 %v5207, %v5199
    %v5576 = vpack.c.b16 %v5208, %v5200
    %v5577 = vpack.c.b16 %v5209, %v5201
    %v5578 = vpack.c.b16 %v5210, %v5202
    %v5579 = vpack.c.b16 %v5211, %v5203
    %v5580 = vpack.c.b16 %v5212, %v5204
    %v5581 = vpack.c.b16 %v5213, %v5205
    %v5582 = vpack.c.b16 %v5222, %v5214
    %v5583 = vpack.c.b16 %v5223, %v5215
    %v5584 = vpack.c.b16 %v5224, %v5216
    %v5585 = vpack.c.b16 %v5225, %v5217
    %v5586 = vpack.c.b16 %v5226, %v5218
    %v5587 = vpack.c.b16 %v5227, %v5219
    %v5588 = vpack.c.b16 %v5228, %v5220
    %v5589 = vpack.c.b16 %v5229, %v5221
    %v5590 = vpack.c.b16 %v5238, %v5230
    %v5591 = vpack.c.b16 %v5239, %v5231
    %v5592 = vpack.c.b16 %v5240, %v5232
    %v5593 = vpack.c.b16 %v5241, %v5233
    %v5594 = vpack.c.b16 %v5242, %v5234
    %v5595 = vpack.c.b16 %v5243, %v5235
    %v5596 = vpack.c.b16 %v5244, %v5236
    %v5597 = vpack.c.b16 %v5245, %v5237
    %v5598 = vpack.c.b16 %v5254, %v5246
    %v5599 = vpack.c.b16 %v5255, %v5247
    %v5600 = vpack.c.b16 %v5256, %v5248
    %v5601 = vpack.c.b16 %v5257, %v5249
    %v5602 = vpack.c.b16 %v5258, %v5250
    %v5603 = vpack.c.b16 %v5259, %v5251
    %v5604 = vpack.c.b16 %v5260, %v5252
    %v5605 = vpack.c.b16 %v5261, %v5253
    %v5606 = vpack.c.b16 %v5270, %v5262
    %v5607 = vpack.c.b16 %v5271, %v5263
    %v5608 = vpack.c.b16 %v5272, %v5264
    %v5609 = vpack.c.b16 %v5273, %v5265
    %v5610 = vpack.c.b16 %v5274, %v5266
    %v5611 = vpack.c.b16 %v5275, %v5267
    %v5612 = vpack.c.b16 %v5276, %v5268
    %v5613 = vpack.c.b16 %v5277, %v5269
    %v5614 = vpack.c.b16 %v5286, %v5278
    %v5615 = vpack.c.b16 %v5287, %v5279
    %v5616 = vpack.c.b16 %v5288, %v5280
    %v5617 = vpack.c.b16 %v5289, %v5281
    %v5618 = vpack.c.b16 %v5290, %v5282
    %v5619 = vpack.c.b16 %v5291, %v5283
    %v5620 = vpack.c.b16 %v5292, %v5284
    %v5621 = vpack.c.b16 %v5293, %v5285
    %v5622 = vpack.c.b16 %v5302, %v5294
    %v5623 = vpack.c.b16 %v5303, %v5295
    %v5624 = vpack.c.b16 %v5304, %v5296
    %v5625 = vpack.c.b16 %v5305, %v5297
    %v5626 = vpack.c.b16 %v5306, %v5298
    %v5627 = vpack.c.b16 %v5307, %v5299
    %v5628 = vpack.c.b16 %v5308, %v5300
    %v5629 = vpack.c.b16 %v5309, %v5301
    %v5630 = vpack.c.b16 %v5318, %v5310
    %v5631 = vpack.c.b16 %v5319, %v5311
    %v5632 = vpack.c.b16 %v5320, %v5312
    %v5633 = vpack.c.b16 %v5321, %v5313
    %v5634 = vpack.c.b16 %v5322, %v5314
    %v5635 = vpack.c.b16 %v5323, %v5315
    %v5636 = vpack.c.b16 %v5324, %v5316
    %v5637 = vpack.c.b16 %v5325, %v5317
    %v5638 = vpack.c.b16 %v5334, %v5326
    %v5639 = vpack.c.b16 %v5335, %v5327
    %v5640 = vpack.c.b16 %v5336, %v5328
    %v5641 = vpack.c.b16 %v5337, %v5329
    %v5642 = vpack.c.b16 %v5338, %v5330
    %v5643 = vpack.c.b16 %v5339, %v5331
    %v5644 = vpack.c.b16 %v5340, %v5332
    %v5645 = vpack.c.b16 %v5341, %v5333
    %v5646 = vpack.c.b16 %v5350, %v5342
    %v5647 = vpack.c.b16 %v5351, %v5343
    %v5648 = vpack.c.b16 %v5352, %v5344
    %v5649 = vpack.c.b16 %v5353, %v5345
    %v5650 = vpack.c.b16 %v5354, %v5346
    %v5651 = vpack.c.b16 %v5355, %v5347
    %v5652 = vpack.c.b16 %v5356, %v5348
    %v5653 = vpack.c.b16 %v5357, %v5349
    %v5654 = vpack.c.b16 %v5366, %v5358
    %v5655 = vpack.c.b16 %v5367, %v5359
    %v5656 = vpack.c.b16 %v5368, %v5360
    %v5657 = vpack.c.b16 %v5369, %v5361
    %v5658 = vpack.c.b16 %v5370, %v5362
    %v5659 = vpack.c.b16 %v5371, %v5363
    %v5660 = vpack.c.b16 %v5372, %v5364
    %v5661 = vpack.c.b16 %v5373, %v5365
    %v5662 = vpack.c.b16 %v5382, %v5374
    %v5663 = vpack.c.b16 %v5383, %v5375
    %v5664 = vpack.c.b16 %v5384, %v5376
    %v5665 = vpack.c.b16 %v5385, %v5377
    %v5666 = vpack.c.b16 %v5386, %v5378
    %v5667 = vpack.c.b16 %v5387, %v5379
    %v5668 = vpack.c.b16 %v5388, %v5380
    %v5669 = vpack.c.b16 %v5389, %v5381
    %v5670 = vpack.c.b16 %v5398, %v5390
    %v5671 = vpack.c.b16 %v5399, %v5391
    %v5672 = vpack.c.b16 %v5400, %v5392
    %v5673 = vpack.c.b16 %v5401, %v5393
    %v5674 = vpack.c.b16 %v5402, %v5394
    %v5675 = vpack.c.b16 %v5403, %v5395
    %v5676 = vpack.c.b16 %v5404, %v5396
    %v5677 = vpack.c.b16 %v5405, %v5397
    %v5678 = vpack.c.b16 %v5414, %v5406
    %v5679 = vpack.c.b16 %v5415, %v5407
    %v5680 = vpack.c.b16 %v5416, %v5408
    %v5681 = vpack.c.b16 %v5417, %v5409
    %v5682 = vpack.c.b16 %v5418, %v5410
    %v5683 = vpack.c.b16 %v5419, %v5411
    %v5684 = vpack.c.b16 %v5420, %v5412
    %v5685 = vpack.c.b16 %v5421, %v5413
    %v5686 = vpack.c.b16 %v5430, %v5422
    %v5687 = vpack.c.b16 %v5431, %v5423
    %v5688 = vpack.c.b16 %v5432, %v5424
    %v5689 = vpack.c.b16 %v5433, %v5425
    %v5690 = vpack.c.b16 %v5434, %v5426
    %v5691 = vpack.c.b16 %v5435, %v5427
    %v5692 = vpack.c.b16 %v5436, %v5428
    %v5693 = vpack.c.b16 %v5437, %v5429
    %5950 = vmatprep.subr.bf16.mxu0 %v5495
    %5951 = vmatpush1.bf16.msra.mxu0 %v5494
    %5952 = vmatprep.subr.bf16.mxu0 %v5487
    %5953 = vmatpush1.bf16.msra.mxu0 %v5486
    %5954 = vmatprep.subr.bf16.mxu0 %v5479
    %5955 = vmatpush1.bf16.msra.mxu0 %v5478
    %5956 = vmatprep.subr.bf16.mxu0 %v5471
    %5957 = vmatpush1.bf16.msra.mxu0 %v5470
    %5958 = vmatprep.subr.bf16.mxu0 %v5463
    %5959 = vmatpush1.bf16.msra.mxu0 %v5462
    %5960 = vmatprep.subr.bf16.mxu0 %v5455
    %5961 = vmatpush1.bf16.msra.mxu0 %v5454
    %5962 = vmatprep.subr.bf16.mxu0 %v5447
    %5963 = vmatpush1.bf16.msra.mxu0 %v5446
    %5964 = vmatprep.subr.bf16.mxu0 %v5439
    %5965 = vmatpush1.bf16.msra.mxu0 %v5438
    %5966 = vmatprep.subr.bf16.mxu0 %v5559
    %5967 = vmatpush2.bf16.msra.mxu0 %v5558
    %5968 = vmatprep.subr.bf16.mxu0 %v5551
    %5969 = vmatpush2.bf16.msra.mxu0 %v5550
    %5970 = vmatprep.subr.bf16.mxu0 %v5543
    %5971 = vmatpush2.bf16.msra.mxu0 %v5542
    %5972 = vmatprep.subr.bf16.mxu0 %v5535
    %5973 = vmatpush2.bf16.msra.mxu0 %v5534
    %5974 = vmatprep.subr.bf16.mxu0 %v5527
    %5975 = vmatpush2.bf16.msra.mxu0 %v5526
    %5976 = vmatprep.subr.bf16.mxu0 %v5519
    %5977 = vmatpush2.bf16.msra.mxu0 %v5518
    %5978 = vmatprep.subr.bf16.mxu0 %v5511
    %5979 = vmatpush2.bf16.msra.mxu0 %v5510
    %5980 = vmatprep.subr.bf16.mxu0 %v5503
    %5981 = vmatpush2.bf16.msra.mxu0 %v5502
    %5982 = vmatprep.mubr.bf16.mxu0 %v4369
    %5983 = vmatmul.mubr.bf16.gmra.mxu0 %v4368
    %v5984 = vpop.f32.mrf.mxu0
    %v5985 = vadd.f32 %v4633, %v5984
    %v5986 = vpop.f32.mrf.mxu0
    %v5987 = vadd.f32 %v4637, %v5986
    %v5988 = vpop.f32.mrf.mxu0
    %v5989 = vpop.f32.mrf.mxu0
    %5990 = vdwg.mxu0
    %5991 = vmatprep.subr.bf16.mxu0 %v5623
    %5992 = vmatpush1.bf16.msra.mxu0 %v5622
    %5993 = vmatprep.subr.bf16.mxu0 %v5615
    %5994 = vmatpush1.bf16.msra.mxu0 %v5614
    %5995 = vmatprep.subr.bf16.mxu0 %v5607
    %5996 = vmatpush1.bf16.msra.mxu0 %v5606
    %5997 = vmatprep.subr.bf16.mxu0 %v5599
    %5998 = vmatpush1.bf16.msra.mxu0 %v5598
    %5999 = vmatprep.subr.bf16.mxu0 %v5591
    %6000 = vmatpush1.bf16.msra.mxu0 %v5590
    %6001 = vmatprep.subr.bf16.mxu0 %v5583
    %6002 = vmatpush1.bf16.msra.mxu0 %v5582
    %6003 = vmatprep.subr.bf16.mxu0 %v5575
    %6004 = vmatpush1.bf16.msra.mxu0 %v5574
    %6005 = vmatprep.subr.bf16.mxu0 %v5567
    %6006 = vmatpush1.bf16.msra.mxu0 %v5566
    %6007 = vmatprep.subr.bf16.mxu0 %v5687
    %6008 = vmatpush2.bf16.msra.mxu0 %v5686
    %6009 = vmatprep.subr.bf16.mxu0 %v5679
    %6010 = vmatpush2.bf16.msra.mxu0 %v5678
    %6011 = vmatprep.subr.bf16.mxu0 %v5671
    %6012 = vmatpush2.bf16.msra.mxu0 %v5670
    %6013 = vmatprep.subr.bf16.mxu0 %v5663
    %6014 = vmatpush2.bf16.msra.mxu0 %v5662
    %6015 = vmatprep.subr.bf16.mxu0 %v5655
    %6016 = vmatpush2.bf16.msra.mxu0 %v5654
    %6017 = vmatprep.subr.bf16.mxu0 %v5647
    %6018 = vmatpush2.bf16.msra.mxu0 %v5646
    %6019 = vmatprep.subr.bf16.mxu0 %v5639
    %6020 = vmatpush2.bf16.msra.mxu0 %v5638
    %6021 = vmatprep.subr.bf16.mxu0 %v5631
    %6022 = vmatpush2.bf16.msra.mxu0 %v5630
    %6023 = vmatprep.mubr.bf16.mxu0 %v4371
    %6024 = vmatmul.mubr.bf16.gmra.mxu0 %v4370
    %v6025 = vpop.f32.mrf.mxu0
    %v6026 = vadd.f32 %v5985, %v6025
    %v6027 = vpop.f32.mrf.mxu0
    %v6028 = vadd.f32 %v5987, %v6027
    %v6029 = vpop.f32.mrf.mxu0
    %v6030 = vpop.f32.mrf.mxu0
    %6031 = vdwg.mxu0
    %6032 = vmatprep.subr.bf16.mxu0 %v5497
    %6033 = vmatpush1.bf16.msra.mxu0 %v5496
    %6034 = vmatprep.subr.bf16.mxu0 %v5489
    %6035 = vmatpush1.bf16.msra.mxu0 %v5488
    %6036 = vmatprep.subr.bf16.mxu0 %v5481
    %6037 = vmatpush1.bf16.msra.mxu0 %v5480
    %6038 = vmatprep.subr.bf16.mxu0 %v5473
    %6039 = vmatpush1.bf16.msra.mxu0 %v5472
    %6040 = vmatprep.subr.bf16.mxu0 %v5465
    %6041 = vmatpush1.bf16.msra.mxu0 %v5464
    %6042 = vmatprep.subr.bf16.mxu0 %v5457
    %6043 = vmatpush1.bf16.msra.mxu0 %v5456
    %6044 = vmatprep.subr.bf16.mxu0 %v5449
    %6045 = vmatpush1.bf16.msra.mxu0 %v5448
    %6046 = vmatprep.subr.bf16.mxu0 %v5441
    %6047 = vmatpush1.bf16.msra.mxu0 %v5440
    %6048 = vmatprep.subr.bf16.mxu0 %v5561
    %6049 = vmatpush2.bf16.msra.mxu0 %v5560
    %6050 = vmatprep.subr.bf16.mxu0 %v5553
    %6051 = vmatpush2.bf16.msra.mxu0 %v5552
    %6052 = vmatprep.subr.bf16.mxu0 %v5545
    %6053 = vmatpush2.bf16.msra.mxu0 %v5544
    %6054 = vmatprep.subr.bf16.mxu0 %v5537
    %6055 = vmatpush2.bf16.msra.mxu0 %v5536
    %6056 = vmatprep.subr.bf16.mxu0 %v5529
    %6057 = vmatpush2.bf16.msra.mxu0 %v5528
    %6058 = vmatprep.subr.bf16.mxu0 %v5521
    %6059 = vmatpush2.bf16.msra.mxu0 %v5520
    %6060 = vmatprep.subr.bf16.mxu0 %v5513
    %6061 = vmatpush2.bf16.msra.mxu0 %v5512
    %6062 = vmatprep.subr.bf16.mxu0 %v5505
    %6063 = vmatpush2.bf16.msra.mxu0 %v5504
    %6064 = vmatprep.mubr.bf16.mxu0 %v4369
    %6065 = vmatmul.mubr.bf16.gmra.mxu0 %v4368
    %v6066 = vpop.f32.mrf.mxu0
    %v6067 = vadd.f32 %v4641, %v6066
    %v6068 = vpop.f32.mrf.mxu0
    %v6069 = vadd.f32 %v4645, %v6068
    %v6070 = vpop.f32.mrf.mxu0
    %v6071 = vpop.f32.mrf.mxu0
    %6072 = vdwg.mxu0
    %6073 = vmatprep.subr.bf16.mxu0 %v5625
    %6074 = vmatpush1.bf16.msra.mxu0 %v5624
    %6075 = vmatprep.subr.bf16.mxu0 %v5617
    %6076 = vmatpush1.bf16.msra.mxu0 %v5616
    %6077 = vmatprep.subr.bf16.mxu0 %v5609
    %6078 = vmatpush1.bf16.msra.mxu0 %v5608
    %6079 = vmatprep.subr.bf16.mxu0 %v5601
    %6080 = vmatpush1.bf16.msra.mxu0 %v5600
    %6081 = vmatprep.subr.bf16.mxu0 %v5593
    %6082 = vmatpush1.bf16.msra.mxu0 %v5592
    %6083 = vmatprep.subr.bf16.mxu0 %v5585
    %6084 = vmatpush1.bf16.msra.mxu0 %v5584
    %6085 = vmatprep.subr.bf16.mxu0 %v5577
    %6086 = vmatpush1.bf16.msra.mxu0 %v5576
    %6087 = vmatprep.subr.bf16.mxu0 %v5569
    %6088 = vmatpush1.bf16.msra.mxu0 %v5568
    %6089 = vmatprep.subr.bf16.mxu0 %v5689
    %6090 = vmatpush2.bf16.msra.mxu0 %v5688
    %6091 = vmatprep.subr.bf16.mxu0 %v5681
    %6092 = vmatpush2.bf16.msra.mxu0 %v5680
    %6093 = vmatprep.subr.bf16.mxu0 %v5673
    %6094 = vmatpush2.bf16.msra.mxu0 %v5672
    %6095 = vmatprep.subr.bf16.mxu0 %v5665
    %6096 = vmatpush2.bf16.msra.mxu0 %v5664
    %6097 = vmatprep.subr.bf16.mxu0 %v5657
    %6098 = vmatpush2.bf16.msra.mxu0 %v5656
    %6099 = vmatprep.subr.bf16.mxu0 %v5649
    %6100 = vmatpush2.bf16.msra.mxu0 %v5648
    %6101 = vmatprep.subr.bf16.mxu0 %v5641
    %6102 = vmatpush2.bf16.msra.mxu0 %v5640
    %6103 = vmatprep.subr.bf16.mxu0 %v5633
    %6104 = vmatpush2.bf16.msra.mxu0 %v5632
    %6105 = vmatprep.mubr.bf16.mxu0 %v4371
    %6106 = vmatmul.mubr.bf16.gmra.mxu0 %v4370
    %v6107 = vpop.f32.mrf.mxu0
    %v6108 = vadd.f32 %v6067, %v6107
    %v6109 = vpop.f32.mrf.mxu0
    %v6110 = vadd.f32 %v6069, %v6109
    %v6111 = vpop.f32.mrf.mxu0
    %v6112 = vpop.f32.mrf.mxu0
    %6113 = vdwg.mxu0
    %6114 = vmatprep.subr.bf16.mxu0 %v5499
    %6115 = vmatpush1.bf16.msra.mxu0 %v5498
    %6116 = vmatprep.subr.bf16.mxu0 %v5491
    %6117 = vmatpush1.bf16.msra.mxu0 %v5490
    %6118 = vmatprep.subr.bf16.mxu0 %v5483
    %6119 = vmatpush1.bf16.msra.mxu0 %v5482
    %6120 = vmatprep.subr.bf16.mxu0 %v5475
    %6121 = vmatpush1.bf16.msra.mxu0 %v5474
    %6122 = vmatprep.subr.bf16.mxu0 %v5467
    %6123 = vmatpush1.bf16.msra.mxu0 %v5466
    %6124 = vmatprep.subr.bf16.mxu0 %v5459
    %6125 = vmatpush1.bf16.msra.mxu0 %v5458
    %6126 = vmatprep.subr.bf16.mxu0 %v5451
    %6127 = vmatpush1.bf16.msra.mxu0 %v5450
    %6128 = vmatprep.subr.bf16.mxu0 %v5443
    %6129 = vmatpush1.bf16.msra.mxu0 %v5442
    %6130 = vmatprep.subr.bf16.mxu0 %v5563
    %6131 = vmatpush2.bf16.msra.mxu0 %v5562
    %6132 = vmatprep.subr.bf16.mxu0 %v5555
    %6133 = vmatpush2.bf16.msra.mxu0 %v5554
    %6134 = vmatprep.subr.bf16.mxu0 %v5547
    %6135 = vmatpush2.bf16.msra.mxu0 %v5546
    %6136 = vmatprep.subr.bf16.mxu0 %v5539
    %6137 = vmatpush2.bf16.msra.mxu0 %v5538
    %6138 = vmatprep.subr.bf16.mxu0 %v5531
    %6139 = vmatpush2.bf16.msra.mxu0 %v5530
    %6140 = vmatprep.subr.bf16.mxu0 %v5523
    %6141 = vmatpush2.bf16.msra.mxu0 %v5522
    %6142 = vmatprep.subr.bf16.mxu0 %v5515
    %6143 = vmatpush2.bf16.msra.mxu0 %v5514
    %6144 = vmatprep.subr.bf16.mxu0 %v5507
    %6145 = vmatpush2.bf16.msra.mxu0 %v5506
    %6146 = vmatprep.mubr.bf16.mxu0 %v4369
    %6147 = vmatmul.mubr.bf16.gmra.mxu0 %v4368
    %v6148 = vpop.f32.mrf.mxu0
    %v6149 = vadd.f32 %v4649, %v6148
    %v6150 = vpop.f32.mrf.mxu0
    %v6151 = vadd.f32 %v4653, %v6150
    %v6152 = vpop.f32.mrf.mxu0
    %v6153 = vpop.f32.mrf.mxu0
    %6154 = vdwg.mxu0
    %6155 = vmatprep.subr.bf16.mxu0 %v5627
    %6156 = vmatpush1.bf16.msra.mxu0 %v5626
    %6157 = vmatprep.subr.bf16.mxu0 %v5619
    %6158 = vmatpush1.bf16.msra.mxu0 %v5618
    %6159 = vmatprep.subr.bf16.mxu0 %v5611
    %6160 = vmatpush1.bf16.msra.mxu0 %v5610
    %6161 = vmatprep.subr.bf16.mxu0 %v5603
    %6162 = vmatpush1.bf16.msra.mxu0 %v5602
    %6163 = vmatprep.subr.bf16.mxu0 %v5595
    %6164 = vmatpush1.bf16.msra.mxu0 %v5594
    %6165 = vmatprep.subr.bf16.mxu0 %v5587
    %6166 = vmatpush1.bf16.msra.mxu0 %v5586
    %6167 = vmatprep.subr.bf16.mxu0 %v5579
    %6168 = vmatpush1.bf16.msra.mxu0 %v5578
    %6169 = vmatprep.subr.bf16.mxu0 %v5571
    %6170 = vmatpush1.bf16.msra.mxu0 %v5570
    %6171 = vmatprep.subr.bf16.mxu0 %v5691
    %6172 = vmatpush2.bf16.msra.mxu0 %v5690
    %6173 = vmatprep.subr.bf16.mxu0 %v5683
    %6174 = vmatpush2.bf16.msra.mxu0 %v5682
    %6175 = vmatprep.subr.bf16.mxu0 %v5675
    %6176 = vmatpush2.bf16.msra.mxu0 %v5674
    %6177 = vmatprep.subr.bf16.mxu0 %v5667
    %6178 = vmatpush2.bf16.msra.mxu0 %v5666
    %6179 = vmatprep.subr.bf16.mxu0 %v5659
    %6180 = vmatpush2.bf16.msra.mxu0 %v5658
    %6181 = vmatprep.subr.bf16.mxu0 %v5651
    %6182 = vmatpush2.bf16.msra.mxu0 %v5650
    %6183 = vmatprep.subr.bf16.mxu0 %v5643
    %6184 = vmatpush2.bf16.msra.mxu0 %v5642
    %6185 = vmatprep.subr.bf16.mxu0 %v5635
    %6186 = vmatpush2.bf16.msra.mxu0 %v5634
    %6187 = vmatprep.mubr.bf16.mxu0 %v4371
    %6188 = vmatmul.mubr.bf16.gmra.mxu0 %v4370
    %v6189 = vpop.f32.mrf.mxu0
    %v6190 = vadd.f32 %v6149, %v6189
    %v6191 = vpop.f32.mrf.mxu0
    %v6192 = vadd.f32 %v6151, %v6191
    %v6193 = vpop.f32.mrf.mxu0
    %v6194 = vpop.f32.mrf.mxu0
    %6195 = vdwg.mxu0
    %6196 = vmatprep.subr.bf16.mxu0 %v5501
    %6197 = vmatpush1.bf16.msra.mxu0 %v5500
    %6198 = vmatprep.subr.bf16.mxu0 %v5493
    %6199 = vmatpush1.bf16.msra.mxu0 %v5492
    %6200 = vmatprep.subr.bf16.mxu0 %v5485
    %6201 = vmatpush1.bf16.msra.mxu0 %v5484
    %6202 = vmatprep.subr.bf16.mxu0 %v5477
    %6203 = vmatpush1.bf16.msra.mxu0 %v5476
    %6204 = vmatprep.subr.bf16.mxu0 %v5469
    %6205 = vmatpush1.bf16.msra.mxu0 %v5468
    %6206 = vmatprep.subr.bf16.mxu0 %v5461
    %6207 = vmatpush1.bf16.msra.mxu0 %v5460
    %6208 = vmatprep.subr.bf16.mxu0 %v5453
    %6209 = vmatpush1.bf16.msra.mxu0 %v5452
    %6210 = vmatprep.subr.bf16.mxu0 %v5445
    %6211 = vmatpush1.bf16.msra.mxu0 %v5444
    %6212 = vmatprep.subr.bf16.mxu0 %v5565
    %6213 = vmatpush2.bf16.msra.mxu0 %v5564
    %6214 = vmatprep.subr.bf16.mxu0 %v5557
    %6215 = vmatpush2.bf16.msra.mxu0 %v5556
    %6216 = vmatprep.subr.bf16.mxu0 %v5549
    %6217 = vmatpush2.bf16.msra.mxu0 %v5548
    %6218 = vmatprep.subr.bf16.mxu0 %v5541
    %6219 = vmatpush2.bf16.msra.mxu0 %v5540
    %6220 = vmatprep.subr.bf16.mxu0 %v5533
    %6221 = vmatpush2.bf16.msra.mxu0 %v5532
    %6222 = vmatprep.subr.bf16.mxu0 %v5525
    %6223 = vmatpush2.bf16.msra.mxu0 %v5524
    %6224 = vmatprep.subr.bf16.mxu0 %v5517
    %6225 = vmatpush2.bf16.msra.mxu0 %v5516
    %6226 = vmatprep.subr.bf16.mxu0 %v5509
    %6227 = vmatpush2.bf16.msra.mxu0 %v5508
    %6228 = vmatprep.mubr.bf16.mxu0 %v4369
    %6229 = vmatmul.mubr.bf16.gmra.mxu0 %v4368
    %v6230 = vpop.f32.mrf.mxu0
    %v6231 = vadd.f32 %v4657, %v6230
    %v6232 = vpop.f32.mrf.mxu0
    %v6233 = vadd.f32 %v4661, %v6232
    %v6234 = vpop.f32.mrf.mxu0
    %v6235 = vpop.f32.mrf.mxu0
    %6236 = vdwg.mxu0
    %6237 = vmatprep.subr.bf16.mxu0 %v5629
    %6238 = vmatpush1.bf16.msra.mxu0 %v5628
    %6239 = vmatprep.subr.bf16.mxu0 %v5621
    %6240 = vmatpush1.bf16.msra.mxu0 %v5620
    %6241 = vmatprep.subr.bf16.mxu0 %v5613
    %6242 = vmatpush1.bf16.msra.mxu0 %v5612
    %6243 = vmatprep.subr.bf16.mxu0 %v5605
    %6244 = vmatpush1.bf16.msra.mxu0 %v5604
    %6245 = vmatprep.subr.bf16.mxu0 %v5597
    %6246 = vmatpush1.bf16.msra.mxu0 %v5596
    %6247 = vmatprep.subr.bf16.mxu0 %v5589
    %6248 = vmatpush1.bf16.msra.mxu0 %v5588
    %6249 = vmatprep.subr.bf16.mxu0 %v5581
    %6250 = vmatpush1.bf16.msra.mxu0 %v5580
    %6251 = vmatprep.subr.bf16.mxu0 %v5573
    %6252 = vmatpush1.bf16.msra.mxu0 %v5572
    %6253 = vmatprep.subr.bf16.mxu0 %v5693
    %6254 = vmatpush2.bf16.msra.mxu0 %v5692
    %6255 = vmatprep.subr.bf16.mxu0 %v5685
    %6256 = vmatpush2.bf16.msra.mxu0 %v5684
    %6257 = vmatprep.subr.bf16.mxu0 %v5677
    %6258 = vmatpush2.bf16.msra.mxu0 %v5676
    %6259 = vmatprep.subr.bf16.mxu0 %v5669
    %6260 = vmatpush2.bf16.msra.mxu0 %v5668
    %6261 = vmatprep.subr.bf16.mxu0 %v5661
    %6262 = vmatpush2.bf16.msra.mxu0 %v5660
    %6263 = vmatprep.subr.bf16.mxu0 %v5653
    %6264 = vmatpush2.bf16.msra.mxu0 %v5652
    %6265 = vmatprep.subr.bf16.mxu0 %v5645
    %6266 = vmatpush2.bf16.msra.mxu0 %v5644
    %6267 = vmatprep.subr.bf16.mxu0 %v5637
    %6268 = vmatpush2.bf16.msra.mxu0 %v5636
    %6269 = vmatprep.mubr.bf16.mxu0 %v4371
    %6270 = vmatmul.mubr.bf16.gmra.mxu0 %v4370
    %v6271 = vpop.f32.mrf.mxu0
    %v6272 = vadd.f32 %v6231, %v6271
    %v6273 = vpop.f32.mrf.mxu0
    %v6274 = vadd.f32 %v6233, %v6273
    %v6275 = vpop.f32.mrf.mxu0
    %v6276 = vpop.f32.mrf.mxu0
    %6277 = vdwg.mxu0
    %v6278 = vmax.f32 %v6026, 0.0
    %v6279 = vmax.f32 %v6028, 0.0
    %v6280 = vmax.f32 %v6108, 0.0
    %v6281 = vmax.f32 %v6110, 0.0
    %v6282 = vmax.f32 %v6190, 0.0
    %v6283 = vmax.f32 %v6192, 0.0
    %v6284 = vmax.f32 %v6272, 0.0
    %v6285 = vmax.f32 %v6274, 0.0
    %v6286 = vpack.c.bf16 %v6278, %v6278
    %v6287 = vpack.c.bf16 %v6279, %v6279
    %v6288 = vpack.c.bf16 %v6280, %v6280
    %v6289 = vpack.c.bf16 %v6281, %v6281
    %v6290 = vpack.c.bf16 %v6282, %v6282
    %v6291 = vpack.c.bf16 %v6283, %v6283
    %v6292 = vpack.c.bf16 %v6284, %v6284
    %v6293 = vpack.c.bf16 %v6285, %v6285
    %v6294 = vld [vmem:[#allocation13] sm:$0xff]
    %v6295 = vld [vmem:[#allocation13 + $0x8] sm:$0xff]
    %v6296 = vld [vmem:[#allocation13 + $0x10] sm:$0xff]
    %v6297 = vld [vmem:[#allocation13 + $0x18] sm:$0xff]
    %v6298 = vld [vmem:[#allocation13 + $0x20] sm:$0xff]
    %v6299 = vld [vmem:[#allocation13 + $0x28] sm:$0xff]
    %v6300 = vld [vmem:[#allocation13 + $0x30] sm:$0xff]
    %v6301 = vld [vmem:[#allocation13 + $0x38] sm:$0xff]
    %v6302 = vld [vmem:[#allocation13 + $0x40] sm:$0xff]
    %v6303 = vld [vmem:[#allocation13 + $0x48] sm:$0xff]
    %v6304 = vld [vmem:[#allocation13 + $0x50] sm:$0xff]
    %v6305 = vld [vmem:[#allocation13 + $0x58] sm:$0xff]
    %v6306 = vld [vmem:[#allocation13 + $0x60] sm:$0xff]
    %v6307 = vld [vmem:[#allocation13 + $0x68] sm:$0xff]
    %v6308 = vld [vmem:[#allocation13 + $0x70] sm:$0xff]
    %v6309 = vld [vmem:[#allocation13 + $0x78] sm:$0xff]
    %v6310 = vld [vmem:[#allocation13 + $0x80] sm:$0xff]
    %v6311 = vld [vmem:[#allocation13 + $0x88] sm:$0xff]
    %v6312 = vld [vmem:[#allocation13 + $0x90] sm:$0xff]
    %v6313 = vld [vmem:[#allocation13 + $0x98] sm:$0xff]
    %v6314 = vld [vmem:[#allocation13 + $0xa0] sm:$0xff]
    %v6315 = vld [vmem:[#allocation13 + $0xa8] sm:$0xff]
    %v6316 = vld [vmem:[#allocation13 + $0xb0] sm:$0xff]
    %v6317 = vld [vmem:[#allocation13 + $0xb8] sm:$0xff]
    %v6318 = vld [vmem:[#allocation13 + $0xc0] sm:$0xff]
    %v6319 = vld [vmem:[#allocation13 + $0xc8] sm:$0xff]
    %v6320 = vld [vmem:[#allocation13 + $0xd0] sm:$0xff]
    %v6321 = vld [vmem:[#allocation13 + $0xd8] sm:$0xff]
    %v6322 = vld [vmem:[#allocation13 + $0xe0] sm:$0xff]
    %v6323 = vld [vmem:[#allocation13 + $0xe8] sm:$0xff]
    %v6324 = vld [vmem:[#allocation13 + $0xf0] sm:$0xff]
    %v6325 = vld [vmem:[#allocation13 + $0xf8] sm:$0xff]
    %v6326 = vld [vmem:[#allocation13 + $0x100] sm:$0xff]
    %v6327 = vld [vmem:[#allocation13 + $0x108] sm:$0xff]
    %v6328 = vld [vmem:[#allocation13 + $0x110] sm:$0xff]
    %v6329 = vld [vmem:[#allocation13 + $0x118] sm:$0xff]
    %v6330 = vld [vmem:[#allocation13 + $0x120] sm:$0xff]
    %v6331 = vld [vmem:[#allocation13 + $0x128] sm:$0xff]
    %v6332 = vld [vmem:[#allocation13 + $0x130] sm:$0xff]
    %v6333 = vld [vmem:[#allocation13 + $0x138] sm:$0xff]
    %v6334 = vld [vmem:[#allocation13 + $0x140] sm:$0xff]
    %v6335 = vld [vmem:[#allocation13 + $0x148] sm:$0xff]
    %v6336 = vld [vmem:[#allocation13 + $0x150] sm:$0xff]
    %v6337 = vld [vmem:[#allocation13 + $0x158] sm:$0xff]
    %v6338 = vld [vmem:[#allocation13 + $0x160] sm:$0xff]
    %v6339 = vld [vmem:[#allocation13 + $0x168] sm:$0xff]
    %v6340 = vld [vmem:[#allocation13 + $0x170] sm:$0xff]
    %v6341 = vld [vmem:[#allocation13 + $0x178] sm:$0xff]
    %v6342 = vld [vmem:[#allocation13 + $0x180] sm:$0xff]
    %v6343 = vld [vmem:[#allocation13 + $0x188] sm:$0xff]
    %v6344 = vld [vmem:[#allocation13 + $0x190] sm:$0xff]
    %v6345 = vld [vmem:[#allocation13 + $0x198] sm:$0xff]
    %v6346 = vld [vmem:[#allocation13 + $0x1a0] sm:$0xff]
    %v6347 = vld [vmem:[#allocation13 + $0x1a8] sm:$0xff]
    %v6348 = vld [vmem:[#allocation13 + $0x1b0] sm:$0xff]
    %v6349 = vld [vmem:[#allocation13 + $0x1b8] sm:$0xff]
    %v6350 = vld [vmem:[#allocation13 + $0x1c0] sm:$0xff]
    %v6351 = vld [vmem:[#allocation13 + $0x1c8] sm:$0xff]
    %v6352 = vld [vmem:[#allocation13 + $0x1d0] sm:$0xff]
    %v6353 = vld [vmem:[#allocation13 + $0x1d8] sm:$0xff]
    %v6354 = vld [vmem:[#allocation13 + $0x1e0] sm:$0xff]
    %v6355 = vld [vmem:[#allocation13 + $0x1e8] sm:$0xff]
    %v6356 = vld [vmem:[#allocation13 + $0x1f0] sm:$0xff]
    %v6357 = vld [vmem:[#allocation13 + $0x1f8] sm:$0xff]
    %v6358 = vld [vmem:[#allocation13 + $0x200] sm:$0xff]
    %v6359 = vld [vmem:[#allocation13 + $0x208] sm:$0xff]
    %v6360 = vld [vmem:[#allocation13 + $0x210] sm:$0xff]
    %v6361 = vld [vmem:[#allocation13 + $0x218] sm:$0xff]
    %v6362 = vld [vmem:[#allocation13 + $0x220] sm:$0xff]
    %v6363 = vld [vmem:[#allocation13 + $0x228] sm:$0xff]
    %v6364 = vld [vmem:[#allocation13 + $0x230] sm:$0xff]
    %v6365 = vld [vmem:[#allocation13 + $0x238] sm:$0xff]
    %v6366 = vld [vmem:[#allocation13 + $0x240] sm:$0xff]
    %v6367 = vld [vmem:[#allocation13 + $0x248] sm:$0xff]
    %v6368 = vld [vmem:[#allocation13 + $0x250] sm:$0xff]
    %v6369 = vld [vmem:[#allocation13 + $0x258] sm:$0xff]
    %v6370 = vld [vmem:[#allocation13 + $0x260] sm:$0xff]
    %v6371 = vld [vmem:[#allocation13 + $0x268] sm:$0xff]
    %v6372 = vld [vmem:[#allocation13 + $0x270] sm:$0xff]
    %v6373 = vld [vmem:[#allocation13 + $0x278] sm:$0xff]
    %v6374 = vld [vmem:[#allocation13 + $0x280] sm:$0xff]
    %v6375 = vld [vmem:[#allocation13 + $0x288] sm:$0xff]
    %v6376 = vld [vmem:[#allocation13 + $0x290] sm:$0xff]
    %v6377 = vld [vmem:[#allocation13 + $0x298] sm:$0xff]
    %v6378 = vld [vmem:[#allocation13 + $0x2a0] sm:$0xff]
    %v6379 = vld [vmem:[#allocation13 + $0x2a8] sm:$0xff]
    %v6380 = vld [vmem:[#allocation13 + $0x2b0] sm:$0xff]
    %v6381 = vld [vmem:[#allocation13 + $0x2b8] sm:$0xff]
    %v6382 = vld [vmem:[#allocation13 + $0x2c0] sm:$0xff]
    %v6383 = vld [vmem:[#allocation13 + $0x2c8] sm:$0xff]
    %v6384 = vld [vmem:[#allocation13 + $0x2d0] sm:$0xff]
    %v6385 = vld [vmem:[#allocation13 + $0x2d8] sm:$0xff]
    %v6386 = vld [vmem:[#allocation13 + $0x2e0] sm:$0xff]
    %v6387 = vld [vmem:[#allocation13 + $0x2e8] sm:$0xff]
    %v6388 = vld [vmem:[#allocation13 + $0x2f0] sm:$0xff]
    %v6389 = vld [vmem:[#allocation13 + $0x2f8] sm:$0xff]
    %v6390 = vld [vmem:[#allocation13 + $0x300] sm:$0xff]
    %v6391 = vld [vmem:[#allocation13 + $0x308] sm:$0xff]
    %v6392 = vld [vmem:[#allocation13 + $0x310] sm:$0xff]
    %v6393 = vld [vmem:[#allocation13 + $0x318] sm:$0xff]
    %v6394 = vld [vmem:[#allocation13 + $0x320] sm:$0xff]
    %v6395 = vld [vmem:[#allocation13 + $0x328] sm:$0xff]
    %v6396 = vld [vmem:[#allocation13 + $0x330] sm:$0xff]
    %v6397 = vld [vmem:[#allocation13 + $0x338] sm:$0xff]
    %v6398 = vld [vmem:[#allocation13 + $0x340] sm:$0xff]
    %v6399 = vld [vmem:[#allocation13 + $0x348] sm:$0xff]
    %v6400 = vld [vmem:[#allocation13 + $0x350] sm:$0xff]
    %v6401 = vld [vmem:[#allocation13 + $0x358] sm:$0xff]
    %v6402 = vld [vmem:[#allocation13 + $0x360] sm:$0xff]
    %v6403 = vld [vmem:[#allocation13 + $0x368] sm:$0xff]
    %v6404 = vld [vmem:[#allocation13 + $0x370] sm:$0xff]
    %v6405 = vld [vmem:[#allocation13 + $0x378] sm:$0xff]
    %v6406 = vld [vmem:[#allocation13 + $0x380] sm:$0xff]
    %v6407 = vld [vmem:[#allocation13 + $0x388] sm:$0xff]
    %v6408 = vld [vmem:[#allocation13 + $0x390] sm:$0xff]
    %v6409 = vld [vmem:[#allocation13 + $0x398] sm:$0xff]
    %v6410 = vld [vmem:[#allocation13 + $0x3a0] sm:$0xff]
    %v6411 = vld [vmem:[#allocation13 + $0x3a8] sm:$0xff]
    %v6412 = vld [vmem:[#allocation13 + $0x3b0] sm:$0xff]
    %v6413 = vld [vmem:[#allocation13 + $0x3b8] sm:$0xff]
    %v6414 = vld [vmem:[#allocation13 + $0x3c0] sm:$0xff]
    %v6415 = vld [vmem:[#allocation13 + $0x3c8] sm:$0xff]
    %v6416 = vld [vmem:[#allocation13 + $0x3d0] sm:$0xff]
    %v6417 = vld [vmem:[#allocation13 + $0x3d8] sm:$0xff]
    %v6418 = vld [vmem:[#allocation13 + $0x3e0] sm:$0xff]
    %v6419 = vld [vmem:[#allocation13 + $0x3e8] sm:$0xff]
    %v6420 = vld [vmem:[#allocation13 + $0x3f0] sm:$0xff]
    %v6421 = vld [vmem:[#allocation13 + $0x3f8] sm:$0xff]
    %v6422 = vld [vmem:[%s16] sm:$0x3]
    %v6424 = vlaneseq
    %v6425 = vshrl.u32 %v6424, 7
    %v6426 = vsub.s32 0, %v6425
    %v6427 = vrot.slane %v6422, %v6426
    %v6428 = vlaneseq
    %v6429 = vshrl.u32 %v6428, 7
    %v6430 = vsub.s32 1, %v6429
    %v6431 = vrot.slane %v6422, %v6430
    %v6562 = vunpack.c.l.b16 %v6294
    %v6563 = vunpack.c.h.b16 %v6294
    %v6564 = vunpack.c.l.b16 %v6295
    %v6565 = vunpack.c.h.b16 %v6295
    %v6566 = vunpack.c.l.b16 %v6296
    %v6567 = vunpack.c.h.b16 %v6296
    %v6568 = vunpack.c.l.b16 %v6297
    %v6569 = vunpack.c.h.b16 %v6297
    %v6570 = vunpack.c.l.b16 %v6298
    %v6571 = vunpack.c.h.b16 %v6298
    %v6572 = vunpack.c.l.b16 %v6299
    %v6573 = vunpack.c.h.b16 %v6299
    %v6574 = vunpack.c.l.b16 %v6300
    %v6575 = vunpack.c.h.b16 %v6300
    %v6576 = vunpack.c.l.b16 %v6301
    %v6577 = vunpack.c.h.b16 %v6301
    %v6578 = vunpack.c.l.b16 %v6302
    %v6579 = vunpack.c.h.b16 %v6302
    %v6580 = vunpack.c.l.b16 %v6303
    %v6581 = vunpack.c.h.b16 %v6303
    %v6582 = vunpack.c.l.b16 %v6304
    %v6583 = vunpack.c.h.b16 %v6304
    %v6584 = vunpack.c.l.b16 %v6305
    %v6585 = vunpack.c.h.b16 %v6305
    %v6586 = vunpack.c.l.b16 %v6306
    %v6587 = vunpack.c.h.b16 %v6306
    %v6588 = vunpack.c.l.b16 %v6307
    %v6589 = vunpack.c.h.b16 %v6307
    %v6590 = vunpack.c.l.b16 %v6308
    %v6591 = vunpack.c.h.b16 %v6308
    %v6592 = vunpack.c.l.b16 %v6309
    %v6593 = vunpack.c.h.b16 %v6309
    %v6594 = vunpack.c.l.b16 %v6310
    %v6595 = vunpack.c.h.b16 %v6310
    %v6596 = vunpack.c.l.b16 %v6311
    %v6597 = vunpack.c.h.b16 %v6311
    %v6598 = vunpack.c.l.b16 %v6312
    %v6599 = vunpack.c.h.b16 %v6312
    %v6600 = vunpack.c.l.b16 %v6313
    %v6601 = vunpack.c.h.b16 %v6313
    %v6602 = vunpack.c.l.b16 %v6314
    %v6603 = vunpack.c.h.b16 %v6314
    %v6604 = vunpack.c.l.b16 %v6315
    %v6605 = vunpack.c.h.b16 %v6315
    %v6606 = vunpack.c.l.b16 %v6316
    %v6607 = vunpack.c.h.b16 %v6316
    %v6608 = vunpack.c.l.b16 %v6317
    %v6609 = vunpack.c.h.b16 %v6317
    %v6610 = vunpack.c.l.b16 %v6318
    %v6611 = vunpack.c.h.b16 %v6318
    %v6612 = vunpack.c.l.b16 %v6319
    %v6613 = vunpack.c.h.b16 %v6319
    %v6614 = vunpack.c.l.b16 %v6320
    %v6615 = vunpack.c.h.b16 %v6320
    %v6616 = vunpack.c.l.b16 %v6321
    %v6617 = vunpack.c.h.b16 %v6321
    %v6618 = vunpack.c.l.b16 %v6322
    %v6619 = vunpack.c.h.b16 %v6322
    %v6620 = vunpack.c.l.b16 %v6323
    %v6621 = vunpack.c.h.b16 %v6323
    %v6622 = vunpack.c.l.b16 %v6324
    %v6623 = vunpack.c.h.b16 %v6324
    %v6624 = vunpack.c.l.b16 %v6325
    %v6625 = vunpack.c.h.b16 %v6325
    %v6626 = vunpack.c.l.b16 %v6326
    %v6627 = vunpack.c.h.b16 %v6326
    %v6628 = vunpack.c.l.b16 %v6327
    %v6629 = vunpack.c.h.b16 %v6327
    %v6630 = vunpack.c.l.b16 %v6328
    %v6631 = vunpack.c.h.b16 %v6328
    %v6632 = vunpack.c.l.b16 %v6329
    %v6633 = vunpack.c.h.b16 %v6329
    %v6634 = vunpack.c.l.b16 %v6330
    %v6635 = vunpack.c.h.b16 %v6330
    %v6636 = vunpack.c.l.b16 %v6331
    %v6637 = vunpack.c.h.b16 %v6331
    %v6638 = vunpack.c.l.b16 %v6332
    %v6639 = vunpack.c.h.b16 %v6332
    %v6640 = vunpack.c.l.b16 %v6333
    %v6641 = vunpack.c.h.b16 %v6333
    %v6642 = vunpack.c.l.b16 %v6334
    %v6643 = vunpack.c.h.b16 %v6334
    %v6644 = vunpack.c.l.b16 %v6335
    %v6645 = vunpack.c.h.b16 %v6335
    %v6646 = vunpack.c.l.b16 %v6336
    %v6647 = vunpack.c.h.b16 %v6336
    %v6648 = vunpack.c.l.b16 %v6337
    %v6649 = vunpack.c.h.b16 %v6337
    %v6650 = vunpack.c.l.b16 %v6338
    %v6651 = vunpack.c.h.b16 %v6338
    %v6652 = vunpack.c.l.b16 %v6339
    %v6653 = vunpack.c.h.b16 %v6339
    %v6654 = vunpack.c.l.b16 %v6340
    %v6655 = vunpack.c.h.b16 %v6340
    %v6656 = vunpack.c.l.b16 %v6341
    %v6657 = vunpack.c.h.b16 %v6341
    %v6658 = vunpack.c.l.b16 %v6342
    %v6659 = vunpack.c.h.b16 %v6342
    %v6660 = vunpack.c.l.b16 %v6343
    %v6661 = vunpack.c.h.b16 %v6343
    %v6662 = vunpack.c.l.b16 %v6344
    %v6663 = vunpack.c.h.b16 %v6344
    %v6664 = vunpack.c.l.b16 %v6345
    %v6665 = vunpack.c.h.b16 %v6345
    %v6666 = vunpack.c.l.b16 %v6346
    %v6667 = vunpack.c.h.b16 %v6346
    %v6668 = vunpack.c.l.b16 %v6347
    %v6669 = vunpack.c.h.b16 %v6347
    %v6670 = vunpack.c.l.b16 %v6348
    %v6671 = vunpack.c.h.b16 %v6348
    %v6672 = vunpack.c.l.b16 %v6349
    %v6673 = vunpack.c.h.b16 %v6349
    %v6674 = vunpack.c.l.b16 %v6350
    %v6675 = vunpack.c.h.b16 %v6350
    %v6676 = vunpack.c.l.b16 %v6351
    %v6677 = vunpack.c.h.b16 %v6351
    %v6678 = vunpack.c.l.b16 %v6352
    %v6679 = vunpack.c.h.b16 %v6352
    %v6680 = vunpack.c.l.b16 %v6353
    %v6681 = vunpack.c.h.b16 %v6353
    %v6682 = vunpack.c.l.b16 %v6354
    %v6683 = vunpack.c.h.b16 %v6354
    %v6684 = vunpack.c.l.b16 %v6355
    %v6685 = vunpack.c.h.b16 %v6355
    %v6686 = vunpack.c.l.b16 %v6356
    %v6687 = vunpack.c.h.b16 %v6356
    %v6688 = vunpack.c.l.b16 %v6357
    %v6689 = vunpack.c.h.b16 %v6357
    %v6690 = vunpack.c.l.b16 %v6358
    %v6691 = vunpack.c.h.b16 %v6358
    %v6692 = vunpack.c.l.b16 %v6359
    %v6693 = vunpack.c.h.b16 %v6359
    %v6694 = vunpack.c.l.b16 %v6360
    %v6695 = vunpack.c.h.b16 %v6360
    %v6696 = vunpack.c.l.b16 %v6361
    %v6697 = vunpack.c.h.b16 %v6361
    %v6698 = vunpack.c.l.b16 %v6362
    %v6699 = vunpack.c.h.b16 %v6362
    %v6700 = vunpack.c.l.b16 %v6363
    %v6701 = vunpack.c.h.b16 %v6363
    %v6702 = vunpack.c.l.b16 %v6364
    %v6703 = vunpack.c.h.b16 %v6364
    %v6704 = vunpack.c.l.b16 %v6365
    %v6705 = vunpack.c.h.b16 %v6365
    %v6706 = vunpack.c.l.b16 %v6366
    %v6707 = vunpack.c.h.b16 %v6366
    %v6708 = vunpack.c.l.b16 %v6367
    %v6709 = vunpack.c.h.b16 %v6367
    %v6710 = vunpack.c.l.b16 %v6368
    %v6711 = vunpack.c.h.b16 %v6368
    %v6712 = vunpack.c.l.b16 %v6369
    %v6713 = vunpack.c.h.b16 %v6369
    %v6714 = vunpack.c.l.b16 %v6370
    %v6715 = vunpack.c.h.b16 %v6370
    %v6716 = vunpack.c.l.b16 %v6371
    %v6717 = vunpack.c.h.b16 %v6371
    %v6718 = vunpack.c.l.b16 %v6372
    %v6719 = vunpack.c.h.b16 %v6372
    %v6720 = vunpack.c.l.b16 %v6373
    %v6721 = vunpack.c.h.b16 %v6373
    %v6722 = vunpack.c.l.b16 %v6374
    %v6723 = vunpack.c.h.b16 %v6374
    %v6724 = vunpack.c.l.b16 %v6375
    %v6725 = vunpack.c.h.b16 %v6375
    %v6726 = vunpack.c.l.b16 %v6376
    %v6727 = vunpack.c.h.b16 %v6376
    %v6728 = vunpack.c.l.b16 %v6377
    %v6729 = vunpack.c.h.b16 %v6377
    %v6730 = vunpack.c.l.b16 %v6378
    %v6731 = vunpack.c.h.b16 %v6378
    %v6732 = vunpack.c.l.b16 %v6379
    %v6733 = vunpack.c.h.b16 %v6379
    %v6734 = vunpack.c.l.b16 %v6380
    %v6735 = vunpack.c.h.b16 %v6380
    %v6736 = vunpack.c.l.b16 %v6381
    %v6737 = vunpack.c.h.b16 %v6381
    %v6738 = vunpack.c.l.b16 %v6382
    %v6739 = vunpack.c.h.b16 %v6382
    %v6740 = vunpack.c.l.b16 %v6383
    %v6741 = vunpack.c.h.b16 %v6383
    %v6742 = vunpack.c.l.b16 %v6384
    %v6743 = vunpack.c.h.b16 %v6384
    %v6744 = vunpack.c.l.b16 %v6385
    %v6745 = vunpack.c.h.b16 %v6385
    %v6746 = vunpack.c.l.b16 %v6386
    %v6747 = vunpack.c.h.b16 %v6386
    %v6748 = vunpack.c.l.b16 %v6387
    %v6749 = vunpack.c.h.b16 %v6387
    %v6750 = vunpack.c.l.b16 %v6388
    %v6751 = vunpack.c.h.b16 %v6388
    %v6752 = vunpack.c.l.b16 %v6389
    %v6753 = vunpack.c.h.b16 %v6389
    %v6754 = vunpack.c.l.b16 %v6390
    %v6755 = vunpack.c.h.b16 %v6390
    %v6756 = vunpack.c.l.b16 %v6391
    %v6757 = vunpack.c.h.b16 %v6391
    %v6758 = vunpack.c.l.b16 %v6392
    %v6759 = vunpack.c.h.b16 %v6392
    %v6760 = vunpack.c.l.b16 %v6393
    %v6761 = vunpack.c.h.b16 %v6393
    %v6762 = vunpack.c.l.b16 %v6394
    %v6763 = vunpack.c.h.b16 %v6394
    %v6764 = vunpack.c.l.b16 %v6395
    %v6765 = vunpack.c.h.b16 %v6395
    %v6766 = vunpack.c.l.b16 %v6396
    %v6767 = vunpack.c.h.b16 %v6396
    %v6768 = vunpack.c.l.b16 %v6397
    %v6769 = vunpack.c.h.b16 %v6397
    %v6770 = vunpack.c.l.b16 %v6398
    %v6771 = vunpack.c.h.b16 %v6398
    %v6772 = vunpack.c.l.b16 %v6399
    %v6773 = vunpack.c.h.b16 %v6399
    %v6774 = vunpack.c.l.b16 %v6400
    %v6775 = vunpack.c.h.b16 %v6400
    %v6776 = vunpack.c.l.b16 %v6401
    %v6777 = vunpack.c.h.b16 %v6401
    %v6778 = vunpack.c.l.b16 %v6402
    %v6779 = vunpack.c.h.b16 %v6402
    %v6780 = vunpack.c.l.b16 %v6403
    %v6781 = vunpack.c.h.b16 %v6403
    %v6782 = vunpack.c.l.b16 %v6404
    %v6783 = vunpack.c.h.b16 %v6404
    %v6784 = vunpack.c.l.b16 %v6405
    %v6785 = vunpack.c.h.b16 %v6405
    %v6786 = vunpack.c.l.b16 %v6406
    %v6787 = vunpack.c.h.b16 %v6406
    %v6788 = vunpack.c.l.b16 %v6407
    %v6789 = vunpack.c.h.b16 %v6407
    %v6790 = vunpack.c.l.b16 %v6408
    %v6791 = vunpack.c.h.b16 %v6408
    %v6792 = vunpack.c.l.b16 %v6409
    %v6793 = vunpack.c.h.b16 %v6409
    %v6794 = vunpack.c.l.b16 %v6410
    %v6795 = vunpack.c.h.b16 %v6410
    %v6796 = vunpack.c.l.b16 %v6411
    %v6797 = vunpack.c.h.b16 %v6411
    %v6798 = vunpack.c.l.b16 %v6412
    %v6799 = vunpack.c.h.b16 %v6412
    %v6800 = vunpack.c.l.b16 %v6413
    %v6801 = vunpack.c.h.b16 %v6413
    %v6802 = vunpack.c.l.b16 %v6414
    %v6803 = vunpack.c.h.b16 %v6414
    %v6804 = vunpack.c.l.b16 %v6415
    %v6805 = vunpack.c.h.b16 %v6415
    %v6806 = vunpack.c.l.b16 %v6416
    %v6807 = vunpack.c.h.b16 %v6416
    %v6808 = vunpack.c.l.b16 %v6417
    %v6809 = vunpack.c.h.b16 %v6417
    %v6810 = vunpack.c.l.b16 %v6418
    %v6811 = vunpack.c.h.b16 %v6418
    %v6812 = vunpack.c.l.b16 %v6419
    %v6813 = vunpack.c.h.b16 %v6419
    %v6814 = vunpack.c.l.b16 %v6420
    %v6815 = vunpack.c.h.b16 %v6420
    %v6816 = vunpack.c.l.b16 %v6421
    %v6817 = vunpack.c.h.b16 %v6421
    %v6818 = vpack.c.b16 %v6564, %v6562
    %v6819 = vpack.c.b16 %v6565, %v6563
    %v6820 = vpack.c.b16 %v6568, %v6566
    %v6821 = vpack.c.b16 %v6569, %v6567
    %v6822 = vpack.c.b16 %v6572, %v6570
    %v6823 = vpack.c.b16 %v6573, %v6571
    %v6824 = vpack.c.b16 %v6576, %v6574
    %v6825 = vpack.c.b16 %v6577, %v6575
    %v6826 = vpack.c.b16 %v6580, %v6578
    %v6827 = vpack.c.b16 %v6581, %v6579
    %v6828 = vpack.c.b16 %v6584, %v6582
    %v6829 = vpack.c.b16 %v6585, %v6583
    %v6830 = vpack.c.b16 %v6588, %v6586
    %v6831 = vpack.c.b16 %v6589, %v6587
    %v6832 = vpack.c.b16 %v6592, %v6590
    %v6833 = vpack.c.b16 %v6593, %v6591
    %v6834 = vpack.c.b16 %v6596, %v6594
    %v6835 = vpack.c.b16 %v6597, %v6595
    %v6836 = vpack.c.b16 %v6600, %v6598
    %v6837 = vpack.c.b16 %v6601, %v6599
    %v6838 = vpack.c.b16 %v6604, %v6602
    %v6839 = vpack.c.b16 %v6605, %v6603
    %v6840 = vpack.c.b16 %v6608, %v6606
    %v6841 = vpack.c.b16 %v6609, %v6607
    %v6842 = vpack.c.b16 %v6612, %v6610
    %v6843 = vpack.c.b16 %v6613, %v6611
    %v6844 = vpack.c.b16 %v6616, %v6614
    %v6845 = vpack.c.b16 %v6617, %v6615
    %v6846 = vpack.c.b16 %v6620, %v6618
    %v6847 = vpack.c.b16 %v6621, %v6619
    %v6848 = vpack.c.b16 %v6624, %v6622
    %v6849 = vpack.c.b16 %v6625, %v6623
    %v6850 = vpack.c.b16 %v6628, %v6626
    %v6851 = vpack.c.b16 %v6629, %v6627
    %v6852 = vpack.c.b16 %v6632, %v6630
    %v6853 = vpack.c.b16 %v6633, %v6631
    %v6854 = vpack.c.b16 %v6636, %v6634
    %v6855 = vpack.c.b16 %v6637, %v6635
    %v6856 = vpack.c.b16 %v6640, %v6638
    %v6857 = vpack.c.b16 %v6641, %v6639
    %v6858 = vpack.c.b16 %v6644, %v6642
    %v6859 = vpack.c.b16 %v6645, %v6643
    %v6860 = vpack.c.b16 %v6648, %v6646
    %v6861 = vpack.c.b16 %v6649, %v6647
    %v6862 = vpack.c.b16 %v6652, %v6650
    %v6863 = vpack.c.b16 %v6653, %v6651
    %v6864 = vpack.c.b16 %v6656, %v6654
    %v6865 = vpack.c.b16 %v6657, %v6655
    %v6866 = vpack.c.b16 %v6660, %v6658
    %v6867 = vpack.c.b16 %v6661, %v6659
    %v6868 = vpack.c.b16 %v6664, %v6662
    %v6869 = vpack.c.b16 %v6665, %v6663
    %v6870 = vpack.c.b16 %v6668, %v6666
    %v6871 = vpack.c.b16 %v6669, %v6667
    %v6872 = vpack.c.b16 %v6672, %v6670
    %v6873 = vpack.c.b16 %v6673, %v6671
    %v6874 = vpack.c.b16 %v6676, %v6674
    %v6875 = vpack.c.b16 %v6677, %v6675
    %v6876 = vpack.c.b16 %v6680, %v6678
    %v6877 = vpack.c.b16 %v6681, %v6679
    %v6878 = vpack.c.b16 %v6684, %v6682
    %v6879 = vpack.c.b16 %v6685, %v6683
    %v6880 = vpack.c.b16 %v6688, %v6686
    %v6881 = vpack.c.b16 %v6689, %v6687
    %v6882 = vpack.c.b16 %v6692, %v6690
    %v6883 = vpack.c.b16 %v6693, %v6691
    %v6884 = vpack.c.b16 %v6696, %v6694
    %v6885 = vpack.c.b16 %v6697, %v6695
    %v6886 = vpack.c.b16 %v6700, %v6698
    %v6887 = vpack.c.b16 %v6701, %v6699
    %v6888 = vpack.c.b16 %v6704, %v6702
    %v6889 = vpack.c.b16 %v6705, %v6703
    %v6890 = vpack.c.b16 %v6708, %v6706
    %v6891 = vpack.c.b16 %v6709, %v6707
    %v6892 = vpack.c.b16 %v6712, %v6710
    %v6893 = vpack.c.b16 %v6713, %v6711
    %v6894 = vpack.c.b16 %v6716, %v6714
    %v6895 = vpack.c.b16 %v6717, %v6715
    %v6896 = vpack.c.b16 %v6720, %v6718
    %v6897 = vpack.c.b16 %v6721, %v6719
    %v6898 = vpack.c.b16 %v6724, %v6722
    %v6899 = vpack.c.b16 %v6725, %v6723
    %v6900 = vpack.c.b16 %v6728, %v6726
    %v6901 = vpack.c.b16 %v6729, %v6727
    %v6902 = vpack.c.b16 %v6732, %v6730
    %v6903 = vpack.c.b16 %v6733, %v6731
    %v6904 = vpack.c.b16 %v6736, %v6734
    %v6905 = vpack.c.b16 %v6737, %v6735
    %v6906 = vpack.c.b16 %v6740, %v6738
    %v6907 = vpack.c.b16 %v6741, %v6739
    %v6908 = vpack.c.b16 %v6744, %v6742
    %v6909 = vpack.c.b16 %v6745, %v6743
    %v6910 = vpack.c.b16 %v6748, %v6746
    %v6911 = vpack.c.b16 %v6749, %v6747
    %v6912 = vpack.c.b16 %v6752, %v6750
    %v6913 = vpack.c.b16 %v6753, %v6751
    %v6914 = vpack.c.b16 %v6756, %v6754
    %v6915 = vpack.c.b16 %v6757, %v6755
    %v6916 = vpack.c.b16 %v6760, %v6758
    %v6917 = vpack.c.b16 %v6761, %v6759
    %v6918 = vpack.c.b16 %v6764, %v6762
    %v6919 = vpack.c.b16 %v6765, %v6763
    %v6920 = vpack.c.b16 %v6768, %v6766
    %v6921 = vpack.c.b16 %v6769, %v6767
    %v6922 = vpack.c.b16 %v6772, %v6770
    %v6923 = vpack.c.b16 %v6773, %v6771
    %v6924 = vpack.c.b16 %v6776, %v6774
    %v6925 = vpack.c.b16 %v6777, %v6775
    %v6926 = vpack.c.b16 %v6780, %v6778
    %v6927 = vpack.c.b16 %v6781, %v6779
    %v6928 = vpack.c.b16 %v6784, %v6782
    %v6929 = vpack.c.b16 %v6785, %v6783
    %v6930 = vpack.c.b16 %v6788, %v6786
    %v6931 = vpack.c.b16 %v6789, %v6787
    %v6932 = vpack.c.b16 %v6792, %v6790
    %v6933 = vpack.c.b16 %v6793, %v6791
    %v6934 = vpack.c.b16 %v6796, %v6794
    %v6935 = vpack.c.b16 %v6797, %v6795
    %v6936 = vpack.c.b16 %v6800, %v6798
    %v6937 = vpack.c.b16 %v6801, %v6799
    %v6938 = vpack.c.b16 %v6804, %v6802
    %v6939 = vpack.c.b16 %v6805, %v6803
    %v6940 = vpack.c.b16 %v6808, %v6806
    %v6941 = vpack.c.b16 %v6809, %v6807
    %v6942 = vpack.c.b16 %v6812, %v6810
    %v6943 = vpack.c.b16 %v6813, %v6811
    %v6944 = vpack.c.b16 %v6816, %v6814
    %v6945 = vpack.c.b16 %v6817, %v6815
    %7074 = vmatprep.subr.bf16.mxu0 %v6833
    %7075 = vmatpush1.bf16.msra.mxu0 %v6832
    %7076 = vmatprep.subr.bf16.mxu0 %v6831
    %7077 = vmatpush1.bf16.msra.mxu0 %v6830
    %7078 = vmatprep.subr.bf16.mxu0 %v6829
    %7079 = vmatpush1.bf16.msra.mxu0 %v6828
    %7080 = vmatprep.subr.bf16.mxu0 %v6827
    %7081 = vmatpush1.bf16.msra.mxu0 %v6826
    %7082 = vmatprep.subr.bf16.mxu0 %v6825
    %7083 = vmatpush1.bf16.msra.mxu0 %v6824
    %7084 = vmatprep.subr.bf16.mxu0 %v6823
    %7085 = vmatpush1.bf16.msra.mxu0 %v6822
    %7086 = vmatprep.subr.bf16.mxu0 %v6821
    %7087 = vmatpush1.bf16.msra.mxu0 %v6820
    %7088 = vmatprep.subr.bf16.mxu0 %v6819
    %7089 = vmatpush1.bf16.msra.mxu0 %v6818
    %7090 = vmatprep.subr.bf16.mxu0 %v6849
    %7091 = vmatpush2.bf16.msra.mxu0 %v6848
    %7092 = vmatprep.subr.bf16.mxu0 %v6847
    %7093 = vmatpush2.bf16.msra.mxu0 %v6846
    %7094 = vmatprep.subr.bf16.mxu0 %v6845
    %7095 = vmatpush2.bf16.msra.mxu0 %v6844
    %7096 = vmatprep.subr.bf16.mxu0 %v6843
    %7097 = vmatpush2.bf16.msra.mxu0 %v6842
    %7098 = vmatprep.subr.bf16.mxu0 %v6841
    %7099 = vmatpush2.bf16.msra.mxu0 %v6840
    %7100 = vmatprep.subr.bf16.mxu0 %v6839
    %7101 = vmatpush2.bf16.msra.mxu0 %v6838
    %7102 = vmatprep.subr.bf16.mxu0 %v6837
    %7103 = vmatpush2.bf16.msra.mxu0 %v6836
    %7104 = vmatprep.subr.bf16.mxu0 %v6835
    %7105 = vmatpush2.bf16.msra.mxu0 %v6834
    %7106 = vmatprep.mubr.bf16.mxu0 %v6287
    %7107 = vmatmul.mubr.bf16.gmra.mxu0 %v6286
    %v7108 = vpop.f32.mrf.mxu0
    %v7109 = vadd.f32 %v6427, %v7108
    %v7110 = vpop.f32.mrf.mxu0
    %v7111 = vadd.f32 %v6431, %v7110
    %v7112 = vpop.f32.mrf.mxu0
    %v7113 = vpop.f32.mrf.mxu0
    %7114 = vdwg.mxu0
    %7115 = vmatprep.subr.bf16.mxu0 %v6865
    %7116 = vmatpush1.bf16.msra.mxu0 %v6864
    %7117 = vmatprep.subr.bf16.mxu0 %v6863
    %7118 = vmatpush1.bf16.msra.mxu0 %v6862
    %7119 = vmatprep.subr.bf16.mxu0 %v6861
    %7120 = vmatpush1.bf16.msra.mxu0 %v6860
    %7121 = vmatprep.subr.bf16.mxu0 %v6859
    %7122 = vmatpush1.bf16.msra.mxu0 %v6858
    %7123 = vmatprep.subr.bf16.mxu0 %v6857
    %7124 = vmatpush1.bf16.msra.mxu0 %v6856
    %7125 = vmatprep.subr.bf16.mxu0 %v6855
    %7126 = vmatpush1.bf16.msra.mxu0 %v6854
    %7127 = vmatprep.subr.bf16.mxu0 %v6853
    %7128 = vmatpush1.bf16.msra.mxu0 %v6852
    %7129 = vmatprep.subr.bf16.mxu0 %v6851
    %7130 = vmatpush1.bf16.msra.mxu0 %v6850
    %7131 = vmatprep.subr.bf16.mxu0 %v6881
    %7132 = vmatpush2.bf16.msra.mxu0 %v6880
    %7133 = vmatprep.subr.bf16.mxu0 %v6879
    %7134 = vmatpush2.bf16.msra.mxu0 %v6878
    %7135 = vmatprep.subr.bf16.mxu0 %v6877
    %7136 = vmatpush2.bf16.msra.mxu0 %v6876
    %7137 = vmatprep.subr.bf16.mxu0 %v6875
    %7138 = vmatpush2.bf16.msra.mxu0 %v6874
    %7139 = vmatprep.subr.bf16.mxu0 %v6873
    %7140 = vmatpush2.bf16.msra.mxu0 %v6872
    %7141 = vmatprep.subr.bf16.mxu0 %v6871
    %7142 = vmatpush2.bf16.msra.mxu0 %v6870
    %7143 = vmatprep.subr.bf16.mxu0 %v6869
    %7144 = vmatpush2.bf16.msra.mxu0 %v6868
    %7145 = vmatprep.subr.bf16.mxu0 %v6867
    %7146 = vmatpush2.bf16.msra.mxu0 %v6866
    %7147 = vmatprep.mubr.bf16.mxu0 %v6289
    %7148 = vmatmul.mubr.bf16.gmra.mxu0 %v6288
    %v7149 = vpop.f32.mrf.mxu0
    %v7150 = vadd.f32 %v7109, %v7149
    %v7151 = vpop.f32.mrf.mxu0
    %v7152 = vadd.f32 %v7111, %v7151
    %v7153 = vpop.f32.mrf.mxu0
    %v7154 = vpop.f32.mrf.mxu0
    %7155 = vdwg.mxu0
    %7156 = vmatprep.subr.bf16.mxu0 %v6897
    %7157 = vmatpush1.bf16.msra.mxu0 %v6896
    %7158 = vmatprep.subr.bf16.mxu0 %v6895
    %7159 = vmatpush1.bf16.msra.mxu0 %v6894
    %7160 = vmatprep.subr.bf16.mxu0 %v6893
    %7161 = vmatpush1.bf16.msra.mxu0 %v6892
    %7162 = vmatprep.subr.bf16.mxu0 %v6891
    %7163 = vmatpush1.bf16.msra.mxu0 %v6890
    %7164 = vmatprep.subr.bf16.mxu0 %v6889
    %7165 = vmatpush1.bf16.msra.mxu0 %v6888
    %7166 = vmatprep.subr.bf16.mxu0 %v6887
    %7167 = vmatpush1.bf16.msra.mxu0 %v6886
    %7168 = vmatprep.subr.bf16.mxu0 %v6885
    %7169 = vmatpush1.bf16.msra.mxu0 %v6884
    %7170 = vmatprep.subr.bf16.mxu0 %v6883
    %7171 = vmatpush1.bf16.msra.mxu0 %v6882
    %7172 = vmatprep.subr.bf16.mxu0 %v6913
    %7173 = vmatpush2.bf16.msra.mxu0 %v6912
    %7174 = vmatprep.subr.bf16.mxu0 %v6911
    %7175 = vmatpush2.bf16.msra.mxu0 %v6910
    %7176 = vmatprep.subr.bf16.mxu0 %v6909
    %7177 = vmatpush2.bf16.msra.mxu0 %v6908
    %7178 = vmatprep.subr.bf16.mxu0 %v6907
    %7179 = vmatpush2.bf16.msra.mxu0 %v6906
    %7180 = vmatprep.subr.bf16.mxu0 %v6905
    %7181 = vmatpush2.bf16.msra.mxu0 %v6904
    %7182 = vmatprep.subr.bf16.mxu0 %v6903
    %7183 = vmatpush2.bf16.msra.mxu0 %v6902
    %7184 = vmatprep.subr.bf16.mxu0 %v6901
    %7185 = vmatpush2.bf16.msra.mxu0 %v6900
    %7186 = vmatprep.subr.bf16.mxu0 %v6899
    %7187 = vmatpush2.bf16.msra.mxu0 %v6898
    %7188 = vmatprep.mubr.bf16.mxu0 %v6291
    %7189 = vmatmul.mubr.bf16.gmra.mxu0 %v6290
    %v7190 = vpop.f32.mrf.mxu0
    %v7191 = vadd.f32 %v7150, %v7190
    %v7192 = vpop.f32.mrf.mxu0
    %v7193 = vadd.f32 %v7152, %v7192
    %v7194 = vpop.f32.mrf.mxu0
    %v7195 = vpop.f32.mrf.mxu0
    %7196 = vdwg.mxu0
    %7197 = vmatprep.subr.bf16.mxu0 %v6929
    %7198 = vmatpush1.bf16.msra.mxu0 %v6928
    %7199 = vmatprep.subr.bf16.mxu0 %v6927
    %7200 = vmatpush1.bf16.msra.mxu0 %v6926
    %7201 = vmatprep.subr.bf16.mxu0 %v6925
    %7202 = vmatpush1.bf16.msra.mxu0 %v6924
    %7203 = vmatprep.subr.bf16.mxu0 %v6923
    %7204 = vmatpush1.bf16.msra.mxu0 %v6922
    %7205 = vmatprep.subr.bf16.mxu0 %v6921
    %7206 = vmatpush1.bf16.msra.mxu0 %v6920
    %7207 = vmatprep.subr.bf16.mxu0 %v6919
    %7208 = vmatpush1.bf16.msra.mxu0 %v6918
    %7209 = vmatprep.subr.bf16.mxu0 %v6917
    %7210 = vmatpush1.bf16.msra.mxu0 %v6916
    %7211 = vmatprep.subr.bf16.mxu0 %v6915
    %7212 = vmatpush1.bf16.msra.mxu0 %v6914
    %7213 = vmatprep.subr.bf16.mxu0 %v6945
    %7214 = vmatpush2.bf16.msra.mxu0 %v6944
    %7215 = vmatprep.subr.bf16.mxu0 %v6943
    %7216 = vmatpush2.bf16.msra.mxu0 %v6942
    %7217 = vmatprep.subr.bf16.mxu0 %v6941
    %7218 = vmatpush2.bf16.msra.mxu0 %v6940
    %7219 = vmatprep.subr.bf16.mxu0 %v6939
    %7220 = vmatpush2.bf16.msra.mxu0 %v6938
    %7221 = vmatprep.subr.bf16.mxu0 %v6937
    %7222 = vmatpush2.bf16.msra.mxu0 %v6936
    %7223 = vmatprep.subr.bf16.mxu0 %v6935
    %7224 = vmatpush2.bf16.msra.mxu0 %v6934
    %7225 = vmatprep.subr.bf16.mxu0 %v6933
    %7226 = vmatpush2.bf16.msra.mxu0 %v6932
    %7227 = vmatprep.subr.bf16.mxu0 %v6931
    %7228 = vmatpush2.bf16.msra.mxu0 %v6930
    %7229 = vmatprep.mubr.bf16.mxu0 %v6293
    %7230 = vmatmul.mubr.bf16.gmra.mxu0 %v6292
    %v7231 = vpop.f32.mrf.mxu0
    %v7232 = vadd.f32 %v7191, %v7231
    %v7233 = vpop.f32.mrf.mxu0
    %v7234 = vadd.f32 %v7193, %v7233
    %v7235 = vpop.f32.mrf.mxu0
    %v7236 = vpop.f32.mrf.mxu0
    %7237 = vdwg.mxu0
    %v7238 = vsub.f32 0.0, %v7232
    %v7239 = vsub.f32 0.0, %v7234
    %v7240 = vmul.f32 %v7238, 1.442695
    %v7241 = vpow.pop %v7240
    %v7242 = vmul.f32 %v7239, 1.442695
    %v7243 = vpow.pop %v7242
    %v7244 = vadd.f32 %v7241, 1.0
    %v7245 = vadd.f32 %v7243, 1.0
    %v7246 = vrcp.pop %v7244
    %v7247 = vrcp.pop %v7245
    %v7250 = vcombine.low %v7246, %v7247
    %v7252 = vunpack.c.l.s4 1983009808
    %v7253 = vunpack.c.0.s8 %v7252
    %v7254 = vlaneseq
    %v7255 = vshrl.u32 %v7254, 7
    %v7256 = vsub.s32 %v7253, %v7255
    %v7257 = vrot.slane %v7250, %v7256
    %7259 = vst [vmem:[%s17] sm:$0xf] %v7257
    // Predicated region
    $region102: #{conv_autoencoder_forward.1} parent=1 // pred_check
      _
    $region103: #{conv_autoencoder_forward.1} parent=1 // pred_check_branch
      %7261 = sbr.rel (0) target = $region105
    $region104: #{conv_autoencoder_forward.1} parent=1 // pred_region
      _
    $region105: #{conv_autoencoder_forward.1} parent=1 // pred_fallthru
      _
    // Predicated region
    $region106: #{conv_autoencoder_forward.1} parent=1 // pred_check
      _
    $region107: #{conv_autoencoder_forward.1} parent=1 // pred_check_branch
      %7263 = sbr.rel (0) target = $region109
    $region108: #{conv_autoencoder_forward.1} parent=1 // pred_region
      _
    $region109: #{conv_autoencoder_forward.1} parent=1 // pred_fallthru
      _
    %7264 = vsyncpa [#allocation3], 1
    %7265 = vsyncpa [#allocation5], 1
    %7266 = vsyncpa [#allocation8], 1
    %7267 = vsyncpa [#allocation11], 1
    %7268 = vsyncpa [#allocation14], 1

</llo_original>
